<compile_context>
chip_gen: v5e
topology: v5e:2x2
jax: 0.10.0
libtpu: 0.0.40
codegen_flags: <defaults>
</compile_context>

<pallas_src>
import functools

import jax
import jax.numpy as jnp
from jax.experimental import pallas as pl
from jax.experimental.pallas import tpu as pltpu

EPS = 1e-5
LANE = 128
SUBLANE = 8


def _round_up(x, m):
    return (x + m - 1) // m * m


def _row_chunks(H, W, target_rows=128):
    """Static (row_start, row_count) chunks so each matmul M = rows*W stays ~128."""
    rc = max(1, min(H, target_rows // max(W, 1)))
    chunks, r = [], 0
    while r < H:
        c = min(rc, H - r)
        chunks.append((r, c))
        r += c
    return tuple(chunks)


@functools.lru_cache(maxsize=1)
def _compiler_params():
    try:
        cap = int(pltpu.get_tpu_info().vmem_capacity_bytes)
    except Exception:
        cap = 128 * 1024 * 1024
    # ~75% of physical VMEM, capped at 100 MiB (v5e/v6e ~96-100 MiB, v7x 48 MiB).
    limit = int(min(100 * 1024 * 1024, (cap * 3) // 4))
    return pltpu.CompilerParams(
        dimension_semantics=("parallel",),  # per-step partial stats -> no serial dep
        vmem_limit_bytes=limit,
    )


# ---------------------------------------------------------------------------
# Kernels
# ---------------------------------------------------------------------------
def _make_conv_block_kernel(H, W, cin_p, cout_p, apply_input_bn):
    """conv3x3 as 9 tap-accumulated MXU matmuls + per-image (sum, sumsq) stats.

    If apply_input_bn, the input tile is first normalized with the previous
    block's folded BN scale/shift and ReLU'd (block-1 epilogue fused into
    block-2's load), so the un-normalized conv1 output is the only intermediate
    that touches HBM.
    """
    chunks = _row_chunks(H, W)

    def kernel(*args):
        if apply_input_bn:
            x_ref, w_ref, scale_ref, shift_ref, out_ref, stats_ref, xpad_ref = args
        else:
            x_ref, w_ref, out_ref, stats_ref, xpad_ref = args

        # Zero the padded scratch every step (halo == SAME zero padding).  Done
        # per step (not pl.when(step == 0)) so the grid axis can be "parallel"
        # without any cross-step scratch dependence (safe on v7x megacore).
        xpad_ref[...] = jnp.zeros_like(xpad_ref)

        x = x_ref[0]                                    # (H, W, cin_p), bf16
        if apply_input_bn:
            xf = x.astype(jnp.float32)
            scale = scale_ref[...].reshape(1, 1, cin_p)
            shift = shift_ref[...].reshape(1, 1, cin_p)
            x = jnp.maximum(xf * scale + shift, 0.0)    # BN1 + ReLU, fp32 VPU math
        else:
            x = x.astype(jnp.float32)
        xpad_ref[1:H + 1, 1:W + 1, :] = x               # interior of the halo

        s = jnp.zeros((1, cout_p), jnp.float32)
        q = jnp.zeros((1, cout_p), jnp.float32)

        # 9 tap matmuls accumulated directly from the halo scratch (no im2col
        # buffer).  M is chunked to bound fp32 accumulator vreg pressure.
        for r0, rc in chunks:
            m = rc * W
            acc = jnp.zeros((m, cout_p), jnp.float32)
            for dy in range(3):
                for dx in range(3):
                    lhs = xpad_ref[dy + r0:dy + r0 + rc, dx:dx + W, :]
                    lhs = lhs.reshape(m, cin_p).astype(jnp.bfloat16)   # bf16 MXU operand
                    acc = acc + jnp.dot(lhs, w_ref[dy * 3 + dx],
                                        preferred_element_type=jnp.float32)
            # NOTE: conv bias intentionally omitted — exactly cancelled by the
            # training-mode BatchNorm mean subtraction that follows.
            out_ref[0:1, r0:r0 + rc, :, :] = (
                acc.reshape(1, rc, W, cout_p).astype(out_ref.dtype))
            s = s + jnp.sum(acc, axis=0, keepdims=True)
            q = q + jnp.sum(acc * acc, axis=0, keepdims=True)

        # Per-step partial BN statistics; reduced over the batch in the wrapper.
        stats_ref[0:1, 0:1, :] = s.reshape(1, 1, cout_p)
        stats_ref[0:1, 1:2, :] = q.reshape(1, 1, cout_p)

    return kernel


def _make_bnrelu_kernel(c_p):
    """Apply folded BatchNorm scale/shift + ReLU to one batch image."""

    def kernel(x_ref, scale_ref, shift_ref, out_ref):
        x = x_ref[...].astype(jnp.float32)              # (1, H, W, c_p)
        scale = scale_ref[...].reshape(1, 1, 1, c_p)
        shift = shift_ref[...].reshape(1, 1, 1, c_p)
        out_ref[...] = jnp.maximum(x * scale + shift, 0.0).astype(out_ref.dtype)

    return kernel


# ---------------------------------------------------------------------------
# pallas_call wrappers
# ---------------------------------------------------------------------------
def _conv_block(x, w, scale=None, shift=None):
    """One conv3x3 pass over the batch.

    Returns (conv_out bf16 (N,H,W,cout_p), partial_stats f32 (N,2,cout_p))."""
    N, H, W, cin_p = x.shape
    cout_p = w.shape[-1]
    apply_bn = scale is not None

    kernel = _make_conv_block_kernel(H, W, cin_p, cout_p, apply_bn)

    in_specs = [
        pl.BlockSpec((1, H, W, cin_p), lambda n: (n, 0, 0, 0)),
        pl.BlockSpec((9, cin_p, cout_p), lambda n: (0, 0, 0)),   # resident weights
    ]
    inputs = [x, w]
    if apply_bn:
        in_specs += [
            pl.BlockSpec((1, cin_p), lambda n: (0, 0)),
            pl.BlockSpec((1, cin_p), lambda n: (0, 0)),
        ]
        inputs += [scale, shift]

    wpad_cols = _round_up(W + 2, SUBLANE)   # sublane-aligned halo scratch width

    out_shape = (
        jax.ShapeDtypeStruct((N, H, W, cout_p), jnp.bfloat16),   # bf16 HBM intermediate
        jax.ShapeDtypeStruct((N, 2, cout_p), jnp.float32),       # per-step partial stats
    )
    out_specs = (
        pl.BlockSpec((1, H, W, cout_p), lambda n: (n, 0, 0, 0)),
        pl.BlockSpec((1, 2, cout_p), lambda n: (n, 0, 0)),
    )
    scratch_shapes = [
        pltpu.VMEM((H + 2, wpad_cols, cin_p), jnp.float32),      # zero-padded halo
    ]

    return pl.pallas_call(
        kernel,
        grid=(N,),
        in_specs=in_specs,
        out_specs=out_specs,
        out_shape=out_shape,
        scratch_shapes=scratch_shapes,
        compiler_params=_compiler_params(),
    )(*inputs)


def _bnrelu(x, scale, shift):
    N, H, W, c_p = x.shape
    return pl.pallas_call(
        _make_bnrelu_kernel(c_p),
        grid=(N,),
        in_specs=[
            pl.BlockSpec((1, H, W, c_p), lambda n: (n, 0, 0, 0)),
            pl.BlockSpec((1, c_p), lambda n: (0, 0)),
            pl.BlockSpec((1, c_p), lambda n: (0, 0)),
        ],
        out_specs=pl.BlockSpec((1, H, W, c_p), lambda n: (n, 0, 0, 0)),
        out_shape=jax.ShapeDtypeStruct((N, H, W, c_p), jnp.float32),
        compiler_params=_compiler_params(),
    )(x, scale, shift)


def _bn_fold(partial_stats, gamma, beta, count, c_real):
    """Reduce per-step (sum, sumsq) partials and fold BN into per-channel affine.

    Padded channel lanes are explicitly masked to scale=shift=0 for robustness."""
    stats = jnp.sum(partial_stats, axis=0)              # (2, c_p) fp32
    mean = stats[0:1] / count
    var = stats[1:2] / count - mean * mean
    scale = gamma * jax.lax.rsqrt(var + EPS)
    shift = beta - mean * scale
    mask = (jnp.arange(stats.shape[-1]) < c_real).reshape(1, -1)
    scale = jnp.where(mask, scale, 0.0).astype(jnp.float32)
    shift = jnp.where(mask, shift, 0.0).astype(jnp.float32)
    return scale, shift


# ---------------------------------------------------------------------------
# DoubleConv forward (NCHW in / NCHW out, like the PyTorch module)
# ---------------------------------------------------------------------------
def double_conv(x_nchw, params):
    N, Cin, H, W = x_nchw.shape
    Cout = params["w1"].shape[-1]
    cin_p = _round_up(Cin, LANE)
    cout_p = _round_up(Cout, LANE)
    count = float(N * H * W)

    # Layout glue: NCHW -> NHWC, bf16, channels padded to the 128-lane width.
    x = jnp.transpose(x_nchw, (0, 2, 3, 1)).astype(jnp.bfloat16)
    x = jnp.pad(x, ((0, 0), (0, 0), (0, 0), (0, cin_p - Cin)))

    def pad_weight(w, ci, ci_p, co, co_p):
        # HWIO (3,3,ci,co) -> (9, ci_p, co_p) bf16; tap index = dy*3 + dx.
        w = jnp.pad(w.astype(jnp.float32),
                    ((0, 0), (0, 0), (0, ci_p - ci), (0, co_p - co)))
        return w.reshape(9, ci_p, co_p).astype(jnp.bfloat16)

    def pad_vec(v, c, c_p, fill):
        return jnp.pad(v.astype(jnp.float32), (0, c_p - c),
                       constant_values=fill).reshape(1, c_p)

    w1 = pad_weight(params["w1"], Cin, cin_p, Cout, cout_p)
    w2 = pad_weight(params["w2"], Cout, cout_p, Cout, cout_p)
    g1 = pad_vec(params["g1"], Cout, cout_p, 1.0)
    be1 = pad_vec(params["beta1"], Cout, cout_p, 0.0)
    g2 = pad_vec(params["g2"], Cout, cout_p, 1.0)
    be2 = pad_vec(params["beta2"], Cout, cout_p, 0.0)
    # conv biases b1/b2 are not needed: training-mode BN cancels them exactly.

    # Block 1: conv + per-step stats; fold BN1 in the wrapper (128-float math).
    c1, pstats1 = _conv_block(x, w1)
    s1, b1 = _bn_fold(pstats1, g1, be1, count, Cout)
    # Block 2: BN1+ReLU fused into the load, conv + per-step stats.
    c2, pstats2 = _conv_block(c1, w2, scale=s1, shift=b1)
    s2, b2 = _bn_fold(pstats2, g2, be2, count, Cout)
    # Final BN2 + ReLU.
    y = _bnrelu(c2, s2, b2)

    # Layout glue back: drop channel padding, NHWC -> NCHW, fp32 output.
    return jnp.transpose(y[..., :Cout], (0, 3, 1, 2))


# ---------------------------------------------------------------------------
# Pure-JAX reference (same math as the PyTorch nn.Sequential, fp32, bias included)
# ---------------------------------------------------------------------------
def ref_double_conv(x_nchw, params):
    x = jnp.transpose(x_nchw, (0, 2, 3, 1)).astype(jnp.float32)

    def block(x, w, b, g, be):
        y = jax.lax.conv_general_dilated(
            x, w.astype(jnp.float32), window_strides=(1, 1), padding="SAME",
            dimension_numbers=("NHWC", "HWIO", "NHWC"),
        ) + b.astype(jnp.float32)
        mean = jnp.mean(y, axis=(0, 1, 2), keepdims=True)
        var = jnp.mean((y - mean) ** 2, axis=(0, 1, 2), keepdims=True)
        y = (y - mean) * jax.lax.rsqrt(var + EPS)
        y = y * g.astype(jnp.float32) + be.astype(jnp.float32)
        return jnp.maximum(y, 0.0)

    y = block(x, params["w1"], params["b1"], params["g1"], params["beta1"])
    y = block(y, params["w2"], params["b2"], params["g2"], params["beta2"])
    return jnp.transpose(y, (0, 3, 1, 2))


if __name__ == "__main__":
    # Small shapes consistent with DoubleConv(in_channels=4, out_channels=8).
    N, Cin, Cout, H, W = 2, 4, 8, 16, 16

    key = jax.random.PRNGKey(0)
    kx, kw1, kb1, kg1, kbe1, kw2, kb2, kg2, kbe2 = jax.random.split(key, 9)

    x = jax.random.normal(kx, (N, Cin, H, W), dtype=jnp.float32)  # NCHW input
    params = {
        # Conv weights kept in HWIO layout (3, 3, Cin, Cout) — synthetic init.
        "w1": 0.1 * jax.random.normal(kw1, (3, 3, Cin, Cout), dtype=jnp.float32),
        "b1": 0.1 * jax.random.normal(kb1, (Cout,), dtype=jnp.float32),
        "g1": 1.0 + 0.1 * jax.random.normal(kg1, (Cout,), dtype=jnp.float32),
        "beta1": 0.1 * jax.random.normal(kbe1, (Cout,), dtype=jnp.float32),
        "w2": 0.1 * jax.random.normal(kw2, (3, 3, Cout, Cout), dtype=jnp.float32),
        "b2": 0.1 * jax.random.normal(kb2, (Cout,), dtype=jnp.float32),
        "g2": 1.0 + 0.1 * jax.random.normal(kg2, (Cout,), dtype=jnp.float32),
        "beta2": 0.1 * jax.random.normal(kbe2, (Cout,), dtype=jnp.float32),
    }

    out = jax.block_until_ready(double_conv(x, params))
    ref = jax.block_until_ready(ref_double_conv(x, params))

    assert out.shape == (N, Cout, H, W), out.shape
    # bf16 MXU operands + bf16 HBM intermediates vs fp32 reference -> ~1e-2 level
    # differences after two BatchNorms; tolerance set accordingly.
    max_err = float(jnp.max(jnp.abs(out - ref)))
    assert jnp.allclose(out, ref, atol=5e-2, rtol=5e-2), max_err
    print("KERNEL_OK")
</pallas_src>

<mosaic_0001>
module attributes {stable_mosaic.version = 11 : i64} {
  func.func @kernel(%arg0: i32, %arg1: memref<1x16x16x128xbf16, #tpu.memory_space<vmem>>, %arg2: memref<9x128x128xbf16, #tpu.memory_space<vmem>>, %arg3: memref<1x16x16x128xbf16, #tpu.memory_space<vmem>>, %arg4: memref<1x2x128xf32, #tpu.memory_space<vmem>>, %arg5: memref<18x24x128xf32, #tpu.memory_space<vmem>>) attributes {dimension_semantics = [#tpu.dimension_semantics<parallel>], iteration_bounds = array<i64: 2>, scalar_prefetch = 0 : i64, scratch_operands = 1 : i64, tpu.core_type = #tpu.core_type<tc>, window_params = [{transform_indices = @transform_0, window_bounds = array<i64: 1, 16, 16, 128>}, {pipeline_mode = #tpu.pipeline_mode<synchronous>, transform_indices = @transform_1, window_bounds = array<i64: 9, 128, 128>}, {transform_indices = @transform_2, window_bounds = array<i64: 1, 16, 16, 128>}, {transform_indices = @transform_3, window_bounds = array<i64: 1, 2, 128>}]} {
    %cst = arith.constant 0.000000e+00 : f32
    %0 = vector.broadcast %cst : f32 to vector<18x24x128xf32>
    %c0 = arith.constant 0 : index
    %c0_0 = arith.constant 0 : index
    %c0_1 = arith.constant 0 : index
    %1 = vector.load %arg5[%c0, %c0_0, %c0_1] : memref<18x24x128xf32, #tpu.memory_space<vmem>>, vector<18x24x128xf32>
    tpu.vector_store %arg5[%c0, %c0_0, %c0_1], %0 {strides = array<i32>} : memref<18x24x128xf32, #tpu.memory_space<vmem>>, vector<18x24x128xf32>,
    %c0_2 = arith.constant 0 : index
    %c0_3 = arith.constant 0 : index
    %c0_4 = arith.constant 0 : index
    %c0_5 = arith.constant 0 : index
    %2 = vector.load %arg1[%c0_2, %c0_3, %c0_4, %c0_5] : memref<1x16x16x128xbf16, #tpu.memory_space<vmem>>, vector<1x16x16x128xbf16>
    %3 = vector.shape_cast %2 : vector<1x16x16x128xbf16> to vector<16x16x128xbf16>
    %4 = arith.extf %3 : vector<16x16x128xbf16> to vector<16x16x128xf32>
    %c1 = arith.constant 1 : index
    %c1_6 = arith.constant 1 : index
    %c0_7 = arith.constant 0 : index
    %5 = vector.load %arg5[%c1, %c1_6, %c0_7] : memref<18x24x128xf32, #tpu.memory_space<vmem>>, vector<16x16x128xf32>
    tpu.vector_store %arg5[%c1, %c1_6, %c0_7], %4 {strides = array<i32>} : memref<18x24x128xf32, #tpu.memory_space<vmem>>, vector<16x16x128xf32>,
    %cst_8 = arith.constant 0.000000e+00 : f32
    %6 = vector.broadcast %cst_8 : f32 to vector<1x128xf32>
    %cst_9 = arith.constant 0.000000e+00 : f32
    %7 = vector.broadcast %cst_9 : f32 to vector<1x128xf32>
    %cst_10 = arith.constant 0.000000e+00 : f32
    %8 = vector.broadcast %cst_10 : f32 to vector<128x128xf32>
    %c0_11 = arith.constant 0 : index
    %c0_12 = arith.constant 0 : index
    %c0_13 = arith.constant 0 : index
    %9 = vector.load %arg5[%c0_11, %c0_12, %c0_13] : memref<18x24x128xf32, #tpu.memory_space<vmem>>, vector<8x16x128xf32>
    %10 = vector.shape_cast %9 : vector<8x16x128xf32> to vector<128x128xf32>
    %11 = arith.truncf %10 : vector<128x128xf32> to vector<128x128xbf16>
    %c0_14 = arith.constant 0 : index
    %c0_15 = arith.constant 0 : index
    %c0_16 = arith.constant 0 : index
    %12 = vector.load %arg2[%c0_14, %c0_15, %c0_16] : memref<9x128x128xbf16, #tpu.memory_space<vmem>>, vector<1x128x128xbf16>
    %13 = vector.shape_cast %12 : vector<1x128x128xbf16> to vector<128x128xbf16>
    %cst_17 = arith.constant dense<0.000000e+00> : vector<128x128xf32>
    %14 = tpu.matmul %11, %13, %cst_17 {dimension_numbers = #tpu.dot_dimension_numbers<[1], [0], [0], [1], [0, 0, 1, 1], [], []>} : vector<128x128xbf16>, vector<128x128xbf16>, vector<128x128xf32> -> vector<128x128xf32>
    %15 = arith.addf %8, %14 : vector<128x128xf32>
    %c0_18 = arith.constant 0 : index
    %c1_19 = arith.constant 1 : index
    %c0_20 = arith.constant 0 : index
    %16 = vector.load %arg5[%c0_18, %c1_19, %c0_20] : memref<18x24x128xf32, #tpu.memory_space<vmem>>, vector<8x16x128xf32>
    %17 = vector.shape_cast %16 : vector<8x16x128xf32> to vector<128x128xf32>
    %18 = arith.truncf %17 : vector<128x128xf32> to vector<128x128xbf16>
    %c1_21 = arith.constant 1 : index
    %c0_22 = arith.constant 0 : index
    %c0_23 = arith.constant 0 : index
    %19 = vector.load %arg2[%c1_21, %c0_22, %c0_23] : memref<9x128x128xbf16, #tpu.memory_space<vmem>>, vector<1x128x128xbf16>
    %20 = vector.shape_cast %19 : vector<1x128x128xbf16> to vector<128x128xbf16>
    %cst_24 = arith.constant dense<0.000000e+00> : vector<128x128xf32>
    %21 = tpu.matmul %18, %20, %cst_24 {dimension_numbers = #tpu.dot_dimension_numbers<[1], [0], [0], [1], [0, 0, 1, 1], [], []>} : vector<128x128xbf16>, vector<128x128xbf16>, vector<128x128xf32> -> vector<128x128xf32>
    %22 = arith.addf %15, %21 : vector<128x128xf32>
    %c0_25 = arith.constant 0 : index
    %c2 = arith.constant 2 : index
    %c0_26 = arith.constant 0 : index
    %23 = vector.load %arg5[%c0_25, %c2, %c0_26] : memref<18x24x128xf32, #tpu.memory_space<vmem>>, vector<8x16x128xf32>
    %24 = vector.shape_cast %23 : vector<8x16x128xf32> to vector<128x128xf32>
    %25 = arith.truncf %24 : vector<128x128xf32> to vector<128x128xbf16>
    %c2_27 = arith.constant 2 : index
    %c0_28 = arith.constant 0 : index
    %c0_29 = arith.constant 0 : index
    %26 = vector.load %arg2[%c2_27, %c0_28, %c0_29] : memref<9x128x128xbf16, #tpu.memory_space<vmem>>, vector<1x128x128xbf16>
    %27 = vector.shape_cast %26 : vector<1x128x128xbf16> to vector<128x128xbf16>
    %cst_30 = arith.constant dense<0.000000e+00> : vector<128x128xf32>
    %28 = tpu.matmul %25, %27, %cst_30 {dimension_numbers = #tpu.dot_dimension_numbers<[1], [0], [0], [1], [0, 0, 1, 1], [], []>} : vector<128x128xbf16>, vector<128x128xbf16>, vector<128x128xf32> -> vector<128x128xf32>
    %29 = arith.addf %22, %28 : vector<128x128xf32>
    %c1_31 = arith.constant 1 : index
    %c0_32 = arith.constant 0 : index
    %c0_33 = arith.constant 0 : index
    %30 = vector.load %arg5[%c1_31, %c0_32, %c0_33] : memref<18x24x128xf32, #tpu.memory_space<vmem>>, vector<8x16x128xf32>
    %31 = vector.shape_cast %30 : vector<8x16x128xf32> to vector<128x128xf32>
    %32 = arith.truncf %31 : vector<128x128xf32> to vector<128x128xbf16>
    %c3 = arith.constant 3 : index
    %c0_34 = arith.constant 0 : index
    %c0_35 = arith.constant 0 : index
    %33 = vector.load %arg2[%c3, %c0_34, %c0_35] : memref<9x128x128xbf16, #tpu.memory_space<vmem>>, vector<1x128x128xbf16>
    %34 = vector.shape_cast %33 : vector<1x128x128xbf16> to vector<128x128xbf16>
    %cst_36 = arith.constant dense<0.000000e+00> : vector<128x128xf32>
    %35 = tpu.matmul %32, %34, %cst_36 {dimension_numbers = #tpu.dot_dimension_numbers<[1], [0], [0], [1], [0, 0, 1, 1], [], []>} : vector<128x128xbf16>, vector<128x128xbf16>, vector<128x128xf32> -> vector<128x128xf32>
    %36 = arith.addf %29, %35 : vector<128x128xf32>
    %c1_37 = arith.constant 1 : index
    %c1_38 = arith.constant 1 : index
    %c0_39 = arith.constant 0 : index
    %37 = vector.load %arg5[%c1_37, %c1_38, %c0_39] : memref<18x24x128xf32, #tpu.memory_space<vmem>>, vector<8x16x128xf32>
    %38 = vector.shape_cast %37 : vector<8x16x128xf32> to vector<128x128xf32>
    %39 = arith.truncf %38 : vector<128x128xf32> to vector<128x128xbf16>
    %c4 = arith.constant 4 : index
    %c0_40 = arith.constant 0 : index
    %c0_41 = arith.constant 0 : index
    %40 = vector.load %arg2[%c4, %c0_40, %c0_41] : memref<9x128x128xbf16, #tpu.memory_space<vmem>>, vector<1x128x128xbf16>
    %41 = vector.shape_cast %40 : vector<1x128x128xbf16> to vector<128x128xbf16>
    %cst_42 = arith.constant dense<0.000000e+00> : vector<128x128xf32>
    %42 = tpu.matmul %39, %41, %cst_42 {dimension_numbers = #tpu.dot_dimension_numbers<[1], [0], [0], [1], [0, 0, 1, 1], [], []>} : vector<128x128xbf16>, vector<128x128xbf16>, vector<128x128xf32> -> vector<128x128xf32>
    %43 = arith.addf %36, %42 : vector<128x128xf32>
    %c1_43 = arith.constant 1 : index
    %c2_44 = arith.constant 2 : index
    %c0_45 = arith.constant 0 : index
    %44 = vector.load %arg5[%c1_43, %c2_44, %c0_45] : memref<18x24x128xf32, #tpu.memory_space<vmem>>, vector<8x16x128xf32>
    %45 = vector.shape_cast %44 : vector<8x16x128xf32> to vector<128x128xf32>
    %46 = arith.truncf %45 : vector<128x128xf32> to vector<128x128xbf16>
    %c5 = arith.constant 5 : index
    %c0_46 = arith.constant 0 : index
    %c0_47 = arith.constant 0 : index
    %47 = vector.load %arg2[%c5, %c0_46, %c0_47] : memref<9x128x128xbf16, #tpu.memory_space<vmem>>, vector<1x128x128xbf16>
    %48 = vector.shape_cast %47 : vector<1x128x128xbf16> to vector<128x128xbf16>
    %cst_48 = arith.constant dense<0.000000e+00> : vector<128x128xf32>
    %49 = tpu.matmul %46, %48, %cst_48 {dimension_numbers = #tpu.dot_dimension_numbers<[1], [0], [0], [1], [0, 0, 1, 1], [], []>} : vector<128x128xbf16>, vector<128x128xbf16>, vector<128x128xf32> -> vector<128x128xf32>
    %50 = arith.addf %43, %49 : vector<128x128xf32>
    %c2_49 = arith.constant 2 : index
    %c0_50 = arith.constant 0 : index
    %c0_51 = arith.constant 0 : index
    %51 = vector.load %arg5[%c2_49, %c0_50, %c0_51] : memref<18x24x128xf32, #tpu.memory_space<vmem>>, vector<8x16x128xf32>
    %52 = vector.shape_cast %51 : vector<8x16x128xf32> to vector<128x128xf32>
    %53 = arith.truncf %52 : vector<128x128xf32> to vector<128x128xbf16>
    %c6 = arith.constant 6 : index
    %c0_52 = arith.constant 0 : index
    %c0_53 = arith.constant 0 : index
    %54 = vector.load %arg2[%c6, %c0_52, %c0_53] : memref<9x128x128xbf16, #tpu.memory_space<vmem>>, vector<1x128x128xbf16>
    %55 = vector.shape_cast %54 : vector<1x128x128xbf16> to vector<128x128xbf16>
    %cst_54 = arith.constant dense<0.000000e+00> : vector<128x128xf32>
    %56 = tpu.matmul %53, %55, %cst_54 {dimension_numbers = #tpu.dot_dimension_numbers<[1], [0], [0], [1], [0, 0, 1, 1], [], []>} : vector<128x128xbf16>, vector<128x128xbf16>, vector<128x128xf32> -> vector<128x128xf32>
    %57 = arith.addf %50, %56 : vector<128x128xf32>
    %c2_55 = arith.constant 2 : index
    %c1_56 = arith.constant 1 : index
    %c0_57 = arith.constant 0 : index
    %58 = vector.load %arg5[%c2_55, %c1_56, %c0_57] : memref<18x24x128xf32, #tpu.memory_space<vmem>>, vector<8x16x128xf32>
    %59 = vector.shape_cast %58 : vector<8x16x128xf32> to vector<128x128xf32>
    %60 = arith.truncf %59 : vector<128x128xf32> to vector<128x128xbf16>
    %c7 = arith.constant 7 : index
    %c0_58 = arith.constant 0 : index
    %c0_59 = arith.constant 0 : index
    %61 = vector.load %arg2[%c7, %c0_58, %c0_59] : memref<9x128x128xbf16, #tpu.memory_space<vmem>>, vector<1x128x128xbf16>
    %62 = vector.shape_cast %61 : vector<1x128x128xbf16> to vector<128x128xbf16>
    %cst_60 = arith.constant dense<0.000000e+00> : vector<128x128xf32>
    %63 = tpu.matmul %60, %62, %cst_60 {dimension_numbers = #tpu.dot_dimension_numbers<[1], [0], [0], [1], [0, 0, 1, 1], [], []>} : vector<128x128xbf16>, vector<128x128xbf16>, vector<128x128xf32> -> vector<128x128xf32>
    %64 = arith.addf %57, %63 : vector<128x128xf32>
    %c2_61 = arith.constant 2 : index
    %c2_62 = arith.constant 2 : index
    %c0_63 = arith.constant 0 : index
    %65 = vector.load %arg5[%c2_61, %c2_62, %c0_63] : memref<18x24x128xf32, #tpu.memory_space<vmem>>, vector<8x16x128xf32>
    %66 = vector.shape_cast %65 : vector<8x16x128xf32> to vector<128x128xf32>
    %67 = arith.truncf %66 : vector<128x128xf32> to vector<128x128xbf16>
    %c8 = arith.constant 8 : index
    %c0_64 = arith.constant 0 : index
    %c0_65 = arith.constant 0 : index
    %68 = vector.load %arg2[%c8, %c0_64, %c0_65] : memref<9x128x128xbf16, #tpu.memory_space<vmem>>, vector<1x128x128xbf16>
    %69 = vector.shape_cast %68 : vector<1x128x128xbf16> to vector<128x128xbf16>
    %cst_66 = arith.constant dense<0.000000e+00> : vector<128x128xf32>
    %70 = tpu.matmul %67, %69, %cst_66 {dimension_numbers = #tpu.dot_dimension_numbers<[1], [0], [0], [1], [0, 0, 1, 1], [], []>} : vector<128x128xbf16>, vector<128x128xbf16>, vector<128x128xf32> -> vector<128x128xf32>
    %71 = arith.addf %64, %70 : vector<128x128xf32>
    %72 = vector.shape_cast %71 : vector<128x128xf32> to vector<1x8x16x128xf32>
    %73 = arith.truncf %72 : vector<1x8x16x128xf32> to vector<1x8x16x128xbf16>
    %c0_67 = arith.constant 0 : index
    %c0_68 = arith.constant 0 : index
    %c0_69 = arith.constant 0 : index
    %c0_70 = arith.constant 0 : index
    %74 = vector.load %arg3[%c0_67, %c0_68, %c0_69, %c0_70] : memref<1x16x16x128xbf16, #tpu.memory_space<vmem>>, vector<1x8x16x128xbf16>
    tpu.vector_store %arg3[%c0_67, %c0_68, %c0_69, %c0_70], %73 {strides = array<i32>} : memref<1x16x16x128xbf16, #tpu.memory_space<vmem>>, vector<1x8x16x128xbf16>,
    %cst_71 = arith.constant dense<0.000000e+00> : vector<128xf32>
    %75 = vector.multi_reduction <add>, %71, %cst_71 [0] : vector<128x128xf32> to vector<128xf32>
    %76 = vector.shape_cast %75 : vector<128xf32> to vector<1x128xf32>
    %77 = arith.addf %6, %76 : vector<1x128xf32>
    %78 = arith.mulf %71, %71 : vector<128x128xf32>
    %cst_72 = arith.constant dense<0.000000e+00> : vector<128xf32>
    %79 = vector.multi_reduction <add>, %78, %cst_72 [0] : vector<128x128xf32> to vector<128xf32>
    %80 = vector.shape_cast %79 : vector<128xf32> to vector<1x128xf32>
    %81 = arith.addf %7, %80 : vector<1x128xf32>
    %cst_73 = arith.constant 0.000000e+00 : f32
    %82 = vector.broadcast %cst_73 : f32 to vector<128x128xf32>
    %c8_74 = arith.constant 8 : index
    %c0_75 = arith.constant 0 : index
    %c0_76 = arith.constant 0 : index
    %83 = vector.load %arg5[%c8_74, %c0_75, %c0_76] : memref<18x24x128xf32, #tpu.memory_space<vmem>>, vector<8x16x128xf32>
    %84 = vector.shape_cast %83 : vector<8x16x128xf32> to vector<128x128xf32>
    %85 = arith.truncf %84 : vector<128x128xf32> to vector<128x128xbf16>
    %c0_77 = arith.constant 0 : index
    %c0_78 = arith.constant 0 : index
    %c0_79 = arith.constant 0 : index
    %86 = vector.load %arg2[%c0_77, %c0_78, %c0_79] : memref<9x128x128xbf16, #tpu.memory_space<vmem>>, vector<1x128x128xbf16>
    %87 = vector.shape_cast %86 : vector<1x128x128xbf16> to vector<128x128xbf16>
    %cst_80 = arith.constant dense<0.000000e+00> : vector<128x128xf32>
    %88 = tpu.matmul %85, %87, %cst_80 {dimension_numbers = #tpu.dot_dimension_numbers<[1], [0], [0], [1], [0, 0, 1, 1], [], []>} : vector<128x128xbf16>, vector<128x128xbf16>, vector<128x128xf32> -> vector<128x128xf32>
    %89 = arith.addf %82, %88 : vector<128x128xf32>
    %c8_81 = arith.constant 8 : index
    %c1_82 = arith.constant 1 : index
    %c0_83 = arith.constant 0 : index
    %90 = vector.load %arg5[%c8_81, %c1_82, %c0_83] : memref<18x24x128xf32, #tpu.memory_space<vmem>>, vector<8x16x128xf32>
    %91 = vector.shape_cast %90 : vector<8x16x128xf32> to vector<128x128xf32>
    %92 = arith.truncf %91 : vector<128x128xf32> to vector<128x128xbf16>
    %c1_84 = arith.constant 1 : index
    %c0_85 = arith.constant 0 : index
    %c0_86 = arith.constant 0 : index
    %93 = vector.load %arg2[%c1_84, %c0_85, %c0_86] : memref<9x128x128xbf16, #tpu.memory_space<vmem>>, vector<1x128x128xbf16>
    %94 = vector.shape_cast %93 : vector<1x128x128xbf16> to vector<128x128xbf16>
    %cst_87 = arith.constant dense<0.000000e+00> : vector<128x128xf32>
    %95 = tpu.matmul %92, %94, %cst_87 {dimension_numbers = #tpu.dot_dimension_numbers<[1], [0], [0], [1], [0, 0, 1, 1], [], []>} : vector<128x128xbf16>, vector<128x128xbf16>, vector<128x128xf32> -> vector<128x128xf32>
    %96 = arith.addf %89, %95 : vector<128x128xf32>
    %c8_88 = arith.constant 8 : index
    %c2_89 = arith.constant 2 : index
    %c0_90 = arith.constant 0 : index
    %97 = vector.load %arg5[%c8_88, %c2_89, %c0_90] : memref<18x24x128xf32, #tpu.memory_space<vmem>>, vector<8x16x128xf32>
    %98 = vector.shape_cast %97 : vector<8x16x128xf32> to vector<128x128xf32>
    %99 = arith.truncf %98 : vector<128x128xf32> to vector<128x128xbf16>
    %c2_91 = arith.constant 2 : index
    %c0_92 = arith.constant 0 : index
    %c0_93 = arith.constant 0 : index
    %100 = vector.load %arg2[%c2_91, %c0_92, %c0_93] : memref<9x128x128xbf16, #tpu.memory_space<vmem>>, vector<1x128x128xbf16>
    %101 = vector.shape_cast %100 : vector<1x128x128xbf16> to vector<128x128xbf16>
    %cst_94 = arith.constant dense<0.000000e+00> : vector<128x128xf32>
    %102 = tpu.matmul %99, %101, %cst_94 {dimension_numbers = #tpu.dot_dimension_numbers<[1], [0], [0], [1], [0, 0, 1, 1], [], []>} : vector<128x128xbf16>, vector<128x128xbf16>, vector<128x128xf32> -> vector<128x128xf32>
    %103 = arith.addf %96, %102 : vector<128x128xf32>
    %c9 = arith.constant 9 : index
    %c0_95 = arith.constant 0 : index
    %c0_96 = arith.constant 0 : index
    %104 = vector.load %arg5[%c9, %c0_95, %c0_96] : memref<18x24x128xf32, #tpu.memory_space<vmem>>, vector<8x16x128xf32>
    %105 = vector.shape_cast %104 : vector<8x16x128xf32> to vector<128x128xf32>
    %106 = arith.truncf %105 : vector<128x128xf32> to vector<128x128xbf16>
    %c3_97 = arith.constant 3 : index
    %c0_98 = arith.constant 0 : index
    %c0_99 = arith.constant 0 : index
    %107 = vector.load %arg2[%c3_97, %c0_98, %c0_99] : memref<9x128x128xbf16, #tpu.memory_space<vmem>>, vector<1x128x128xbf16>
    %108 = vector.shape_cast %107 : vector<1x128x128xbf16> to vector<128x128xbf16>
    %cst_100 = arith.constant dense<0.000000e+00> : vector<128x128xf32>
    %109 = tpu.matmul %106, %108, %cst_100 {dimension_numbers = #tpu.dot_dimension_numbers<[1], [0], [0], [1], [0, 0, 1, 1], [], []>} : vector<128x128xbf16>, vector<128x128xbf16>, vector<128x128xf32> -> vector<128x128xf32>
    %110 = arith.addf %103, %109 : vector<128x128xf32>
    %c9_101 = arith.constant 9 : index
    %c1_102 = arith.constant 1 : index
    %c0_103 = arith.constant 0 : index
    %111 = vector.load %arg5[%c9_101, %c1_102, %c0_103] : memref<18x24x128xf32, #tpu.memory_space<vmem>>, vector<8x16x128xf32>
    %112 = vector.shape_cast %111 : vector<8x16x128xf32> to vector<128x128xf32>
    %113 = arith.truncf %112 : vector<128x128xf32> to vector<128x128xbf16>
    %c4_104 = arith.constant 4 : index
    %c0_105 = arith.constant 0 : index
    %c0_106 = arith.constant 0 : index
    %114 = vector.load %arg2[%c4_104, %c0_105, %c0_106] : memref<9x128x128xbf16, #tpu.memory_space<vmem>>, vector<1x128x128xbf16>
    %115 = vector.shape_cast %114 : vector<1x128x128xbf16> to vector<128x128xbf16>
    %cst_107 = arith.constant dense<0.000000e+00> : vector<128x128xf32>
    %116 = tpu.matmul %113, %115, %cst_107 {dimension_numbers = #tpu.dot_dimension_numbers<[1], [0], [0], [1], [0, 0, 1, 1], [], []>} : vector<128x128xbf16>, vector<128x128xbf16>, vector<128x128xf32> -> vector<128x128xf32>
    %117 = arith.addf %110, %116 : vector<128x128xf32>
    %c9_108 = arith.constant 9 : index
    %c2_109 = arith.constant 2 : index
    %c0_110 = arith.constant 0 : index
    %118 = vector.load %arg5[%c9_108, %c2_109, %c0_110] : memref<18x24x128xf32, #tpu.memory_space<vmem>>, vector<8x16x128xf32>
    %119 = vector.shape_cast %118 : vector<8x16x128xf32> to vector<128x128xf32>
    %120 = arith.truncf %119 : vector<128x128xf32> to vector<128x128xbf16>
    %c5_111 = arith.constant 5 : index
    %c0_112 = arith.constant 0 : index
    %c0_113 = arith.constant 0 : index
    %121 = vector.load %arg2[%c5_111, %c0_112, %c0_113] : memref<9x128x128xbf16, #tpu.memory_space<vmem>>, vector<1x128x128xbf16>
    %122 = vector.shape_cast %121 : vector<1x128x128xbf16> to vector<128x128xbf16>
    %cst_114 = arith.constant dense<0.000000e+00> : vector<128x128xf32>
    %123 = tpu.matmul %120, %122, %cst_114 {dimension_numbers = #tpu.dot_dimension_numbers<[1], [0], [0], [1], [0, 0, 1, 1], [], []>} : vector<128x128xbf16>, vector<128x128xbf16>, vector<128x128xf32> -> vector<128x128xf32>
    %124 = arith.addf %117, %123 : vector<128x128xf32>
    %c10 = arith.constant 10 : index
    %c0_115 = arith.constant 0 : index
    %c0_116 = arith.constant 0 : index
    %125 = vector.load %arg5[%c10, %c0_115, %c0_116] : memref<18x24x128xf32, #tpu.memory_space<vmem>>, vector<8x16x128xf32>
    %126 = vector.shape_cast %125 : vector<8x16x128xf32> to vector<128x128xf32>
    %127 = arith.truncf %126 : vector<128x128xf32> to vector<128x128xbf16>
    %c6_117 = arith.constant 6 : index
    %c0_118 = arith.constant 0 : index
    %c0_119 = arith.constant 0 : index
    %128 = vector.load %arg2[%c6_117, %c0_118, %c0_119] : memref<9x128x128xbf16, #tpu.memory_space<vmem>>, vector<1x128x128xbf16>
    %129 = vector.shape_cast %128 : vector<1x128x128xbf16> to vector<128x128xbf16>
    %cst_120 = arith.constant dense<0.000000e+00> : vector<128x128xf32>
    %130 = tpu.matmul %127, %129, %cst_120 {dimension_numbers = #tpu.dot_dimension_numbers<[1], [0], [0], [1], [0, 0, 1, 1], [], []>} : vector<128x128xbf16>, vector<128x128xbf16>, vector<128x128xf32> -> vector<128x128xf32>
    %131 = arith.addf %124, %130 : vector<128x128xf32>
    %c10_121 = arith.constant 10 : index
    %c1_122 = arith.constant 1 : index
    %c0_123 = arith.constant 0 : index
    %132 = vector.load %arg5[%c10_121, %c1_122, %c0_123] : memref<18x24x128xf32, #tpu.memory_space<vmem>>, vector<8x16x128xf32>
    %133 = vector.shape_cast %132 : vector<8x16x128xf32> to vector<128x128xf32>
    %134 = arith.truncf %133 : vector<128x128xf32> to vector<128x128xbf16>
    %c7_124 = arith.constant 7 : index
    %c0_125 = arith.constant 0 : index
    %c0_126 = arith.constant 0 : index
    %135 = vector.load %arg2[%c7_124, %c0_125, %c0_126] : memref<9x128x128xbf16, #tpu.memory_space<vmem>>, vector<1x128x128xbf16>
    %136 = vector.shape_cast %135 : vector<1x128x128xbf16> to vector<128x128xbf16>
    %cst_127 = arith.constant dense<0.000000e+00> : vector<128x128xf32>
    %137 = tpu.matmul %134, %136, %cst_127 {dimension_numbers = #tpu.dot_dimension_numbers<[1], [0], [0], [1], [0, 0, 1, 1], [], []>} : vector<128x128xbf16>, vector<128x128xbf16>, vector<128x128xf32> -> vector<128x128xf32>
    %138 = arith.addf %131, %137 : vector<128x128xf32>
    %c10_128 = arith.constant 10 : index
    %c2_129 = arith.constant 2 : index
    %c0_130 = arith.constant 0 : index
    %139 = vector.load %arg5[%c10_128, %c2_129, %c0_130] : memref<18x24x128xf32, #tpu.memory_space<vmem>>, vector<8x16x128xf32>
    %140 = vector.shape_cast %139 : vector<8x16x128xf32> to vector<128x128xf32>
    %141 = arith.truncf %140 : vector<128x128xf32> to vector<128x128xbf16>
    %c8_131 = arith.constant 8 : index
    %c0_132 = arith.constant 0 : index
    %c0_133 = arith.constant 0 : index
    %142 = vector.load %arg2[%c8_131, %c0_132, %c0_133] : memref<9x128x128xbf16, #tpu.memory_space<vmem>>, vector<1x128x128xbf16>
    %143 = vector.shape_cast %142 : vector<1x128x128xbf16> to vector<128x128xbf16>
    %cst_134 = arith.constant dense<0.000000e+00> : vector<128x128xf32>
    %144 = tpu.matmul %141, %143, %cst_134 {dimension_numbers = #tpu.dot_dimension_numbers<[1], [0], [0], [1], [0, 0, 1, 1], [], []>} : vector<128x128xbf16>, vector<128x128xbf16>, vector<128x128xf32> -> vector<128x128xf32>
    %145 = arith.addf %138, %144 : vector<128x128xf32>
    %146 = vector.shape_cast %145 : vector<128x128xf32> to vector<1x8x16x128xf32>
    %147 = arith.truncf %146 : vector<1x8x16x128xf32> to vector<1x8x16x128xbf16>
    %c0_135 = arith.constant 0 : index
    %c8_136 = arith.constant 8 : index
    %c0_137 = arith.constant 0 : index
    %c0_138 = arith.constant 0 : index
    %148 = vector.load %arg3[%c0_135, %c8_136, %c0_137, %c0_138] : memref<1x16x16x128xbf16, #tpu.memory_space<vmem>>, vector<1x8x16x128xbf16>
    tpu.vector_store %arg3[%c0_135, %c8_136, %c0_137, %c0_138], %147 {strides = array<i32>} : memref<1x16x16x128xbf16, #tpu.memory_space<vmem>>, vector<1x8x16x128xbf16>,
    %cst_139 = arith.constant dense<0.000000e+00> : vector<128xf32>
    %149 = vector.multi_reduction <add>, %145, %cst_139 [0] : vector<128x128xf32> to vector<128xf32>
    %150 = vector.shape_cast %149 : vector<128xf32> to vector<1x128xf32>
    %151 = arith.addf %77, %150 : vector<1x128xf32>
    %152 = arith.mulf %145, %145 : vector<128x128xf32>
    %cst_140 = arith.constant dense<0.000000e+00> : vector<128xf32>
    %153 = vector.multi_reduction <add>, %152, %cst_140 [0] : vector<128x128xf32> to vector<128xf32>
    %154 = vector.shape_cast %153 : vector<128xf32> to vector<1x128xf32>
    %155 = arith.addf %81, %154 : vector<1x128xf32>
    %156 = vector.shape_cast %151 : vector<1x128xf32> to vector<1x1x128xf32>
    %c0_141 = arith.constant 0 : index
    %c0_142 = arith.constant 0 : index
    %c0_143 = arith.constant 0 : index
    %157 = vector.load %arg4[%c0_141, %c0_142, %c0_143] : memref<1x2x128xf32, #tpu.memory_space<vmem>>, vector<1x1x128xf32>
    tpu.vector_store %arg4[%c0_141, %c0_142, %c0_143], %156 {strides = array<i32>} : memref<1x2x128xf32, #tpu.memory_space<vmem>>, vector<1x1x128xf32>,
    %158 = vector.shape_cast %155 : vector<1x128xf32> to vector<1x1x128xf32>
    %c0_144 = arith.constant 0 : index
    %c1_145 = arith.constant 1 : index
    %c0_146 = arith.constant 0 : index
    %159 = vector.load %arg4[%c0_144, %c1_145, %c0_146] : memref<1x2x128xf32, #tpu.memory_space<vmem>>, vector<1x1x128xf32>
    tpu.vector_store %arg4[%c0_144, %c1_145, %c0_146], %158 {strides = array<i32>} : memref<1x2x128xf32, #tpu.memory_space<vmem>>, vector<1x1x128xf32>,
    return
  }
  func.func @transform_0(%arg0: i32) -> (i32, i32, i32, i32) {
    %c0_i32 = arith.constant 0 : i32
    %c0_i32_0 = arith.constant 0 : i32
    %c0_i32_1 = arith.constant 0 : i32
    %c0_i32_2 = arith.constant 0 : i32
    return %arg0, %c0_i32, %c0_i32_0, %c0_i32_1 : i32, i32, i32, i32
  }
  func.func @transform_1(%arg0: i32) -> (i32, i32, i32) {
    %c0_i32 = arith.constant 0 : i32
    %c0_i32_0 = arith.constant 0 : i32
    %c0_i32_1 = arith.constant 0 : i32
    %c0_i32_2 = arith.constant 0 : i32
    return %c0_i32, %c0_i32_0, %c0_i32_1 : i32, i32, i32
  }
  func.func @transform_2(%arg0: i32) -> (i32, i32, i32, i32) {
    %c0_i32 = arith.constant 0 : i32
    %c0_i32_0 = arith.constant 0 : i32
    %c0_i32_1 = arith.constant 0 : i32
    %c0_i32_2 = arith.constant 0 : i32
    return %arg0, %c0_i32, %c0_i32_0, %c0_i32_1 : i32, i32, i32, i32
  }
  func.func @transform_3(%arg0: i32) -> (i32, i32, i32) {
    %c0_i32 = arith.constant 0 : i32
    %c0_i32_0 = arith.constant 0 : i32
    %c0_i32_1 = arith.constant 0 : i32
    return %arg0, %c0_i32, %c0_i32_0 : i32, i32, i32
  }
}

</mosaic_0001>

<llo_original>
// kernel: tpu_custom_call.1
$region0: #{tpu_custom_call.1}
  #allocation0 [shape = 'u32[]', space=smem, size = 0x4, offset = 0x4, fixed_abs, tag = 'smem constant byte address 0x4 - core index']
  #allocation1 [shape = 'u32[72,128]{1,0:T(1,128)}', space=vmem, size = 0x9000, scoped, tag = 'internal scratch']
  #allocation2 [shape = 'f32[18,24,128]{2,1,0:T(8,128)}', space=vmem, size = 0x36000, scoped, tag = 'scratch operand']
  %s0 = inlined_call_operand.hbm [shape: bf16[2,16,16,128], index: 0, kind: input, shape index: {}]
  %s1 = inlined_call_operand.hbm [shape: bf16[9,128,128], index: 1, kind: input, shape index: {}]
  %s2 = inlined_call_operand.hbm [shape: bf16[2,16,16,128], index: 2, kind: output, shape index: {0}]
  %s3 = inlined_call_operand.hbm [shape: f32[2,2,128], index: 3, kind: output, shape index: {1}]
  %4 = xla_tuple %s2, %s3
  %s5 = sld [smem:[#allocation0]]
  $region57: #{tpu_custom_call.1} parent=0
    _
  %s7 = ssub.s32 1, %s5
  %s8 = scalar_select 0, %s7, %s5
  $region1: #{tpu_custom_call.1} parent=0
    #allocation3 [shape = 'u8[131072]{0}', space=vmem, size = 0x20000, scoped, tag = 'input window, operand 0']
    #allocation4 [shape = 's32[2]{0}', space=sflag, size = 0x8, scoped, tag = 'scoped memory for tpu_custom_call.1']
    #allocation5 [shape = 's32[2]{0}', space=sflag, size = 0x8, scoped, tag = 'scoped memory for tpu_custom_call.1']
    #allocation6 [shape = 'u8[294912]{0}', space=vmem, size = 0x48000, scoped, tag = 'input window, operand 1, single buffered']
    #allocation7 [shape = 's32[1]{0}', space=sflag, size = 0x4, scoped, tag = 'scoped memory for tpu_custom_call.1']
    #allocation8 [shape = 'u8[131072]{0}', space=vmem, size = 0x20000, scoped, tag = 'output window, operand 0']
    #allocation9 [shape = 'u8[2048]{0}', space=vmem, size = 0x800, scoped, tag = 'output window, operand 1']
    #allocation10 [shape = 's32[2]{0}', space=sflag, size = 0x8, scoped, tag = 'scoped memory for tpu_custom_call.1']
    %9 = vsyncpa [#allocation4], 0
    %s10 = scalar_lea.sflag [#allocation4], 1
    %11 = vsyncpa %s10, 0
    %12 = vsyncpa [#allocation7], 0
    %13 = vsyncpa [#allocation5], 0
    %s14 = scalar_lea.sflag [#allocation5], 1
    %15 = vsyncpa %s14, 0
    %16 = vsyncpa [#allocation10], 0
    %s17 = scalar_lea.sflag [#allocation10], 1
    %18 = vsyncpa %s17, 0
    loop: start=0, step=1, limit=4
    $region2: #{tpu_custom_call.1} parent=1 // loop_pre_header
      _
    $region3: #{tpu_custom_call.1} parent=1 // loop_header
      %s20 = sphi 0, %s24
      %p21 = scmp.ge.s32.totalorder %s20, 4
      %s30 = sphi 0, %s32
      %s33 = sphi 0, %s30
      %s34 = sphi 0, %s33
      %s50 = sphi 0, %s34
      %s54 = sphi 0, %s54
      %s56 = sphi 0, %s54
      %s57 = sphi 0, %s56
      %s71 = sphi 0, %s57
      %s77 = sphi 0, %s79
      %s80 = sphi 0, %s77
      %s81 = sphi 0, %s80
      %s97 = sphi 0, %s81
      %s103 = sphi 0, %s105
      %s106 = sphi 0, %s103
      %s107 = sphi 0, %s106
      %s123 = sphi 0, %s107
    $region4: #{tpu_custom_call.1} parent=1 // loop_header_branch
      %23 = sbr.rel (%p21) target = $region8
    $region5: #{tpu_custom_call.1} parent=1 // loop_body
      %s25 = ssub.s32 %s20, 1
      %s26 = ssub.s32 %s20, 2
      %s27 = sadd.s32 %s20, 1
      %s28 = ssub.s32 %s20, %s27
      %p29 = scmp.eq.s32.totalorder %s28, 0
      %s31 = sadd.s32 %s30, 1
      %s32 = scalar_select %p29, %s30, %s31
      %p35 = pneg %p29
      %p36 = scmp.eq.s32.totalorder %s20, 1
      %p37 = por %p35, %p36
      %p38 = scmp.ne.s32.totalorder %s30, %s33
      %p39 = scmp.eq.s32.totalorder %s20, 0
      %p40 = por %p38, %p39
      %p41 = scmp.ne.s32.totalorder %s30, %s33
      %p42 = scmp.eq.s32.totalorder %s25, 1
      %p43 = por %p41, %p42
      %p44 = scmp.ne.s32.totalorder %s33, %s34
      %p45 = scmp.eq.s32.totalorder %s25, 0
      %p46 = por %p44, %p45
      %p47 = scmp.ne.s32.totalorder %s33, %s34
      %p48 = scmp.eq.s32.totalorder %s26, 1
      %p49 = por %p47, %p48
      %p51 = scmp.ne.s32.totalorder %s34, %s50
      %p52 = scmp.eq.s32.totalorder %s26, 0
      %p53 = por %p51, %p52
      %s55 = sadd.s32 %s54, 1
      %p58 = scmp.eq.s32.totalorder %s20, 1
      %p59 = scmp.ne.s32.totalorder %s54, %s56
      %p60 = scmp.eq.s32.totalorder %s20, 0
      %p61 = por %p59, %p60
      %p62 = scmp.ne.s32.totalorder %s54, %s56
      %p63 = scmp.eq.s32.totalorder %s25, 1
      %p64 = por %p62, %p63
      %p65 = scmp.ne.s32.totalorder %s56, %s57
      %p66 = scmp.eq.s32.totalorder %s25, 0
      %p67 = por %p65, %p66
      %p68 = scmp.ne.s32.totalorder %s56, %s57
      %p69 = scmp.eq.s32.totalorder %s26, 1
      %p70 = por %p68, %p69
      %p72 = scmp.ne.s32.totalorder %s57, %s71
      %p73 = scmp.eq.s32.totalorder %s26, 0
      %p74 = por %p72, %p73
      %s75 = ssub.s32 %s20, %s27
      %p76 = scmp.eq.s32.totalorder %s75, 0
      %s78 = sadd.s32 %s77, 1
      %s79 = scalar_select %p76, %s77, %s78
      %p82 = pneg %p76
      %p83 = scmp.eq.s32.totalorder %s20, 1
      %p84 = por %p82, %p83
      %p85 = scmp.ne.s32.totalorder %s77, %s80
      %p86 = scmp.eq.s32.totalorder %s20, 0
      %p87 = por %p85, %p86
      %p88 = scmp.ne.s32.totalorder %s77, %s80
      %p89 = scmp.eq.s32.totalorder %s25, 1
      %p90 = por %p88, %p89
      %p91 = scmp.ne.s32.totalorder %s80, %s81
      %p92 = scmp.eq.s32.totalorder %s25, 0
      %p93 = por %p91, %p92
      %p94 = scmp.ne.s32.totalorder %s80, %s81
      %p95 = scmp.eq.s32.totalorder %s26, 1
      %p96 = por %p94, %p95
      %p98 = scmp.ne.s32.totalorder %s81, %s97
      %p99 = scmp.eq.s32.totalorder %s26, 0
      %p100 = por %p98, %p99
      %s101 = ssub.s32 %s20, %s27
      %p102 = scmp.eq.s32.totalorder %s101, 0
      %s104 = sadd.s32 %s103, 1
      %s105 = scalar_select %p102, %s103, %s104
      %p108 = pneg %p102
      %p109 = scmp.eq.s32.totalorder %s20, 1
      %p110 = por %p108, %p109
      %p111 = scmp.ne.s32.totalorder %s103, %s106
      %p112 = scmp.eq.s32.totalorder %s20, 0
      %p113 = por %p111, %p112
      %p114 = scmp.ne.s32.totalorder %s103, %s106
      %p115 = scmp.eq.s32.totalorder %s25, 1
      %p116 = por %p114, %p115
      %p117 = scmp.ne.s32.totalorder %s106, %s107
      %p118 = scmp.eq.s32.totalorder %s25, 0
      %p119 = por %p117, %p118
      %p120 = scmp.ne.s32.totalorder %s106, %s107
      %p121 = scmp.eq.s32.totalorder %s26, 1
      %p122 = por %p120, %p121
      %p124 = scmp.ne.s32.totalorder %s107, %s123
      %p125 = scmp.eq.s32.totalorder %s26, 0
      %p126 = por %p124, %p125
      %p127 = scmp.le.s32.totalorder 1, %s20
      %p128 = scmp.lt.s32.totalorder %s20, 3
      %p129 = pnand %p127, %p128
      %p130 = pneg %p129
      // Predicated region
      $region9: #{tpu_custom_call.1} parent=5 // pred_check
        _
      $region10: #{tpu_custom_call.1} parent=5 // pred_check_branch
        %132 = sbr.rel (%p129) target = $region12
      $region11: #{tpu_custom_call.1} parent=5 // pred_region
        %s133 = ssub.s32 %s20, 1
        // Predicated region
        $region13: #{tpu_custom_call.1} parent=11 // pred_check
          %p134 = pneg %p67
        $region14: #{tpu_custom_call.1} parent=11 // pred_check_branch
          %136 = sbr.rel (%p134) target = $region16
        $region15: #{tpu_custom_call.1} parent=11 // pred_region
          %138 = vsyncadd [#allocation7], 0
          %s139 = sshll.u32 %s1, 4
          %s140 = int_to_ptr.hbm [resolvable:$true] %s139
          %s141 = sshll.u32 [#allocation6], 4
          %s142 = int_to_ptr.vmem [resolvable:$true] %s141
          %147 = dma.hbm_to_vmem [thread:$0]  %s140, 9216, %s142, [#allocation7], 64, 64, 4
        $region16: #{tpu_custom_call.1} parent=11 // pred_fallthru
          _
      $region12: #{tpu_custom_call.1} parent=5 // pred_fallthru
        _
      %p148 = scmp.lt.s32.totalorder %s20, 2
      // Predicated region
      $region17: #{tpu_custom_call.1} parent=5 // pred_check
        %p149 = pneg %p148
      $region18: #{tpu_custom_call.1} parent=5 // pred_check_branch
        %151 = sbr.rel (%p149) target = $region20
      $region19: #{tpu_custom_call.1} parent=5 // pred_region
        // Predicated region
        $region21: #{tpu_custom_call.1} parent=19 // pred_check
          %p152 = pneg %p40
        $region22: #{tpu_custom_call.1} parent=19 // pred_check_branch
          %154 = sbr.rel (%p152) target = $region24
        $region23: #{tpu_custom_call.1} parent=19 // pred_region
          %s155 = sand.u32 %s30, 1
          %s156 = scalar_lea.sflag [#allocation4], %s155
          %s157 = sand.u32 %s30, 1
          %s158 = smul.addr %s157, 128
          %s159 = scalar_lea.vmem [#allocation3], %s158
          %161 = vsyncadd %s156, 0
          %s162 = smul.addr %s20, 32
          %s163 = smul.addr %s162, 4
          %s164 = scalar_lea.hbm %s0, %s163
          %s165 = sshll.u32 %s164, 4
          %s166 = int_to_ptr.hbm [resolvable:$true] %s165
          %s167 = sshll.u32 %s159, 4
          %s168 = int_to_ptr.vmem [resolvable:$true] %s167
          %173 = dma.hbm_to_vmem [thread:$0]  %s166, 2048, %s168, %s156, 64, 64, 4
        $region24: #{tpu_custom_call.1} parent=19 // pred_fallthru
          _
      $region20: #{tpu_custom_call.1} parent=5 // pred_fallthru
        _
      %p174 = scmp.le.s32.totalorder 1, %s20
      %p175 = scmp.lt.s32.totalorder %s20, 3
      %p176 = pnand %p174, %p175
      %p177 = pneg %p176
      // Predicated region
      $region25: #{tpu_custom_call.1} parent=5 // pred_check
        _
      $region26: #{tpu_custom_call.1} parent=5 // pred_check_branch
        %179 = sbr.rel (%p176) target = $region28
      $region27: #{tpu_custom_call.1} parent=5 // pred_region
        %s180 = ssub.s32 %s20, 1
        %s181 = sand.u32 %s33, 1
        %s182 = scalar_lea.sflag [#allocation4], %s181
        %s183 = sand.u32 %s33, 1
        %s184 = smul.addr %s183, 128
        %s185 = scalar_lea.vmem [#allocation3], %s184
        // Predicated region
        $region29: #{tpu_custom_call.1} parent=27 // pred_check
          %p186 = pneg %p46
        $region30: #{tpu_custom_call.1} parent=27 // pred_check_branch
          %188 = sbr.rel (%p186) target = $region32
        $region31: #{tpu_custom_call.1} parent=27 // pred_region
          %190 = dma.done %s182, 2048
        $region32: #{tpu_custom_call.1} parent=27 // pred_fallthru
          _
        // Predicated region
        $region33: #{tpu_custom_call.1} parent=27 // pred_check
          %p191 = pneg %p67
        $region34: #{tpu_custom_call.1} parent=27 // pred_check_branch
          %193 = sbr.rel (%p191) target = $region36
        $region35: #{tpu_custom_call.1} parent=27 // pred_region
          %195 = dma.done [#allocation7], 9216
        $region36: #{tpu_custom_call.1} parent=27 // pred_fallthru
          _
        %s196 = sand.u32 %s33, 1
        %s197 = scalar_lea.sflag [#allocation4], %s196
        %s198 = sand.u32 %s33, 1
        %s199 = smul.addr %s198, 128
        %s200 = scalar_lea.vmem [#allocation3], %s199
        %p201 = pneg %p46
        %p202 = pneg %p43
        %p203 = pneg %p67
        %p204 = pneg %p64
        %p205 = pneg %p93
        %p206 = pneg %p90
        %s207 = sand.u32 %s80, 1
        %s208 = scalar_lea.sflag [#allocation5], %s207
        %s209 = sand.u32 %s80, 1
        %s210 = smul.addr %s209, 128
        %s211 = scalar_lea.vmem [#allocation8], %s210
        %p212 = pneg %p119
        %p213 = pneg %p116
        %s214 = sand.u32 %s106, 1
        %s215 = scalar_lea.sflag [#allocation10], %s214
        %s216 = sand.u32 %s106, 1
        %s217 = smul.addr %s216, 2
        %s218 = scalar_lea.vmem [#allocation9], %s217
        %219 = vst [vmem:[#allocation2] sm:$0xff] 0.0
        %220 = vst [vmem:[#allocation2 + $0x8] sm:$0xff] 0.0
        %221 = vst [vmem:[#allocation2 + $0x10] sm:$0xff] 0.0
        %222 = vst [vmem:[#allocation2 + $0x18] sm:$0xff] 0.0
        %223 = vst [vmem:[#allocation2 + $0x20] sm:$0xff] 0.0
        %224 = vst [vmem:[#allocation2 + $0x28] sm:$0xff] 0.0
        %225 = vst [vmem:[#allocation2 + $0x30] sm:$0xff] 0.0
        %226 = vst [vmem:[#allocation2 + $0x38] sm:$0xff] 0.0
        %227 = vst [vmem:[#allocation2 + $0x40] sm:$0xff] 0.0
        %228 = vst [vmem:[#allocation2 + $0x48] sm:$0xff] 0.0
        %229 = vst [vmem:[#allocation2 + $0x50] sm:$0xff] 0.0
        %230 = vst [vmem:[#allocation2 + $0x58] sm:$0xff] 0.0
        %231 = vst [vmem:[#allocation2 + $0x60] sm:$0xff] 0.0
        %232 = vst [vmem:[#allocation2 + $0x68] sm:$0xff] 0.0
        %233 = vst [vmem:[#allocation2 + $0x70] sm:$0xff] 0.0
        %234 = vst [vmem:[#allocation2 + $0x78] sm:$0xff] 0.0
        %235 = vst [vmem:[#allocation2 + $0x80] sm:$0xff] 0.0
        %236 = vst [vmem:[#allocation2 + $0x88] sm:$0xff] 0.0
        %237 = vst [vmem:[#allocation2 + $0x90] sm:$0xff] 0.0
        %238 = vst [vmem:[#allocation2 + $0x98] sm:$0xff] 0.0
        %239 = vst [vmem:[#allocation2 + $0xa0] sm:$0xff] 0.0
        %240 = vst [vmem:[#allocation2 + $0xa8] sm:$0xff] 0.0
        %241 = vst [vmem:[#allocation2 + $0xb0] sm:$0xff] 0.0
        %242 = vst [vmem:[#allocation2 + $0xb8] sm:$0xff] 0.0
        %243 = vst [vmem:[#allocation2 + $0xc0] sm:$0xff] 0.0
        %244 = vst [vmem:[#allocation2 + $0xc8] sm:$0xff] 0.0
        %245 = vst [vmem:[#allocation2 + $0xd0] sm:$0xff] 0.0
        %246 = vst [vmem:[#allocation2 + $0xd8] sm:$0xff] 0.0
        %247 = vst [vmem:[#allocation2 + $0xe0] sm:$0xff] 0.0
        %248 = vst [vmem:[#allocation2 + $0xe8] sm:$0xff] 0.0
        %249 = vst [vmem:[#allocation2 + $0xf0] sm:$0xff] 0.0
        %250 = vst [vmem:[#allocation2 + $0xf8] sm:$0xff] 0.0
        %251 = vst [vmem:[#allocation2 + $0x100] sm:$0xff] 0.0
        %252 = vst [vmem:[#allocation2 + $0x108] sm:$0xff] 0.0
        %253 = vst [vmem:[#allocation2 + $0x110] sm:$0xff] 0.0
        %254 = vst [vmem:[#allocation2 + $0x118] sm:$0xff] 0.0
        %255 = vst [vmem:[#allocation2 + $0x120] sm:$0xff] 0.0
        %256 = vst [vmem:[#allocation2 + $0x128] sm:$0xff] 0.0
        %257 = vst [vmem:[#allocation2 + $0x130] sm:$0xff] 0.0
        %258 = vst [vmem:[#allocation2 + $0x138] sm:$0xff] 0.0
        %259 = vst [vmem:[#allocation2 + $0x140] sm:$0xff] 0.0
        %260 = vst [vmem:[#allocation2 + $0x148] sm:$0xff] 0.0
        %261 = vst [vmem:[#allocation2 + $0x150] sm:$0xff] 0.0
        %262 = vst [vmem:[#allocation2 + $0x158] sm:$0xff] 0.0
        %263 = vst [vmem:[#allocation2 + $0x160] sm:$0xff] 0.0
        %264 = vst [vmem:[#allocation2 + $0x168] sm:$0xff] 0.0
        %265 = vst [vmem:[#allocation2 + $0x170] sm:$0xff] 0.0
        %266 = vst [vmem:[#allocation2 + $0x178] sm:$0xff] 0.0
        %267 = vst [vmem:[#allocation2 + $0x180] sm:$0xff] 0.0
        %268 = vst [vmem:[#allocation2 + $0x188] sm:$0xff] 0.0
        %269 = vst [vmem:[#allocation2 + $0x190] sm:$0xff] 0.0
        %270 = vst [vmem:[#allocation2 + $0x198] sm:$0xff] 0.0
        %271 = vst [vmem:[#allocation2 + $0x1a0] sm:$0xff] 0.0
        %272 = vst [vmem:[#allocation2 + $0x1a8] sm:$0xff] 0.0
        %v273 = vld [vmem:[%s185] sm:$0xf]
        %v274 = vld [vmem:[%s185 + $0x4] sm:$0xf]
        %v275 = vld [vmem:[%s185 + $0x8] sm:$0xf]
        %v276 = vld [vmem:[%s185 + $0xc] sm:$0xf]
        %v277 = vld [vmem:[%s185 + $0x10] sm:$0xf]
        %v278 = vld [vmem:[%s185 + $0x14] sm:$0xf]
        %v279 = vld [vmem:[%s185 + $0x18] sm:$0xf]
        %v280 = vld [vmem:[%s185 + $0x1c] sm:$0xf]
        %v281 = vld [vmem:[%s185 + $0x20] sm:$0xf]
        %v282 = vld [vmem:[%s185 + $0x24] sm:$0xf]
        %v283 = vld [vmem:[%s185 + $0x28] sm:$0xf]
        %v284 = vld [vmem:[%s185 + $0x2c] sm:$0xf]
        %v285 = vld [vmem:[%s185 + $0x30] sm:$0xf]
        %v286 = vld [vmem:[%s185 + $0x34] sm:$0xf]
        %v287 = vld [vmem:[%s185 + $0x38] sm:$0xf]
        %v288 = vld [vmem:[%s185 + $0x3c] sm:$0xf]
        %v289 = vld [vmem:[%s185 + $0x40] sm:$0xf]
        %v290 = vld [vmem:[%s185 + $0x44] sm:$0xf]
        %v291 = vld [vmem:[%s185 + $0x48] sm:$0xf]
        %v292 = vld [vmem:[%s185 + $0x4c] sm:$0xf]
        %v293 = vld [vmem:[%s185 + $0x50] sm:$0xf]
        %v294 = vld [vmem:[%s185 + $0x54] sm:$0xf]
        %v295 = vld [vmem:[%s185 + $0x58] sm:$0xf]
        %v296 = vld [vmem:[%s185 + $0x5c] sm:$0xf]
        %v297 = vld [vmem:[%s185 + $0x60] sm:$0xf]
        %v298 = vld [vmem:[%s185 + $0x64] sm:$0xf]
        %v299 = vld [vmem:[%s185 + $0x68] sm:$0xf]
        %v300 = vld [vmem:[%s185 + $0x6c] sm:$0xf]
        %v301 = vld [vmem:[%s185 + $0x70] sm:$0xf]
        %v302 = vld [vmem:[%s185 + $0x74] sm:$0xf]
        %v303 = vld [vmem:[%s185 + $0x78] sm:$0xf]
        %v304 = vld [vmem:[%s185 + $0x7c] sm:$0xf]
        %v305 = vunpack.c.l.bf16 %v273
        %v306 = vunpack.c.l.bf16 %v274
        %v307 = vunpack.c.l.bf16 %v275
        %v308 = vunpack.c.l.bf16 %v276
        %v309 = vunpack.c.l.bf16 %v277
        %v310 = vunpack.c.l.bf16 %v278
        %v311 = vunpack.c.l.bf16 %v279
        %v312 = vunpack.c.l.bf16 %v280
        %v313 = vunpack.c.l.bf16 %v281
        %v314 = vunpack.c.l.bf16 %v282
        %v315 = vunpack.c.l.bf16 %v283
        %v316 = vunpack.c.l.bf16 %v284
        %v317 = vunpack.c.l.bf16 %v285
        %v318 = vunpack.c.l.bf16 %v286
        %v319 = vunpack.c.l.bf16 %v287
        %v320 = vunpack.c.l.bf16 %v288
        %v321 = vunpack.c.l.bf16 %v289
        %v322 = vunpack.c.l.bf16 %v290
        %v323 = vunpack.c.l.bf16 %v291
        %v324 = vunpack.c.l.bf16 %v292
        %v325 = vunpack.c.l.bf16 %v293
        %v326 = vunpack.c.l.bf16 %v294
        %v327 = vunpack.c.l.bf16 %v295
        %v328 = vunpack.c.l.bf16 %v296
        %v329 = vunpack.c.l.bf16 %v297
        %v330 = vunpack.c.l.bf16 %v298
        %v331 = vunpack.c.l.bf16 %v299
        %v332 = vunpack.c.l.bf16 %v300
        %v333 = vunpack.c.l.bf16 %v301
        %v334 = vunpack.c.l.bf16 %v302
        %v335 = vunpack.c.l.bf16 %v303
        %v336 = vunpack.c.l.bf16 %v304
        %s337 = scalar_lea.vmem [#allocation2], 24
        %338 = vst [vmem:[%s337 + $0x1] sm:$0xff] %v305
        %339 = vst [vmem:[%s337 + $0x9] sm:$0xff] %v306
        %340 = vst [vmem:[%s337 + $0x19] sm:$0xff] %v307
        %341 = vst [vmem:[%s337 + $0x21] sm:$0xff] %v308
        %342 = vst [vmem:[%s337 + $0x31] sm:$0xff] %v309
        %343 = vst [vmem:[%s337 + $0x39] sm:$0xff] %v310
        %344 = vst [vmem:[%s337 + $0x49] sm:$0xff] %v311
        %345 = vst [vmem:[%s337 + $0x51] sm:$0xff] %v312
        %346 = vst [vmem:[%s337 + $0x61] sm:$0xff] %v313
        %347 = vst [vmem:[%s337 + $0x69] sm:$0xff] %v314
        %348 = vst [vmem:[%s337 + $0x79] sm:$0xff] %v315
        %349 = vst [vmem:[%s337 + $0x81] sm:$0xff] %v316
        %350 = vst [vmem:[%s337 + $0x91] sm:$0xff] %v317
        %351 = vst [vmem:[%s337 + $0x99] sm:$0xff] %v318
        %352 = vst [vmem:[%s337 + $0xa9] sm:$0xff] %v319
        %353 = vst [vmem:[%s337 + $0xb1] sm:$0xff] %v320
        %354 = vst [vmem:[%s337 + $0xc1] sm:$0xff] %v321
        %355 = vst [vmem:[%s337 + $0xc9] sm:$0xff] %v322
        %356 = vst [vmem:[%s337 + $0xd9] sm:$0xff] %v323
        %357 = vst [vmem:[%s337 + $0xe1] sm:$0xff] %v324
        %358 = vst [vmem:[%s337 + $0xf1] sm:$0xff] %v325
        %359 = vst [vmem:[%s337 + $0xf9] sm:$0xff] %v326
        %360 = vst [vmem:[%s337 + $0x109] sm:$0xff] %v327
        %361 = vst [vmem:[%s337 + $0x111] sm:$0xff] %v328
        %362 = vst [vmem:[%s337 + $0x121] sm:$0xff] %v329
        %363 = vst [vmem:[%s337 + $0x129] sm:$0xff] %v330
        %364 = vst [vmem:[%s337 + $0x139] sm:$0xff] %v331
        %365 = vst [vmem:[%s337 + $0x141] sm:$0xff] %v332
        %366 = vst [vmem:[%s337 + $0x151] sm:$0xff] %v333
        %367 = vst [vmem:[%s337 + $0x159] sm:$0xff] %v334
        %368 = vst [vmem:[%s337 + $0x169] sm:$0xff] %v335
        %369 = vst [vmem:[%s337 + $0x171] sm:$0xff] %v336
        %v370 = vld [vmem:[#allocation2] sm:$0xff]
        %v371 = vld [vmem:[#allocation2 + $0x8] sm:$0xff]
        %v372 = vld [vmem:[#allocation2 + $0x18] sm:$0xff]
        %v373 = vld [vmem:[#allocation2 + $0x20] sm:$0xff]
        %v374 = vld [vmem:[#allocation2 + $0x30] sm:$0xff]
        %v375 = vld [vmem:[#allocation2 + $0x38] sm:$0xff]
        %v376 = vld [vmem:[#allocation2 + $0x48] sm:$0xff]
        %v377 = vld [vmem:[#allocation2 + $0x50] sm:$0xff]
        %v378 = vld [vmem:[#allocation2 + $0x60] sm:$0xff]
        %v379 = vld [vmem:[#allocation2 + $0x68] sm:$0xff]
        %v380 = vld [vmem:[#allocation2 + $0x78] sm:$0xff]
        %v381 = vld [vmem:[#allocation2 + $0x80] sm:$0xff]
        %v382 = vld [vmem:[#allocation2 + $0x90] sm:$0xff]
        %v383 = vld [vmem:[#allocation2 + $0x98] sm:$0xff]
        %v384 = vld [vmem:[#allocation2 + $0xa8] sm:$0xff]
        %v385 = vld [vmem:[#allocation2 + $0xb0] sm:$0xff]
        %v386 = vpack.c.bf16 %v371, %v370
        %v387 = vpack.c.bf16 %v373, %v372
        %v388 = vpack.c.bf16 %v375, %v374
        %v389 = vpack.c.bf16 %v377, %v376
        %v390 = vpack.c.bf16 %v379, %v378
        %v391 = vpack.c.bf16 %v381, %v380
        %v392 = vpack.c.bf16 %v383, %v382
        %v393 = vpack.c.bf16 %v385, %v384
        %v394 = vld [vmem:[#allocation6] sm:$0xf]
        %v395 = vld [vmem:[#allocation6 + $0x4] sm:$0xf]
        %v396 = vld [vmem:[#allocation6 + $0x8] sm:$0xf]
        %v397 = vld [vmem:[#allocation6 + $0xc] sm:$0xf]
        %v398 = vld [vmem:[#allocation6 + $0x10] sm:$0xf]
        %v399 = vld [vmem:[#allocation6 + $0x14] sm:$0xf]
        %v400 = vld [vmem:[#allocation6 + $0x18] sm:$0xf]
        %v401 = vld [vmem:[#allocation6 + $0x1c] sm:$0xf]
        %v402 = vld [vmem:[#allocation6 + $0x20] sm:$0xf]
        %v403 = vld [vmem:[#allocation6 + $0x24] sm:$0xf]
        %v404 = vld [vmem:[#allocation6 + $0x28] sm:$0xf]
        %v405 = vld [vmem:[#allocation6 + $0x2c] sm:$0xf]
        %v406 = vld [vmem:[#allocation6 + $0x30] sm:$0xf]
        %v407 = vld [vmem:[#allocation6 + $0x34] sm:$0xf]
        %v408 = vld [vmem:[#allocation6 + $0x38] sm:$0xf]
        %v409 = vld [vmem:[#allocation6 + $0x3c] sm:$0xf]
        %v410 = vld [vmem:[#allocation2 + $0x1] sm:$0xff]
        %v411 = vld [vmem:[#allocation2 + $0x9] sm:$0xff]
        %v412 = vld [vmem:[#allocation2 + $0x19] sm:$0xff]
        %v413 = vld [vmem:[#allocation2 + $0x21] sm:$0xff]
        %v414 = vld [vmem:[#allocation2 + $0x31] sm:$0xff]
        %v415 = vld [vmem:[#allocation2 + $0x39] sm:$0xff]
        %v416 = vld [vmem:[#allocation2 + $0x49] sm:$0xff]
        %v417 = vld [vmem:[#allocation2 + $0x51] sm:$0xff]
        %v418 = vld [vmem:[#allocation2 + $0x61] sm:$0xff]
        %v419 = vld [vmem:[#allocation2 + $0x69] sm:$0xff]
        %v420 = vld [vmem:[#allocation2 + $0x79] sm:$0xff]
        %v421 = vld [vmem:[#allocation2 + $0x81] sm:$0xff]
        %v422 = vld [vmem:[#allocation2 + $0x91] sm:$0xff]
        %v423 = vld [vmem:[#allocation2 + $0x99] sm:$0xff]
        %v424 = vld [vmem:[#allocation2 + $0xa9] sm:$0xff]
        %v425 = vld [vmem:[#allocation2 + $0xb1] sm:$0xff]
        %v426 = vpack.c.bf16 %v411, %v410
        %v427 = vpack.c.bf16 %v413, %v412
        %v428 = vpack.c.bf16 %v415, %v414
        %v429 = vpack.c.bf16 %v417, %v416
        %v430 = vpack.c.bf16 %v419, %v418
        %v431 = vpack.c.bf16 %v421, %v420
        %v432 = vpack.c.bf16 %v423, %v422
        %v433 = vpack.c.bf16 %v425, %v424
        %s434 = scalar_lea.vmem [#allocation6], 64
        %v435 = vld [vmem:[%s434] sm:$0xf]
        %v436 = vld [vmem:[%s434 + $0x4] sm:$0xf]
        %v437 = vld [vmem:[%s434 + $0x8] sm:$0xf]
        %v438 = vld [vmem:[%s434 + $0xc] sm:$0xf]
        %v439 = vld [vmem:[%s434 + $0x10] sm:$0xf]
        %v440 = vld [vmem:[%s434 + $0x14] sm:$0xf]
        %v441 = vld [vmem:[%s434 + $0x18] sm:$0xf]
        %v442 = vld [vmem:[%s434 + $0x1c] sm:$0xf]
        %v443 = vld [vmem:[%s434 + $0x20] sm:$0xf]
        %v444 = vld [vmem:[%s434 + $0x24] sm:$0xf]
        %v445 = vld [vmem:[%s434 + $0x28] sm:$0xf]
        %v446 = vld [vmem:[%s434 + $0x2c] sm:$0xf]
        %v447 = vld [vmem:[%s434 + $0x30] sm:$0xf]
        %v448 = vld [vmem:[%s434 + $0x34] sm:$0xf]
        %v449 = vld [vmem:[%s434 + $0x38] sm:$0xf]
        %v450 = vld [vmem:[%s434 + $0x3c] sm:$0xf]
        %v467 = vunpack.c.l.b16 %v435
        %v468 = vunpack.c.l.b16 %v436
        %v469 = vunpack.c.l.b16 %v437
        %v470 = vunpack.c.l.b16 %v438
        %v471 = vunpack.c.l.b16 %v439
        %v472 = vunpack.c.l.b16 %v440
        %v473 = vunpack.c.l.b16 %v441
        %v474 = vunpack.c.l.b16 %v442
        %v475 = vunpack.c.l.b16 %v443
        %v476 = vunpack.c.l.b16 %v444
        %v477 = vunpack.c.l.b16 %v445
        %v478 = vunpack.c.l.b16 %v446
        %v479 = vunpack.c.l.b16 %v447
        %v480 = vunpack.c.l.b16 %v448
        %v481 = vunpack.c.l.b16 %v449
        %v482 = vunpack.c.l.b16 %v450
        %v483 = vpack.c.b16 %v468, %v467
        %v484 = vpack.c.b16 %v470, %v469
        %v485 = vpack.c.b16 %v472, %v471
        %v486 = vpack.c.b16 %v474, %v473
        %v487 = vpack.c.b16 %v476, %v475
        %v488 = vpack.c.b16 %v478, %v477
        %v489 = vpack.c.b16 %v480, %v479
        %v490 = vpack.c.b16 %v482, %v481
        %499 = vmatpush.bf16.msra.mxu0 %v490
        %500 = vmatpush.bf16.msra.mxu0 %v489
        %501 = vmatpush.bf16.msra.mxu0 %v488
        %502 = vmatpush.bf16.msra.mxu0 %v487
        %503 = vmatpush.bf16.msra.mxu0 %v486
        %504 = vmatpush.bf16.msra.mxu0 %v485
        %505 = vmatpush.bf16.msra.mxu0 %v484
        %506 = vmatpush.bf16.msra.mxu0 %v483
        %507 = vmatmul.bf16.gmra.mxu0 %v426
        %v508 = vpop.f32.mrf.mxu0
        %v509 = vadd.f32 0.0, %v508
        %v510 = vpop.f32.mrf.mxu0
        %v511 = vadd.f32 0.0, %v510
        %512 = vmatmul.bf16.gmra.mxu0 %v427
        %v513 = vpop.f32.mrf.mxu0
        %v514 = vadd.f32 0.0, %v513
        %v515 = vpop.f32.mrf.mxu0
        %v516 = vadd.f32 0.0, %v515
        %517 = vmatmul.bf16.gmra.mxu0 %v428
        %v518 = vpop.f32.mrf.mxu0
        %v519 = vadd.f32 0.0, %v518
        %v520 = vpop.f32.mrf.mxu0
        %v521 = vadd.f32 0.0, %v520
        %522 = vmatmul.bf16.gmra.mxu0 %v429
        %v523 = vpop.f32.mrf.mxu0
        %v524 = vadd.f32 0.0, %v523
        %v525 = vpop.f32.mrf.mxu0
        %v526 = vadd.f32 0.0, %v525
        %527 = vmatmul.bf16.gmra.mxu0 %v430
        %v528 = vpop.f32.mrf.mxu0
        %v529 = vadd.f32 0.0, %v528
        %v530 = vpop.f32.mrf.mxu0
        %v531 = vadd.f32 0.0, %v530
        %532 = vmatmul.bf16.gmra.mxu0 %v431
        %v533 = vpop.f32.mrf.mxu0
        %v534 = vadd.f32 0.0, %v533
        %v535 = vpop.f32.mrf.mxu0
        %v536 = vadd.f32 0.0, %v535
        %537 = vmatmul.bf16.gmra.mxu0 %v432
        %v538 = vpop.f32.mrf.mxu0
        %v539 = vadd.f32 0.0, %v538
        %v540 = vpop.f32.mrf.mxu0
        %v541 = vadd.f32 0.0, %v540
        %542 = vmatmul.bf16.gmra.mxu0 %v433
        %v543 = vpop.f32.mrf.mxu0
        %v544 = vadd.f32 0.0, %v543
        %v545 = vpop.f32.mrf.mxu0
        %v546 = vadd.f32 0.0, %v545
        %547 = vdwg.mxu0
        %v564 = vunpack.c.l.b16 %v394
        %v565 = vunpack.c.l.b16 %v395
        %v566 = vunpack.c.l.b16 %v396
        %v567 = vunpack.c.l.b16 %v397
        %v568 = vunpack.c.l.b16 %v398
        %v569 = vunpack.c.l.b16 %v399
        %v570 = vunpack.c.l.b16 %v400
        %v571 = vunpack.c.l.b16 %v401
        %v572 = vunpack.c.l.b16 %v402
        %v573 = vunpack.c.l.b16 %v403
        %v574 = vunpack.c.l.b16 %v404
        %v575 = vunpack.c.l.b16 %v405
        %v576 = vunpack.c.l.b16 %v406
        %v577 = vunpack.c.l.b16 %v407
        %v578 = vunpack.c.l.b16 %v408
        %v579 = vunpack.c.l.b16 %v409
        %v580 = vpack.c.b16 %v565, %v564
        %v581 = vpack.c.b16 %v567, %v566
        %v582 = vpack.c.b16 %v569, %v568
        %v583 = vpack.c.b16 %v571, %v570
        %v584 = vpack.c.b16 %v573, %v572
        %v585 = vpack.c.b16 %v575, %v574
        %v586 = vpack.c.b16 %v577, %v576
        %v587 = vpack.c.b16 %v579, %v578
        %596 = vmatpush.bf16.msra.mxu0 %v587
        %597 = vmatpush.bf16.msra.mxu0 %v586
        %598 = vmatpush.bf16.msra.mxu0 %v585
        %599 = vmatpush.bf16.msra.mxu0 %v584
        %600 = vmatpush.bf16.msra.mxu0 %v583
        %601 = vmatpush.bf16.msra.mxu0 %v582
        %602 = vmatpush.bf16.msra.mxu0 %v581
        %603 = vmatpush.bf16.msra.mxu0 %v580
        %604 = vmatmul.bf16.gmra.mxu0 %v386
        %v605 = vpop.f32.mrf.mxu0
        %v606 = vadd.f32 %v509, %v605
        %v607 = vpop.f32.mrf.mxu0
        %v608 = vadd.f32 %v511, %v607
        %609 = vmatmul.bf16.gmra.mxu0 %v387
        %v610 = vpop.f32.mrf.mxu0
        %v611 = vadd.f32 %v514, %v610
        %v612 = vpop.f32.mrf.mxu0
        %v613 = vadd.f32 %v516, %v612
        %614 = vmatmul.bf16.gmra.mxu0 %v388
        %v615 = vpop.f32.mrf.mxu0
        %v616 = vadd.f32 %v519, %v615
        %v617 = vpop.f32.mrf.mxu0
        %v618 = vadd.f32 %v521, %v617
        %619 = vmatmul.bf16.gmra.mxu0 %v389
        %v620 = vpop.f32.mrf.mxu0
        %v621 = vadd.f32 %v524, %v620
        %v622 = vpop.f32.mrf.mxu0
        %v623 = vadd.f32 %v526, %v622
        %624 = vmatmul.bf16.gmra.mxu0 %v390
        %v625 = vpop.f32.mrf.mxu0
        %v626 = vadd.f32 %v529, %v625
        %v627 = vpop.f32.mrf.mxu0
        %v628 = vadd.f32 %v531, %v627
        %629 = vmatmul.bf16.gmra.mxu0 %v391
        %v630 = vpop.f32.mrf.mxu0
        %v631 = vadd.f32 %v534, %v630
        %v632 = vpop.f32.mrf.mxu0
        %v633 = vadd.f32 %v536, %v632
        %634 = vmatmul.bf16.gmra.mxu0 %v392
        %v635 = vpop.f32.mrf.mxu0
        %v636 = vadd.f32 %v539, %v635
        %v637 = vpop.f32.mrf.mxu0
        %v638 = vadd.f32 %v541, %v637
        %639 = vmatmul.bf16.gmra.mxu0 %v393
        %v640 = vpop.f32.mrf.mxu0
        %v641 = vadd.f32 %v544, %v640
        %v642 = vpop.f32.mrf.mxu0
        %v643 = vadd.f32 %v546, %v642
        %644 = vdwg.mxu0
        %v645 = vld [vmem:[#allocation2 + $0x2] sm:$0xff]
        %v646 = vld [vmem:[#allocation2 + $0xa] sm:$0xff]
        %v647 = vld [vmem:[#allocation2 + $0x1a] sm:$0xff]
        %v648 = vld [vmem:[#allocation2 + $0x22] sm:$0xff]
        %v649 = vld [vmem:[#allocation2 + $0x32] sm:$0xff]
        %v650 = vld [vmem:[#allocation2 + $0x3a] sm:$0xff]
        %v651 = vld [vmem:[#allocation2 + $0x4a] sm:$0xff]
        %v652 = vld [vmem:[#allocation2 + $0x52] sm:$0xff]
        %v653 = vld [vmem:[#allocation2 + $0x62] sm:$0xff]
        %v654 = vld [vmem:[#allocation2 + $0x6a] sm:$0xff]
        %v655 = vld [vmem:[#allocation2 + $0x7a] sm:$0xff]
        %v656 = vld [vmem:[#allocation2 + $0x82] sm:$0xff]
        %v657 = vld [vmem:[#allocation2 + $0x92] sm:$0xff]
        %v658 = vld [vmem:[#allocation2 + $0x9a] sm:$0xff]
        %v659 = vld [vmem:[#allocation2 + $0xaa] sm:$0xff]
        %v660 = vld [vmem:[#allocation2 + $0xb2] sm:$0xff]
        %v661 = vpack.c.bf16 %v646, %v645
        %v662 = vpack.c.bf16 %v648, %v647
        %v663 = vpack.c.bf16 %v650, %v649
        %v664 = vpack.c.bf16 %v652, %v651
        %v665 = vpack.c.bf16 %v654, %v653
        %v666 = vpack.c.bf16 %v656, %v655
        %v667 = vpack.c.bf16 %v658, %v657
        %v668 = vpack.c.bf16 %v660, %v659
        %s669 = scalar_lea.vmem [#allocation6], 128
        %v670 = vld [vmem:[%s669] sm:$0xf]
        %v671 = vld [vmem:[%s669 + $0x4] sm:$0xf]
        %v672 = vld [vmem:[%s669 + $0x8] sm:$0xf]
        %v673 = vld [vmem:[%s669 + $0xc] sm:$0xf]
        %v674 = vld [vmem:[%s669 + $0x10] sm:$0xf]
        %v675 = vld [vmem:[%s669 + $0x14] sm:$0xf]
        %v676 = vld [vmem:[%s669 + $0x18] sm:$0xf]
        %v677 = vld [vmem:[%s669 + $0x1c] sm:$0xf]
        %v678 = vld [vmem:[%s669 + $0x20] sm:$0xf]
        %v679 = vld [vmem:[%s669 + $0x24] sm:$0xf]
        %v680 = vld [vmem:[%s669 + $0x28] sm:$0xf]
        %v681 = vld [vmem:[%s669 + $0x2c] sm:$0xf]
        %v682 = vld [vmem:[%s669 + $0x30] sm:$0xf]
        %v683 = vld [vmem:[%s669 + $0x34] sm:$0xf]
        %v684 = vld [vmem:[%s669 + $0x38] sm:$0xf]
        %v685 = vld [vmem:[%s669 + $0x3c] sm:$0xf]
        %v702 = vunpack.c.l.b16 %v670
        %v703 = vunpack.c.l.b16 %v671
        %v704 = vunpack.c.l.b16 %v672
        %v705 = vunpack.c.l.b16 %v673
        %v706 = vunpack.c.l.b16 %v674
        %v707 = vunpack.c.l.b16 %v675
        %v708 = vunpack.c.l.b16 %v676
        %v709 = vunpack.c.l.b16 %v677
        %v710 = vunpack.c.l.b16 %v678
        %v711 = vunpack.c.l.b16 %v679
        %v712 = vunpack.c.l.b16 %v680
        %v713 = vunpack.c.l.b16 %v681
        %v714 = vunpack.c.l.b16 %v682
        %v715 = vunpack.c.l.b16 %v683
        %v716 = vunpack.c.l.b16 %v684
        %v717 = vunpack.c.l.b16 %v685
        %v718 = vpack.c.b16 %v703, %v702
        %v719 = vpack.c.b16 %v705, %v704
        %v720 = vpack.c.b16 %v707, %v706
        %v721 = vpack.c.b16 %v709, %v708
        %v722 = vpack.c.b16 %v711, %v710
        %v723 = vpack.c.b16 %v713, %v712
        %v724 = vpack.c.b16 %v715, %v714
        %v725 = vpack.c.b16 %v717, %v716
        %734 = vmatpush.bf16.msra.mxu0 %v725
        %735 = vmatpush.bf16.msra.mxu0 %v724
        %736 = vmatpush.bf16.msra.mxu0 %v723
        %737 = vmatpush.bf16.msra.mxu0 %v722
        %738 = vmatpush.bf16.msra.mxu0 %v721
        %739 = vmatpush.bf16.msra.mxu0 %v720
        %740 = vmatpush.bf16.msra.mxu0 %v719
        %741 = vmatpush.bf16.msra.mxu0 %v718
        %742 = vmatmul.bf16.gmra.mxu0 %v661
        %v743 = vpop.f32.mrf.mxu0
        %v744 = vadd.f32 0.0, %v743
        %v745 = vpop.f32.mrf.mxu0
        %v746 = vadd.f32 0.0, %v745
        %747 = vmatmul.bf16.gmra.mxu0 %v662
        %v748 = vpop.f32.mrf.mxu0
        %v749 = vadd.f32 0.0, %v748
        %v750 = vpop.f32.mrf.mxu0
        %v751 = vadd.f32 0.0, %v750
        %752 = vmatmul.bf16.gmra.mxu0 %v663
        %v753 = vpop.f32.mrf.mxu0
        %v754 = vadd.f32 0.0, %v753
        %v755 = vpop.f32.mrf.mxu0
        %v756 = vadd.f32 0.0, %v755
        %757 = vmatmul.bf16.gmra.mxu0 %v664
        %v758 = vpop.f32.mrf.mxu0
        %v759 = vadd.f32 0.0, %v758
        %v760 = vpop.f32.mrf.mxu0
        %v761 = vadd.f32 0.0, %v760
        %762 = vmatmul.bf16.gmra.mxu0 %v665
        %v763 = vpop.f32.mrf.mxu0
        %v764 = vadd.f32 0.0, %v763
        %v765 = vpop.f32.mrf.mxu0
        %v766 = vadd.f32 0.0, %v765
        %767 = vmatmul.bf16.gmra.mxu0 %v666
        %v768 = vpop.f32.mrf.mxu0
        %v769 = vadd.f32 0.0, %v768
        %v770 = vpop.f32.mrf.mxu0
        %v771 = vadd.f32 0.0, %v770
        %772 = vmatmul.bf16.gmra.mxu0 %v667
        %v773 = vpop.f32.mrf.mxu0
        %v774 = vadd.f32 0.0, %v773
        %v775 = vpop.f32.mrf.mxu0
        %v776 = vadd.f32 0.0, %v775
        %777 = vmatmul.bf16.gmra.mxu0 %v668
        %v778 = vpop.f32.mrf.mxu0
        %v779 = vadd.f32 0.0, %v778
        %v780 = vpop.f32.mrf.mxu0
        %v781 = vadd.f32 0.0, %v780
        %782 = vdwg.mxu0
        %v783 = vadd.f32 %v606, %v744
        %v784 = vadd.f32 %v608, %v746
        %v785 = vadd.f32 %v611, %v749
        %v786 = vadd.f32 %v613, %v751
        %v787 = vadd.f32 %v616, %v754
        %v788 = vadd.f32 %v618, %v756
        %v789 = vadd.f32 %v621, %v759
        %v790 = vadd.f32 %v623, %v761
        %v791 = vadd.f32 %v626, %v764
        %v792 = vadd.f32 %v628, %v766
        %v793 = vadd.f32 %v631, %v769
        %v794 = vadd.f32 %v633, %v771
        %v795 = vadd.f32 %v636, %v774
        %v796 = vadd.f32 %v638, %v776
        %v797 = vadd.f32 %v641, %v779
        %v798 = vadd.f32 %v643, %v781
        %v799 = vld [vmem:[%s337] sm:$0xff]
        %v800 = vld [vmem:[%s337 + $0x8] sm:$0xff]
        %v801 = vld [vmem:[%s337 + $0x18] sm:$0xff]
        %v802 = vld [vmem:[%s337 + $0x20] sm:$0xff]
        %v803 = vld [vmem:[%s337 + $0x30] sm:$0xff]
        %v804 = vld [vmem:[%s337 + $0x38] sm:$0xff]
        %v805 = vld [vmem:[%s337 + $0x48] sm:$0xff]
        %v806 = vld [vmem:[%s337 + $0x50] sm:$0xff]
        %v807 = vld [vmem:[%s337 + $0x60] sm:$0xff]
        %v808 = vld [vmem:[%s337 + $0x68] sm:$0xff]
        %v809 = vld [vmem:[%s337 + $0x78] sm:$0xff]
        %v810 = vld [vmem:[%s337 + $0x80] sm:$0xff]
        %v811 = vld [vmem:[%s337 + $0x90] sm:$0xff]
        %v812 = vld [vmem:[%s337 + $0x98] sm:$0xff]
        %v813 = vld [vmem:[%s337 + $0xa8] sm:$0xff]
        %v814 = vld [vmem:[%s337 + $0xb0] sm:$0xff]
        %v815 = vpack.c.bf16 %v800, %v799
        %v816 = vpack.c.bf16 %v802, %v801
        %v817 = vpack.c.bf16 %v804, %v803
        %v818 = vpack.c.bf16 %v806, %v805
        %v819 = vpack.c.bf16 %v808, %v807
        %v820 = vpack.c.bf16 %v810, %v809
        %v821 = vpack.c.bf16 %v812, %v811
        %v822 = vpack.c.bf16 %v814, %v813
        %s823 = scalar_lea.vmem [#allocation6], 192
        %v824 = vld [vmem:[%s823] sm:$0xf]
        %v825 = vld [vmem:[%s823 + $0x4] sm:$0xf]
        %v826 = vld [vmem:[%s823 + $0x8] sm:$0xf]
        %v827 = vld [vmem:[%s823 + $0xc] sm:$0xf]
        %v828 = vld [vmem:[%s823 + $0x10] sm:$0xf]
        %v829 = vld [vmem:[%s823 + $0x14] sm:$0xf]
        %v830 = vld [vmem:[%s823 + $0x18] sm:$0xf]
        %v831 = vld [vmem:[%s823 + $0x1c] sm:$0xf]
        %v832 = vld [vmem:[%s823 + $0x20] sm:$0xf]
        %v833 = vld [vmem:[%s823 + $0x24] sm:$0xf]
        %v834 = vld [vmem:[%s823 + $0x28] sm:$0xf]
        %v835 = vld [vmem:[%s823 + $0x2c] sm:$0xf]
        %v836 = vld [vmem:[%s823 + $0x30] sm:$0xf]
        %v837 = vld [vmem:[%s823 + $0x34] sm:$0xf]
        %v838 = vld [vmem:[%s823 + $0x38] sm:$0xf]
        %v839 = vld [vmem:[%s823 + $0x3c] sm:$0xf]
        %v856 = vunpack.c.l.b16 %v824
        %v857 = vunpack.c.l.b16 %v825
        %v858 = vunpack.c.l.b16 %v826
        %v859 = vunpack.c.l.b16 %v827
        %v860 = vunpack.c.l.b16 %v828
        %v861 = vunpack.c.l.b16 %v829
        %v862 = vunpack.c.l.b16 %v830
        %v863 = vunpack.c.l.b16 %v831
        %v864 = vunpack.c.l.b16 %v832
        %v865 = vunpack.c.l.b16 %v833
        %v866 = vunpack.c.l.b16 %v834
        %v867 = vunpack.c.l.b16 %v835
        %v868 = vunpack.c.l.b16 %v836
        %v869 = vunpack.c.l.b16 %v837
        %v870 = vunpack.c.l.b16 %v838
        %v871 = vunpack.c.l.b16 %v839
        %v872 = vpack.c.b16 %v857, %v856
        %v873 = vpack.c.b16 %v859, %v858
        %v874 = vpack.c.b16 %v861, %v860
        %v875 = vpack.c.b16 %v863, %v862
        %v876 = vpack.c.b16 %v865, %v864
        %v877 = vpack.c.b16 %v867, %v866
        %v878 = vpack.c.b16 %v869, %v868
        %v879 = vpack.c.b16 %v871, %v870
        %888 = vmatpush.bf16.msra.mxu0 %v879
        %889 = vmatpush.bf16.msra.mxu0 %v878
        %890 = vmatpush.bf16.msra.mxu0 %v877
        %891 = vmatpush.bf16.msra.mxu0 %v876
        %892 = vmatpush.bf16.msra.mxu0 %v875
        %893 = vmatpush.bf16.msra.mxu0 %v874
        %894 = vmatpush.bf16.msra.mxu0 %v873
        %895 = vmatpush.bf16.msra.mxu0 %v872
        %896 = vmatmul.bf16.gmra.mxu0 %v815
        %v897 = vpop.f32.mrf.mxu0
        %v898 = vadd.f32 0.0, %v897
        %v899 = vpop.f32.mrf.mxu0
        %v900 = vadd.f32 0.0, %v899
        %901 = vmatmul.bf16.gmra.mxu0 %v816
        %v902 = vpop.f32.mrf.mxu0
        %v903 = vadd.f32 0.0, %v902
        %v904 = vpop.f32.mrf.mxu0
        %v905 = vadd.f32 0.0, %v904
        %906 = vmatmul.bf16.gmra.mxu0 %v817
        %v907 = vpop.f32.mrf.mxu0
        %v908 = vadd.f32 0.0, %v907
        %v909 = vpop.f32.mrf.mxu0
        %v910 = vadd.f32 0.0, %v909
        %911 = vmatmul.bf16.gmra.mxu0 %v818
        %v912 = vpop.f32.mrf.mxu0
        %v913 = vadd.f32 0.0, %v912
        %v914 = vpop.f32.mrf.mxu0
        %v915 = vadd.f32 0.0, %v914
        %916 = vmatmul.bf16.gmra.mxu0 %v819
        %v917 = vpop.f32.mrf.mxu0
        %v918 = vadd.f32 0.0, %v917
        %v919 = vpop.f32.mrf.mxu0
        %v920 = vadd.f32 0.0, %v919
        %921 = vmatmul.bf16.gmra.mxu0 %v820
        %v922 = vpop.f32.mrf.mxu0
        %v923 = vadd.f32 0.0, %v922
        %v924 = vpop.f32.mrf.mxu0
        %v925 = vadd.f32 0.0, %v924
        %926 = vmatmul.bf16.gmra.mxu0 %v821
        %v927 = vpop.f32.mrf.mxu0
        %v928 = vadd.f32 0.0, %v927
        %v929 = vpop.f32.mrf.mxu0
        %v930 = vadd.f32 0.0, %v929
        %931 = vmatmul.bf16.gmra.mxu0 %v822
        %v932 = vpop.f32.mrf.mxu0
        %v933 = vadd.f32 0.0, %v932
        %v934 = vpop.f32.mrf.mxu0
        %v935 = vadd.f32 0.0, %v934
        %936 = vdwg.mxu0
        %v937 = vadd.f32 %v783, %v898
        %v938 = vadd.f32 %v784, %v900
        %v939 = vadd.f32 %v785, %v903
        %v940 = vadd.f32 %v786, %v905
        %v941 = vadd.f32 %v787, %v908
        %v942 = vadd.f32 %v788, %v910
        %v943 = vadd.f32 %v789, %v913
        %v944 = vadd.f32 %v790, %v915
        %v945 = vadd.f32 %v791, %v918
        %v946 = vadd.f32 %v792, %v920
        %v947 = vadd.f32 %v793, %v923
        %v948 = vadd.f32 %v794, %v925
        %v949 = vadd.f32 %v795, %v928
        %v950 = vadd.f32 %v796, %v930
        %v951 = vadd.f32 %v797, %v933
        %v952 = vadd.f32 %v798, %v935
        %v953 = vld [vmem:[%s337 + $0x1] sm:$0xff]
        %v954 = vld [vmem:[%s337 + $0x9] sm:$0xff]
        %v955 = vld [vmem:[%s337 + $0x19] sm:$0xff]
        %v956 = vld [vmem:[%s337 + $0x21] sm:$0xff]
        %v957 = vld [vmem:[%s337 + $0x31] sm:$0xff]
        %v958 = vld [vmem:[%s337 + $0x39] sm:$0xff]
        %v959 = vld [vmem:[%s337 + $0x49] sm:$0xff]
        %v960 = vld [vmem:[%s337 + $0x51] sm:$0xff]
        %v961 = vld [vmem:[%s337 + $0x61] sm:$0xff]
        %v962 = vld [vmem:[%s337 + $0x69] sm:$0xff]
        %v963 = vld [vmem:[%s337 + $0x79] sm:$0xff]
        %v964 = vld [vmem:[%s337 + $0x81] sm:$0xff]
        %v965 = vld [vmem:[%s337 + $0x91] sm:$0xff]
        %v966 = vld [vmem:[%s337 + $0x99] sm:$0xff]
        %v967 = vld [vmem:[%s337 + $0xa9] sm:$0xff]
        %v968 = vld [vmem:[%s337 + $0xb1] sm:$0xff]
        %v969 = vpack.c.bf16 %v954, %v953
        %v970 = vpack.c.bf16 %v956, %v955
        %v971 = vpack.c.bf16 %v958, %v957
        %v972 = vpack.c.bf16 %v960, %v959
        %v973 = vpack.c.bf16 %v962, %v961
        %v974 = vpack.c.bf16 %v964, %v963
        %v975 = vpack.c.bf16 %v966, %v965
        %v976 = vpack.c.bf16 %v968, %v967
        %s977 = scalar_lea.vmem [#allocation6], 256
        %v978 = vld [vmem:[%s977] sm:$0xf]
        %v979 = vld [vmem:[%s977 + $0x4] sm:$0xf]
        %v980 = vld [vmem:[%s977 + $0x8] sm:$0xf]
        %v981 = vld [vmem:[%s977 + $0xc] sm:$0xf]
        %v982 = vld [vmem:[%s977 + $0x10] sm:$0xf]
        %v983 = vld [vmem:[%s977 + $0x14] sm:$0xf]
        %v984 = vld [vmem:[%s977 + $0x18] sm:$0xf]
        %v985 = vld [vmem:[%s977 + $0x1c] sm:$0xf]
        %v986 = vld [vmem:[%s977 + $0x20] sm:$0xf]
        %v987 = vld [vmem:[%s977 + $0x24] sm:$0xf]
        %v988 = vld [vmem:[%s977 + $0x28] sm:$0xf]
        %v989 = vld [vmem:[%s977 + $0x2c] sm:$0xf]
        %v990 = vld [vmem:[%s977 + $0x30] sm:$0xf]
        %v991 = vld [vmem:[%s977 + $0x34] sm:$0xf]
        %v992 = vld [vmem:[%s977 + $0x38] sm:$0xf]
        %v993 = vld [vmem:[%s977 + $0x3c] sm:$0xf]
        %v1010 = vunpack.c.l.b16 %v978
        %v1011 = vunpack.c.l.b16 %v979
        %v1012 = vunpack.c.l.b16 %v980
        %v1013 = vunpack.c.l.b16 %v981
        %v1014 = vunpack.c.l.b16 %v982
        %v1015 = vunpack.c.l.b16 %v983
        %v1016 = vunpack.c.l.b16 %v984
        %v1017 = vunpack.c.l.b16 %v985
        %v1018 = vunpack.c.l.b16 %v986
        %v1019 = vunpack.c.l.b16 %v987
        %v1020 = vunpack.c.l.b16 %v988
        %v1021 = vunpack.c.l.b16 %v989
        %v1022 = vunpack.c.l.b16 %v990
        %v1023 = vunpack.c.l.b16 %v991
        %v1024 = vunpack.c.l.b16 %v992
        %v1025 = vunpack.c.l.b16 %v993
        %v1026 = vpack.c.b16 %v1011, %v1010
        %v1027 = vpack.c.b16 %v1013, %v1012
        %v1028 = vpack.c.b16 %v1015, %v1014
        %v1029 = vpack.c.b16 %v1017, %v1016
        %v1030 = vpack.c.b16 %v1019, %v1018
        %v1031 = vpack.c.b16 %v1021, %v1020
        %v1032 = vpack.c.b16 %v1023, %v1022
        %v1033 = vpack.c.b16 %v1025, %v1024
        %1042 = vmatpush.bf16.msra.mxu0 %v1033
        %1043 = vmatpush.bf16.msra.mxu0 %v1032
        %1044 = vmatpush.bf16.msra.mxu0 %v1031
        %1045 = vmatpush.bf16.msra.mxu0 %v1030
        %1046 = vmatpush.bf16.msra.mxu0 %v1029
        %1047 = vmatpush.bf16.msra.mxu0 %v1028
        %1048 = vmatpush.bf16.msra.mxu0 %v1027
        %1049 = vmatpush.bf16.msra.mxu0 %v1026
        %1050 = vmatmul.bf16.gmra.mxu0 %v969
        %v1051 = vpop.f32.mrf.mxu0
        %v1052 = vadd.f32 0.0, %v1051
        %v1053 = vpop.f32.mrf.mxu0
        %v1054 = vadd.f32 0.0, %v1053
        %1055 = vmatmul.bf16.gmra.mxu0 %v970
        %v1056 = vpop.f32.mrf.mxu0
        %v1057 = vadd.f32 0.0, %v1056
        %v1058 = vpop.f32.mrf.mxu0
        %v1059 = vadd.f32 0.0, %v1058
        %1060 = vmatmul.bf16.gmra.mxu0 %v971
        %v1061 = vpop.f32.mrf.mxu0
        %v1062 = vadd.f32 0.0, %v1061
        %v1063 = vpop.f32.mrf.mxu0
        %v1064 = vadd.f32 0.0, %v1063
        %1065 = vmatmul.bf16.gmra.mxu0 %v972
        %v1066 = vpop.f32.mrf.mxu0
        %v1067 = vadd.f32 0.0, %v1066
        %v1068 = vpop.f32.mrf.mxu0
        %v1069 = vadd.f32 0.0, %v1068
        %1070 = vmatmul.bf16.gmra.mxu0 %v973
        %v1071 = vpop.f32.mrf.mxu0
        %v1072 = vadd.f32 0.0, %v1071
        %v1073 = vpop.f32.mrf.mxu0
        %v1074 = vadd.f32 0.0, %v1073
        %1075 = vmatmul.bf16.gmra.mxu0 %v974
        %v1076 = vpop.f32.mrf.mxu0
        %v1077 = vadd.f32 0.0, %v1076
        %v1078 = vpop.f32.mrf.mxu0
        %v1079 = vadd.f32 0.0, %v1078
        %1080 = vmatmul.bf16.gmra.mxu0 %v975
        %v1081 = vpop.f32.mrf.mxu0
        %v1082 = vadd.f32 0.0, %v1081
        %v1083 = vpop.f32.mrf.mxu0
        %v1084 = vadd.f32 0.0, %v1083
        %1085 = vmatmul.bf16.gmra.mxu0 %v976
        %v1086 = vpop.f32.mrf.mxu0
        %v1087 = vadd.f32 0.0, %v1086
        %v1088 = vpop.f32.mrf.mxu0
        %v1089 = vadd.f32 0.0, %v1088
        %1090 = vdwg.mxu0
        %v1091 = vadd.f32 %v937, %v1052
        %v1092 = vadd.f32 %v938, %v1054
        %v1093 = vadd.f32 %v939, %v1057
        %v1094 = vadd.f32 %v940, %v1059
        %v1095 = vadd.f32 %v941, %v1062
        %v1096 = vadd.f32 %v942, %v1064
        %v1097 = vadd.f32 %v943, %v1067
        %v1098 = vadd.f32 %v944, %v1069
        %v1099 = vadd.f32 %v945, %v1072
        %v1100 = vadd.f32 %v946, %v1074
        %v1101 = vadd.f32 %v947, %v1077
        %v1102 = vadd.f32 %v948, %v1079
        %v1103 = vadd.f32 %v949, %v1082
        %v1104 = vadd.f32 %v950, %v1084
        %v1105 = vadd.f32 %v951, %v1087
        %v1106 = vadd.f32 %v952, %v1089
        %v1107 = vld [vmem:[%s337 + $0x2] sm:$0xff]
        %v1108 = vld [vmem:[%s337 + $0xa] sm:$0xff]
        %v1109 = vld [vmem:[%s337 + $0x1a] sm:$0xff]
        %v1110 = vld [vmem:[%s337 + $0x22] sm:$0xff]
        %v1111 = vld [vmem:[%s337 + $0x32] sm:$0xff]
        %v1112 = vld [vmem:[%s337 + $0x3a] sm:$0xff]
        %v1113 = vld [vmem:[%s337 + $0x4a] sm:$0xff]
        %v1114 = vld [vmem:[%s337 + $0x52] sm:$0xff]
        %v1115 = vld [vmem:[%s337 + $0x62] sm:$0xff]
        %v1116 = vld [vmem:[%s337 + $0x6a] sm:$0xff]
        %v1117 = vld [vmem:[%s337 + $0x7a] sm:$0xff]
        %v1118 = vld [vmem:[%s337 + $0x82] sm:$0xff]
        %v1119 = vld [vmem:[%s337 + $0x92] sm:$0xff]
        %v1120 = vld [vmem:[%s337 + $0x9a] sm:$0xff]
        %v1121 = vld [vmem:[%s337 + $0xaa] sm:$0xff]
        %v1122 = vld [vmem:[%s337 + $0xb2] sm:$0xff]
        %v1123 = vpack.c.bf16 %v1108, %v1107
        %v1124 = vpack.c.bf16 %v1110, %v1109
        %v1125 = vpack.c.bf16 %v1112, %v1111
        %v1126 = vpack.c.bf16 %v1114, %v1113
        %v1127 = vpack.c.bf16 %v1116, %v1115
        %v1128 = vpack.c.bf16 %v1118, %v1117
        %v1129 = vpack.c.bf16 %v1120, %v1119
        %v1130 = vpack.c.bf16 %v1122, %v1121
        %s1131 = scalar_lea.vmem [#allocation6], 320
        %v1132 = vld [vmem:[%s1131] sm:$0xf]
        %v1133 = vld [vmem:[%s1131 + $0x4] sm:$0xf]
        %v1134 = vld [vmem:[%s1131 + $0x8] sm:$0xf]
        %v1135 = vld [vmem:[%s1131 + $0xc] sm:$0xf]
        %v1136 = vld [vmem:[%s1131 + $0x10] sm:$0xf]
        %v1137 = vld [vmem:[%s1131 + $0x14] sm:$0xf]
        %v1138 = vld [vmem:[%s1131 + $0x18] sm:$0xf]
        %v1139 = vld [vmem:[%s1131 + $0x1c] sm:$0xf]
        %v1140 = vld [vmem:[%s1131 + $0x20] sm:$0xf]
        %v1141 = vld [vmem:[%s1131 + $0x24] sm:$0xf]
        %v1142 = vld [vmem:[%s1131 + $0x28] sm:$0xf]
        %v1143 = vld [vmem:[%s1131 + $0x2c] sm:$0xf]
        %v1144 = vld [vmem:[%s1131 + $0x30] sm:$0xf]
        %v1145 = vld [vmem:[%s1131 + $0x34] sm:$0xf]
        %v1146 = vld [vmem:[%s1131 + $0x38] sm:$0xf]
        %v1147 = vld [vmem:[%s1131 + $0x3c] sm:$0xf]
        %v1164 = vunpack.c.l.b16 %v1132
        %v1165 = vunpack.c.l.b16 %v1133
        %v1166 = vunpack.c.l.b16 %v1134
        %v1167 = vunpack.c.l.b16 %v1135
        %v1168 = vunpack.c.l.b16 %v1136
        %v1169 = vunpack.c.l.b16 %v1137
        %v1170 = vunpack.c.l.b16 %v1138
        %v1171 = vunpack.c.l.b16 %v1139
        %v1172 = vunpack.c.l.b16 %v1140
        %v1173 = vunpack.c.l.b16 %v1141
        %v1174 = vunpack.c.l.b16 %v1142
        %v1175 = vunpack.c.l.b16 %v1143
        %v1176 = vunpack.c.l.b16 %v1144
        %v1177 = vunpack.c.l.b16 %v1145
        %v1178 = vunpack.c.l.b16 %v1146
        %v1179 = vunpack.c.l.b16 %v1147
        %v1180 = vpack.c.b16 %v1165, %v1164
        %v1181 = vpack.c.b16 %v1167, %v1166
        %v1182 = vpack.c.b16 %v1169, %v1168
        %v1183 = vpack.c.b16 %v1171, %v1170
        %v1184 = vpack.c.b16 %v1173, %v1172
        %v1185 = vpack.c.b16 %v1175, %v1174
        %v1186 = vpack.c.b16 %v1177, %v1176
        %v1187 = vpack.c.b16 %v1179, %v1178
        %1196 = vmatpush.bf16.msra.mxu0 %v1187
        %1197 = vmatpush.bf16.msra.mxu0 %v1186
        %1198 = vmatpush.bf16.msra.mxu0 %v1185
        %1199 = vmatpush.bf16.msra.mxu0 %v1184
        %1200 = vmatpush.bf16.msra.mxu0 %v1183
        %1201 = vmatpush.bf16.msra.mxu0 %v1182
        %1202 = vmatpush.bf16.msra.mxu0 %v1181
        %1203 = vmatpush.bf16.msra.mxu0 %v1180
        %1204 = vmatmul.bf16.gmra.mxu0 %v1123
        %v1205 = vpop.f32.mrf.mxu0
        %v1206 = vadd.f32 0.0, %v1205
        %v1207 = vpop.f32.mrf.mxu0
        %v1208 = vadd.f32 0.0, %v1207
        %1209 = vmatmul.bf16.gmra.mxu0 %v1124
        %v1210 = vpop.f32.mrf.mxu0
        %v1211 = vadd.f32 0.0, %v1210
        %v1212 = vpop.f32.mrf.mxu0
        %v1213 = vadd.f32 0.0, %v1212
        %1214 = vmatmul.bf16.gmra.mxu0 %v1125
        %v1215 = vpop.f32.mrf.mxu0
        %v1216 = vadd.f32 0.0, %v1215
        %v1217 = vpop.f32.mrf.mxu0
        %v1218 = vadd.f32 0.0, %v1217
        %1219 = vmatmul.bf16.gmra.mxu0 %v1126
        %v1220 = vpop.f32.mrf.mxu0
        %v1221 = vadd.f32 0.0, %v1220
        %v1222 = vpop.f32.mrf.mxu0
        %v1223 = vadd.f32 0.0, %v1222
        %1224 = vmatmul.bf16.gmra.mxu0 %v1127
        %v1225 = vpop.f32.mrf.mxu0
        %v1226 = vadd.f32 0.0, %v1225
        %v1227 = vpop.f32.mrf.mxu0
        %v1228 = vadd.f32 0.0, %v1227
        %1229 = vmatmul.bf16.gmra.mxu0 %v1128
        %v1230 = vpop.f32.mrf.mxu0
        %v1231 = vadd.f32 0.0, %v1230
        %v1232 = vpop.f32.mrf.mxu0
        %v1233 = vadd.f32 0.0, %v1232
        %1234 = vmatmul.bf16.gmra.mxu0 %v1129
        %v1235 = vpop.f32.mrf.mxu0
        %v1236 = vadd.f32 0.0, %v1235
        %v1237 = vpop.f32.mrf.mxu0
        %v1238 = vadd.f32 0.0, %v1237
        %1239 = vmatmul.bf16.gmra.mxu0 %v1130
        %v1240 = vpop.f32.mrf.mxu0
        %v1241 = vadd.f32 0.0, %v1240
        %v1242 = vpop.f32.mrf.mxu0
        %v1243 = vadd.f32 0.0, %v1242
        %1244 = vdwg.mxu0
        %v1245 = vadd.f32 %v1091, %v1206
        %v1246 = vadd.f32 %v1092, %v1208
        %v1247 = vadd.f32 %v1093, %v1211
        %v1248 = vadd.f32 %v1094, %v1213
        %v1249 = vadd.f32 %v1095, %v1216
        %v1250 = vadd.f32 %v1096, %v1218
        %v1251 = vadd.f32 %v1097, %v1221
        %v1252 = vadd.f32 %v1098, %v1223
        %v1253 = vadd.f32 %v1099, %v1226
        %v1254 = vadd.f32 %v1100, %v1228
        %v1255 = vadd.f32 %v1101, %v1231
        %v1256 = vadd.f32 %v1102, %v1233
        %v1257 = vadd.f32 %v1103, %v1236
        %v1258 = vadd.f32 %v1104, %v1238
        %v1259 = vadd.f32 %v1105, %v1241
        %v1260 = vadd.f32 %v1106, %v1243
        %s1261 = scalar_lea.vmem [#allocation2], 48
        %v1262 = vld [vmem:[%s1261] sm:$0xff]
        %v1263 = vld [vmem:[%s1261 + $0x8] sm:$0xff]
        %v1264 = vld [vmem:[%s1261 + $0x18] sm:$0xff]
        %v1265 = vld [vmem:[%s1261 + $0x20] sm:$0xff]
        %v1266 = vld [vmem:[%s1261 + $0x30] sm:$0xff]
        %v1267 = vld [vmem:[%s1261 + $0x38] sm:$0xff]
        %v1268 = vld [vmem:[%s1261 + $0x48] sm:$0xff]
        %v1269 = vld [vmem:[%s1261 + $0x50] sm:$0xff]
        %v1270 = vld [vmem:[%s1261 + $0x60] sm:$0xff]
        %v1271 = vld [vmem:[%s1261 + $0x68] sm:$0xff]
        %v1272 = vld [vmem:[%s1261 + $0x78] sm:$0xff]
        %v1273 = vld [vmem:[%s1261 + $0x80] sm:$0xff]
        %v1274 = vld [vmem:[%s1261 + $0x90] sm:$0xff]
        %v1275 = vld [vmem:[%s1261 + $0x98] sm:$0xff]
        %v1276 = vld [vmem:[%s1261 + $0xa8] sm:$0xff]
        %v1277 = vld [vmem:[%s1261 + $0xb0] sm:$0xff]
        %v1278 = vpack.c.bf16 %v1263, %v1262
        %v1279 = vpack.c.bf16 %v1265, %v1264
        %v1280 = vpack.c.bf16 %v1267, %v1266
        %v1281 = vpack.c.bf16 %v1269, %v1268
        %v1282 = vpack.c.bf16 %v1271, %v1270
        %v1283 = vpack.c.bf16 %v1273, %v1272
        %v1284 = vpack.c.bf16 %v1275, %v1274
        %v1285 = vpack.c.bf16 %v1277, %v1276
        %s1286 = scalar_lea.vmem [#allocation6], 384
        %v1287 = vld [vmem:[%s1286] sm:$0xf]
        %v1288 = vld [vmem:[%s1286 + $0x4] sm:$0xf]
        %v1289 = vld [vmem:[%s1286 + $0x8] sm:$0xf]
        %v1290 = vld [vmem:[%s1286 + $0xc] sm:$0xf]
        %v1291 = vld [vmem:[%s1286 + $0x10] sm:$0xf]
        %v1292 = vld [vmem:[%s1286 + $0x14] sm:$0xf]
        %v1293 = vld [vmem:[%s1286 + $0x18] sm:$0xf]
        %v1294 = vld [vmem:[%s1286 + $0x1c] sm:$0xf]
        %v1295 = vld [vmem:[%s1286 + $0x20] sm:$0xf]
        %v1296 = vld [vmem:[%s1286 + $0x24] sm:$0xf]
        %v1297 = vld [vmem:[%s1286 + $0x28] sm:$0xf]
        %v1298 = vld [vmem:[%s1286 + $0x2c] sm:$0xf]
        %v1299 = vld [vmem:[%s1286 + $0x30] sm:$0xf]
        %v1300 = vld [vmem:[%s1286 + $0x34] sm:$0xf]
        %v1301 = vld [vmem:[%s1286 + $0x38] sm:$0xf]
        %v1302 = vld [vmem:[%s1286 + $0x3c] sm:$0xf]
        %v1319 = vunpack.c.l.b16 %v1287
        %v1320 = vunpack.c.l.b16 %v1288
        %v1321 = vunpack.c.l.b16 %v1289
        %v1322 = vunpack.c.l.b16 %v1290
        %v1323 = vunpack.c.l.b16 %v1291
        %v1324 = vunpack.c.l.b16 %v1292
        %v1325 = vunpack.c.l.b16 %v1293
        %v1326 = vunpack.c.l.b16 %v1294
        %v1327 = vunpack.c.l.b16 %v1295
        %v1328 = vunpack.c.l.b16 %v1296
        %v1329 = vunpack.c.l.b16 %v1297
        %v1330 = vunpack.c.l.b16 %v1298
        %v1331 = vunpack.c.l.b16 %v1299
        %v1332 = vunpack.c.l.b16 %v1300
        %v1333 = vunpack.c.l.b16 %v1301
        %v1334 = vunpack.c.l.b16 %v1302
        %v1335 = vpack.c.b16 %v1320, %v1319
        %v1336 = vpack.c.b16 %v1322, %v1321
        %v1337 = vpack.c.b16 %v1324, %v1323
        %v1338 = vpack.c.b16 %v1326, %v1325
        %v1339 = vpack.c.b16 %v1328, %v1327
        %v1340 = vpack.c.b16 %v1330, %v1329
        %v1341 = vpack.c.b16 %v1332, %v1331
        %v1342 = vpack.c.b16 %v1334, %v1333
        %1351 = vmatpush.bf16.msra.mxu0 %v1342
        %1352 = vmatpush.bf16.msra.mxu0 %v1341
        %1353 = vmatpush.bf16.msra.mxu0 %v1340
        %1354 = vmatpush.bf16.msra.mxu0 %v1339
        %1355 = vmatpush.bf16.msra.mxu0 %v1338
        %1356 = vmatpush.bf16.msra.mxu0 %v1337
        %1357 = vmatpush.bf16.msra.mxu0 %v1336
        %1358 = vmatpush.bf16.msra.mxu0 %v1335
        %1359 = vmatmul.bf16.gmra.mxu0 %v1278
        %v1360 = vpop.f32.mrf.mxu0
        %v1361 = vadd.f32 0.0, %v1360
        %v1362 = vpop.f32.mrf.mxu0
        %v1363 = vadd.f32 0.0, %v1362
        %1364 = vmatmul.bf16.gmra.mxu0 %v1279
        %v1365 = vpop.f32.mrf.mxu0
        %v1366 = vadd.f32 0.0, %v1365
        %v1367 = vpop.f32.mrf.mxu0
        %v1368 = vadd.f32 0.0, %v1367
        %1369 = vmatmul.bf16.gmra.mxu0 %v1280
        %v1370 = vpop.f32.mrf.mxu0
        %v1371 = vadd.f32 0.0, %v1370
        %v1372 = vpop.f32.mrf.mxu0
        %v1373 = vadd.f32 0.0, %v1372
        %1374 = vmatmul.bf16.gmra.mxu0 %v1281
        %v1375 = vpop.f32.mrf.mxu0
        %v1376 = vadd.f32 0.0, %v1375
        %v1377 = vpop.f32.mrf.mxu0
        %v1378 = vadd.f32 0.0, %v1377
        %1379 = vmatmul.bf16.gmra.mxu0 %v1282
        %v1380 = vpop.f32.mrf.mxu0
        %v1381 = vadd.f32 0.0, %v1380
        %v1382 = vpop.f32.mrf.mxu0
        %v1383 = vadd.f32 0.0, %v1382
        %1384 = vmatmul.bf16.gmra.mxu0 %v1283
        %v1385 = vpop.f32.mrf.mxu0
        %v1386 = vadd.f32 0.0, %v1385
        %v1387 = vpop.f32.mrf.mxu0
        %v1388 = vadd.f32 0.0, %v1387
        %1389 = vmatmul.bf16.gmra.mxu0 %v1284
        %v1390 = vpop.f32.mrf.mxu0
        %v1391 = vadd.f32 0.0, %v1390
        %v1392 = vpop.f32.mrf.mxu0
        %v1393 = vadd.f32 0.0, %v1392
        %1394 = vmatmul.bf16.gmra.mxu0 %v1285
        %v1395 = vpop.f32.mrf.mxu0
        %v1396 = vadd.f32 0.0, %v1395
        %v1397 = vpop.f32.mrf.mxu0
        %v1398 = vadd.f32 0.0, %v1397
        %1399 = vdwg.mxu0
        %v1400 = vadd.f32 %v1245, %v1361
        %v1401 = vadd.f32 %v1246, %v1363
        %v1402 = vadd.f32 %v1247, %v1366
        %v1403 = vadd.f32 %v1248, %v1368
        %v1404 = vadd.f32 %v1249, %v1371
        %v1405 = vadd.f32 %v1250, %v1373
        %v1406 = vadd.f32 %v1251, %v1376
        %v1407 = vadd.f32 %v1252, %v1378
        %v1408 = vadd.f32 %v1253, %v1381
        %v1409 = vadd.f32 %v1254, %v1383
        %v1410 = vadd.f32 %v1255, %v1386
        %v1411 = vadd.f32 %v1256, %v1388
        %v1412 = vadd.f32 %v1257, %v1391
        %v1413 = vadd.f32 %v1258, %v1393
        %v1414 = vadd.f32 %v1259, %v1396
        %v1415 = vadd.f32 %v1260, %v1398
        %v1416 = vld [vmem:[%s1261 + $0x1] sm:$0xff]
        %v1417 = vld [vmem:[%s1261 + $0x9] sm:$0xff]
        %v1418 = vld [vmem:[%s1261 + $0x19] sm:$0xff]
        %v1419 = vld [vmem:[%s1261 + $0x21] sm:$0xff]
        %v1420 = vld [vmem:[%s1261 + $0x31] sm:$0xff]
        %v1421 = vld [vmem:[%s1261 + $0x39] sm:$0xff]
        %v1422 = vld [vmem:[%s1261 + $0x49] sm:$0xff]
        %v1423 = vld [vmem:[%s1261 + $0x51] sm:$0xff]
        %v1424 = vld [vmem:[%s1261 + $0x61] sm:$0xff]
        %v1425 = vld [vmem:[%s1261 + $0x69] sm:$0xff]
        %v1426 = vld [vmem:[%s1261 + $0x79] sm:$0xff]
        %v1427 = vld [vmem:[%s1261 + $0x81] sm:$0xff]
        %v1428 = vld [vmem:[%s1261 + $0x91] sm:$0xff]
        %v1429 = vld [vmem:[%s1261 + $0x99] sm:$0xff]
        %v1430 = vld [vmem:[%s1261 + $0xa9] sm:$0xff]
        %v1431 = vld [vmem:[%s1261 + $0xb1] sm:$0xff]
        %v1432 = vpack.c.bf16 %v1417, %v1416
        %v1433 = vpack.c.bf16 %v1419, %v1418
        %v1434 = vpack.c.bf16 %v1421, %v1420
        %v1435 = vpack.c.bf16 %v1423, %v1422
        %v1436 = vpack.c.bf16 %v1425, %v1424
        %v1437 = vpack.c.bf16 %v1427, %v1426
        %v1438 = vpack.c.bf16 %v1429, %v1428
        %v1439 = vpack.c.bf16 %v1431, %v1430
        %s1440 = scalar_lea.vmem [#allocation6], 448
        %v1441 = vld [vmem:[%s1440] sm:$0xf]
        %v1442 = vld [vmem:[%s1440 + $0x4] sm:$0xf]
        %v1443 = vld [vmem:[%s1440 + $0x8] sm:$0xf]
        %v1444 = vld [vmem:[%s1440 + $0xc] sm:$0xf]
        %v1445 = vld [vmem:[%s1440 + $0x10] sm:$0xf]
        %v1446 = vld [vmem:[%s1440 + $0x14] sm:$0xf]
        %v1447 = vld [vmem:[%s1440 + $0x18] sm:$0xf]
        %v1448 = vld [vmem:[%s1440 + $0x1c] sm:$0xf]
        %v1449 = vld [vmem:[%s1440 + $0x20] sm:$0xf]
        %v1450 = vld [vmem:[%s1440 + $0x24] sm:$0xf]
        %v1451 = vld [vmem:[%s1440 + $0x28] sm:$0xf]
        %v1452 = vld [vmem:[%s1440 + $0x2c] sm:$0xf]
        %v1453 = vld [vmem:[%s1440 + $0x30] sm:$0xf]
        %v1454 = vld [vmem:[%s1440 + $0x34] sm:$0xf]
        %v1455 = vld [vmem:[%s1440 + $0x38] sm:$0xf]
        %v1456 = vld [vmem:[%s1440 + $0x3c] sm:$0xf]
        %v1473 = vunpack.c.l.b16 %v1441
        %v1474 = vunpack.c.l.b16 %v1442
        %v1475 = vunpack.c.l.b16 %v1443
        %v1476 = vunpack.c.l.b16 %v1444
        %v1477 = vunpack.c.l.b16 %v1445
        %v1478 = vunpack.c.l.b16 %v1446
        %v1479 = vunpack.c.l.b16 %v1447
        %v1480 = vunpack.c.l.b16 %v1448
        %v1481 = vunpack.c.l.b16 %v1449
        %v1482 = vunpack.c.l.b16 %v1450
        %v1483 = vunpack.c.l.b16 %v1451
        %v1484 = vunpack.c.l.b16 %v1452
        %v1485 = vunpack.c.l.b16 %v1453
        %v1486 = vunpack.c.l.b16 %v1454
        %v1487 = vunpack.c.l.b16 %v1455
        %v1488 = vunpack.c.l.b16 %v1456
        %v1489 = vpack.c.b16 %v1474, %v1473
        %v1490 = vpack.c.b16 %v1476, %v1475
        %v1491 = vpack.c.b16 %v1478, %v1477
        %v1492 = vpack.c.b16 %v1480, %v1479
        %v1493 = vpack.c.b16 %v1482, %v1481
        %v1494 = vpack.c.b16 %v1484, %v1483
        %v1495 = vpack.c.b16 %v1486, %v1485
        %v1496 = vpack.c.b16 %v1488, %v1487
        %1505 = vmatpush.bf16.msra.mxu0 %v1496
        %1506 = vmatpush.bf16.msra.mxu0 %v1495
        %1507 = vmatpush.bf16.msra.mxu0 %v1494
        %1508 = vmatpush.bf16.msra.mxu0 %v1493
        %1509 = vmatpush.bf16.msra.mxu0 %v1492
        %1510 = vmatpush.bf16.msra.mxu0 %v1491
        %1511 = vmatpush.bf16.msra.mxu0 %v1490
        %1512 = vmatpush.bf16.msra.mxu0 %v1489
        %1513 = vmatmul.bf16.gmra.mxu0 %v1432
        %v1514 = vpop.f32.mrf.mxu0
        %v1515 = vadd.f32 0.0, %v1514
        %v1516 = vpop.f32.mrf.mxu0
        %v1517 = vadd.f32 0.0, %v1516
        %1518 = vmatmul.bf16.gmra.mxu0 %v1433
        %v1519 = vpop.f32.mrf.mxu0
        %v1520 = vadd.f32 0.0, %v1519
        %v1521 = vpop.f32.mrf.mxu0
        %v1522 = vadd.f32 0.0, %v1521
        %1523 = vmatmul.bf16.gmra.mxu0 %v1434
        %v1524 = vpop.f32.mrf.mxu0
        %v1525 = vadd.f32 0.0, %v1524
        %v1526 = vpop.f32.mrf.mxu0
        %v1527 = vadd.f32 0.0, %v1526
        %1528 = vmatmul.bf16.gmra.mxu0 %v1435
        %v1529 = vpop.f32.mrf.mxu0
        %v1530 = vadd.f32 0.0, %v1529
        %v1531 = vpop.f32.mrf.mxu0
        %v1532 = vadd.f32 0.0, %v1531
        %1533 = vmatmul.bf16.gmra.mxu0 %v1436
        %v1534 = vpop.f32.mrf.mxu0
        %v1535 = vadd.f32 0.0, %v1534
        %v1536 = vpop.f32.mrf.mxu0
        %v1537 = vadd.f32 0.0, %v1536
        %1538 = vmatmul.bf16.gmra.mxu0 %v1437
        %v1539 = vpop.f32.mrf.mxu0
        %v1540 = vadd.f32 0.0, %v1539
        %v1541 = vpop.f32.mrf.mxu0
        %v1542 = vadd.f32 0.0, %v1541
        %1543 = vmatmul.bf16.gmra.mxu0 %v1438
        %v1544 = vpop.f32.mrf.mxu0
        %v1545 = vadd.f32 0.0, %v1544
        %v1546 = vpop.f32.mrf.mxu0
        %v1547 = vadd.f32 0.0, %v1546
        %1548 = vmatmul.bf16.gmra.mxu0 %v1439
        %v1549 = vpop.f32.mrf.mxu0
        %v1550 = vadd.f32 0.0, %v1549
        %v1551 = vpop.f32.mrf.mxu0
        %v1552 = vadd.f32 0.0, %v1551
        %1553 = vdwg.mxu0
        %v1554 = vadd.f32 %v1400, %v1515
        %v1555 = vadd.f32 %v1401, %v1517
        %v1556 = vadd.f32 %v1402, %v1520
        %v1557 = vadd.f32 %v1403, %v1522
        %v1558 = vadd.f32 %v1404, %v1525
        %v1559 = vadd.f32 %v1405, %v1527
        %v1560 = vadd.f32 %v1406, %v1530
        %v1561 = vadd.f32 %v1407, %v1532
        %v1562 = vadd.f32 %v1408, %v1535
        %v1563 = vadd.f32 %v1409, %v1537
        %v1564 = vadd.f32 %v1410, %v1540
        %v1565 = vadd.f32 %v1411, %v1542
        %v1566 = vadd.f32 %v1412, %v1545
        %v1567 = vadd.f32 %v1413, %v1547
        %v1568 = vadd.f32 %v1414, %v1550
        %v1569 = vadd.f32 %v1415, %v1552
        %v1570 = vld [vmem:[%s1261 + $0x2] sm:$0xff]
        %v1571 = vld [vmem:[%s1261 + $0xa] sm:$0xff]
        %v1572 = vld [vmem:[%s1261 + $0x1a] sm:$0xff]
        %v1573 = vld [vmem:[%s1261 + $0x22] sm:$0xff]
        %v1574 = vld [vmem:[%s1261 + $0x32] sm:$0xff]
        %v1575 = vld [vmem:[%s1261 + $0x3a] sm:$0xff]
        %v1576 = vld [vmem:[%s1261 + $0x4a] sm:$0xff]
        %v1577 = vld [vmem:[%s1261 + $0x52] sm:$0xff]
        %v1578 = vld [vmem:[%s1261 + $0x62] sm:$0xff]
        %v1579 = vld [vmem:[%s1261 + $0x6a] sm:$0xff]
        %v1580 = vld [vmem:[%s1261 + $0x7a] sm:$0xff]
        %v1581 = vld [vmem:[%s1261 + $0x82] sm:$0xff]
        %v1582 = vld [vmem:[%s1261 + $0x92] sm:$0xff]
        %v1583 = vld [vmem:[%s1261 + $0x9a] sm:$0xff]
        %v1584 = vld [vmem:[%s1261 + $0xaa] sm:$0xff]
        %v1585 = vld [vmem:[%s1261 + $0xb2] sm:$0xff]
        %v1586 = vpack.c.bf16 %v1571, %v1570
        %v1587 = vpack.c.bf16 %v1573, %v1572
        %v1588 = vpack.c.bf16 %v1575, %v1574
        %v1589 = vpack.c.bf16 %v1577, %v1576
        %v1590 = vpack.c.bf16 %v1579, %v1578
        %v1591 = vpack.c.bf16 %v1581, %v1580
        %v1592 = vpack.c.bf16 %v1583, %v1582
        %v1593 = vpack.c.bf16 %v1585, %v1584
        %s1594 = scalar_lea.vmem [#allocation6], 512
        %v1595 = vld [vmem:[%s1594] sm:$0xf]
        %v1596 = vld [vmem:[%s1594 + $0x4] sm:$0xf]
        %v1597 = vld [vmem:[%s1594 + $0x8] sm:$0xf]
        %v1598 = vld [vmem:[%s1594 + $0xc] sm:$0xf]
        %v1599 = vld [vmem:[%s1594 + $0x10] sm:$0xf]
        %v1600 = vld [vmem:[%s1594 + $0x14] sm:$0xf]
        %v1601 = vld [vmem:[%s1594 + $0x18] sm:$0xf]
        %v1602 = vld [vmem:[%s1594 + $0x1c] sm:$0xf]
        %v1603 = vld [vmem:[%s1594 + $0x20] sm:$0xf]
        %v1604 = vld [vmem:[%s1594 + $0x24] sm:$0xf]
        %v1605 = vld [vmem:[%s1594 + $0x28] sm:$0xf]
        %v1606 = vld [vmem:[%s1594 + $0x2c] sm:$0xf]
        %v1607 = vld [vmem:[%s1594 + $0x30] sm:$0xf]
        %v1608 = vld [vmem:[%s1594 + $0x34] sm:$0xf]
        %v1609 = vld [vmem:[%s1594 + $0x38] sm:$0xf]
        %v1610 = vld [vmem:[%s1594 + $0x3c] sm:$0xf]
        %v1627 = vunpack.c.l.b16 %v1595
        %v1628 = vunpack.c.l.b16 %v1596
        %v1629 = vunpack.c.l.b16 %v1597
        %v1630 = vunpack.c.l.b16 %v1598
        %v1631 = vunpack.c.l.b16 %v1599
        %v1632 = vunpack.c.l.b16 %v1600
        %v1633 = vunpack.c.l.b16 %v1601
        %v1634 = vunpack.c.l.b16 %v1602
        %v1635 = vunpack.c.l.b16 %v1603
        %v1636 = vunpack.c.l.b16 %v1604
        %v1637 = vunpack.c.l.b16 %v1605
        %v1638 = vunpack.c.l.b16 %v1606
        %v1639 = vunpack.c.l.b16 %v1607
        %v1640 = vunpack.c.l.b16 %v1608
        %v1641 = vunpack.c.l.b16 %v1609
        %v1642 = vunpack.c.l.b16 %v1610
        %v1643 = vpack.c.b16 %v1628, %v1627
        %v1644 = vpack.c.b16 %v1630, %v1629
        %v1645 = vpack.c.b16 %v1632, %v1631
        %v1646 = vpack.c.b16 %v1634, %v1633
        %v1647 = vpack.c.b16 %v1636, %v1635
        %v1648 = vpack.c.b16 %v1638, %v1637
        %v1649 = vpack.c.b16 %v1640, %v1639
        %v1650 = vpack.c.b16 %v1642, %v1641
        %1659 = vmatpush.bf16.msra.mxu0 %v1650
        %1660 = vmatpush.bf16.msra.mxu0 %v1649
        %1661 = vmatpush.bf16.msra.mxu0 %v1648
        %1662 = vmatpush.bf16.msra.mxu0 %v1647
        %1663 = vmatpush.bf16.msra.mxu0 %v1646
        %1664 = vmatpush.bf16.msra.mxu0 %v1645
        %1665 = vmatpush.bf16.msra.mxu0 %v1644
        %1666 = vmatpush.bf16.msra.mxu0 %v1643
        %1667 = vmatmul.bf16.gmra.mxu0 %v1586
        %v1668 = vpop.f32.mrf.mxu0
        %v1669 = vadd.f32 0.0, %v1668
        %v1670 = vpop.f32.mrf.mxu0
        %v1671 = vadd.f32 0.0, %v1670
        %1672 = vmatmul.bf16.gmra.mxu0 %v1587
        %v1673 = vpop.f32.mrf.mxu0
        %v1674 = vadd.f32 0.0, %v1673
        %v1675 = vpop.f32.mrf.mxu0
        %v1676 = vadd.f32 0.0, %v1675
        %1677 = vmatmul.bf16.gmra.mxu0 %v1588
        %v1678 = vpop.f32.mrf.mxu0
        %v1679 = vadd.f32 0.0, %v1678
        %v1680 = vpop.f32.mrf.mxu0
        %v1681 = vadd.f32 0.0, %v1680
        %1682 = vmatmul.bf16.gmra.mxu0 %v1589
        %v1683 = vpop.f32.mrf.mxu0
        %v1684 = vadd.f32 0.0, %v1683
        %v1685 = vpop.f32.mrf.mxu0
        %v1686 = vadd.f32 0.0, %v1685
        %1687 = vmatmul.bf16.gmra.mxu0 %v1590
        %v1688 = vpop.f32.mrf.mxu0
        %v1689 = vadd.f32 0.0, %v1688
        %v1690 = vpop.f32.mrf.mxu0
        %v1691 = vadd.f32 0.0, %v1690
        %1692 = vmatmul.bf16.gmra.mxu0 %v1591
        %v1693 = vpop.f32.mrf.mxu0
        %v1694 = vadd.f32 0.0, %v1693
        %v1695 = vpop.f32.mrf.mxu0
        %v1696 = vadd.f32 0.0, %v1695
        %1697 = vmatmul.bf16.gmra.mxu0 %v1592
        %v1698 = vpop.f32.mrf.mxu0
        %v1699 = vadd.f32 0.0, %v1698
        %v1700 = vpop.f32.mrf.mxu0
        %v1701 = vadd.f32 0.0, %v1700
        %1702 = vmatmul.bf16.gmra.mxu0 %v1593
        %v1703 = vpop.f32.mrf.mxu0
        %v1704 = vadd.f32 0.0, %v1703
        %v1705 = vpop.f32.mrf.mxu0
        %v1706 = vadd.f32 0.0, %v1705
        %1707 = vdwg.mxu0
        %v1708 = vadd.f32 %v1554, %v1669
        %v1709 = vadd.f32 %v1555, %v1671
        %v1710 = vadd.f32 %v1556, %v1674
        %v1711 = vadd.f32 %v1557, %v1676
        %v1712 = vadd.f32 %v1558, %v1679
        %v1713 = vadd.f32 %v1559, %v1681
        %v1714 = vadd.f32 %v1560, %v1684
        %v1715 = vadd.f32 %v1561, %v1686
        %v1716 = vadd.f32 %v1562, %v1689
        %v1717 = vadd.f32 %v1563, %v1691
        %v1718 = vadd.f32 %v1564, %v1694
        %v1719 = vadd.f32 %v1565, %v1696
        %v1720 = vadd.f32 %v1566, %v1699
        %v1721 = vadd.f32 %v1567, %v1701
        %v1722 = vadd.f32 %v1568, %v1704
        %v1723 = vadd.f32 %v1569, %v1706
        %v1724 = vpack.c.bf16 %v1708, %v1708
        %v1725 = vpack.c.bf16 %v1709, %v1709
        %v1726 = vpack.c.bf16 %v1710, %v1710
        %v1727 = vpack.c.bf16 %v1711, %v1711
        %v1728 = vpack.c.bf16 %v1712, %v1712
        %v1729 = vpack.c.bf16 %v1713, %v1713
        %v1730 = vpack.c.bf16 %v1714, %v1714
        %v1731 = vpack.c.bf16 %v1715, %v1715
        %v1732 = vpack.c.bf16 %v1716, %v1716
        %v1733 = vpack.c.bf16 %v1717, %v1717
        %v1734 = vpack.c.bf16 %v1718, %v1718
        %v1735 = vpack.c.bf16 %v1719, %v1719
        %v1736 = vpack.c.bf16 %v1720, %v1720
        %v1737 = vpack.c.bf16 %v1721, %v1721
        %v1738 = vpack.c.bf16 %v1722, %v1722
        %v1739 = vpack.c.bf16 %v1723, %v1723
        %1740 = vst [vmem:[%s211] sm:$0xf] %v1724
        %1741 = vst [vmem:[%s211 + $0x4] sm:$0xf] %v1725
        %1742 = vst [vmem:[%s211 + $0x8] sm:$0xf] %v1726
        %1743 = vst [vmem:[%s211 + $0xc] sm:$0xf] %v1727
        %1744 = vst [vmem:[%s211 + $0x10] sm:$0xf] %v1728
        %1745 = vst [vmem:[%s211 + $0x14] sm:$0xf] %v1729
        %1746 = vst [vmem:[%s211 + $0x18] sm:$0xf] %v1730
        %1747 = vst [vmem:[%s211 + $0x1c] sm:$0xf] %v1731
        %1748 = vst [vmem:[%s211 + $0x20] sm:$0xf] %v1732
        %1749 = vst [vmem:[%s211 + $0x24] sm:$0xf] %v1733
        %1750 = vst [vmem:[%s211 + $0x28] sm:$0xf] %v1734
        %1751 = vst [vmem:[%s211 + $0x2c] sm:$0xf] %v1735
        %1752 = vst [vmem:[%s211 + $0x30] sm:$0xf] %v1736
        %1753 = vst [vmem:[%s211 + $0x34] sm:$0xf] %v1737
        %1754 = vst [vmem:[%s211 + $0x38] sm:$0xf] %v1738
        %1755 = vst [vmem:[%s211 + $0x3c] sm:$0xf] %v1739
        %v1756 = vadd.f32 %v1708, %v1709
        %v1757 = vadd.f32 %v1756, %v1710
        %v1758 = vadd.f32 %v1757, %v1711
        %v1759 = vadd.f32 %v1758, %v1712
        %v1760 = vadd.f32 %v1759, %v1713
        %v1761 = vadd.f32 %v1760, %v1714
        %v1762 = vadd.f32 %v1761, %v1715
        %v1763 = vadd.f32 %v1762, %v1716
        %v1764 = vadd.f32 %v1763, %v1717
        %v1765 = vadd.f32 %v1764, %v1718
        %v1766 = vadd.f32 %v1765, %v1719
        %v1767 = vadd.f32 %v1766, %v1720
        %v1768 = vadd.f32 %v1767, %v1721
        %v1769 = vadd.f32 %v1768, %v1722
        %v1770 = vadd.f32 %v1769, %v1723
        %v1771 = vrot.slane %v1770, 4
        %v1772 = vadd.f32 %v1770, %v1771
        %v1773 = vrot.slane %v1772, 2
        %v1774 = vadd.f32 %v1772, %v1773
        %v1775 = vrot.slane %v1774, 1
        %v1776 = vadd.f32 %v1774, %v1775
        %v1777 = vadd.f32 %v1776, 0.0
        %v1778 = vmul.f32 %v1708, %v1708
        %v1779 = vmul.f32 %v1709, %v1709
        %v1780 = vmul.f32 %v1710, %v1710
        %v1781 = vmul.f32 %v1711, %v1711
        %v1782 = vmul.f32 %v1712, %v1712
        %v1783 = vmul.f32 %v1713, %v1713
        %v1784 = vmul.f32 %v1714, %v1714
        %v1785 = vmul.f32 %v1715, %v1715
        %v1786 = vmul.f32 %v1716, %v1716
        %v1787 = vmul.f32 %v1717, %v1717
        %v1788 = vmul.f32 %v1718, %v1718
        %v1789 = vmul.f32 %v1719, %v1719
        %v1790 = vmul.f32 %v1720, %v1720
        %v1791 = vmul.f32 %v1721, %v1721
        %v1792 = vmul.f32 %v1722, %v1722
        %v1793 = vmul.f32 %v1723, %v1723
        %v1794 = vadd.f32 %v1778, %v1779
        %v1795 = vadd.f32 %v1794, %v1780
        %v1796 = vadd.f32 %v1795, %v1781
        %v1797 = vadd.f32 %v1796, %v1782
        %v1798 = vadd.f32 %v1797, %v1783
        %v1799 = vadd.f32 %v1798, %v1784
        %v1800 = vadd.f32 %v1799, %v1785
        %v1801 = vadd.f32 %v1800, %v1786
        %v1802 = vadd.f32 %v1801, %v1787
        %v1803 = vadd.f32 %v1802, %v1788
        %v1804 = vadd.f32 %v1803, %v1789
        %v1805 = vadd.f32 %v1804, %v1790
        %v1806 = vadd.f32 %v1805, %v1791
        %v1807 = vadd.f32 %v1806, %v1792
        %v1808 = vadd.f32 %v1807, %v1793
        %v1809 = vrot.slane %v1808, 4
        %v1810 = vadd.f32 %v1808, %v1809
        %v1811 = vrot.slane %v1810, 2
        %v1812 = vadd.f32 %v1810, %v1811
        %v1813 = vrot.slane %v1812, 1
        %v1814 = vadd.f32 %v1812, %v1813
        %v1815 = vadd.f32 %v1814, 0.0
        %s1816 = scalar_lea.vmem [#allocation2], 192
        %v1817 = vld [vmem:[%s1816] sm:$0xff]
        %v1818 = vld [vmem:[%s1816 + $0x8] sm:$0xff]
        %v1819 = vld [vmem:[%s1816 + $0x18] sm:$0xff]
        %v1820 = vld [vmem:[%s1816 + $0x20] sm:$0xff]
        %v1821 = vld [vmem:[%s1816 + $0x30] sm:$0xff]
        %v1822 = vld [vmem:[%s1816 + $0x38] sm:$0xff]
        %v1823 = vld [vmem:[%s1816 + $0x48] sm:$0xff]
        %v1824 = vld [vmem:[%s1816 + $0x50] sm:$0xff]
        %v1825 = vld [vmem:[%s1816 + $0x60] sm:$0xff]
        %v1826 = vld [vmem:[%s1816 + $0x68] sm:$0xff]
        %v1827 = vld [vmem:[%s1816 + $0x78] sm:$0xff]
        %v1828 = vld [vmem:[%s1816 + $0x80] sm:$0xff]
        %v1829 = vld [vmem:[%s1816 + $0x90] sm:$0xff]
        %v1830 = vld [vmem:[%s1816 + $0x98] sm:$0xff]
        %v1831 = vld [vmem:[%s1816 + $0xa8] sm:$0xff]
        %v1832 = vld [vmem:[%s1816 + $0xb0] sm:$0xff]
        %v1833 = vpack.c.bf16 %v1818, %v1817
        %v1834 = vpack.c.bf16 %v1820, %v1819
        %v1835 = vpack.c.bf16 %v1822, %v1821
        %v1836 = vpack.c.bf16 %v1824, %v1823
        %v1837 = vpack.c.bf16 %v1826, %v1825
        %v1838 = vpack.c.bf16 %v1828, %v1827
        %v1839 = vpack.c.bf16 %v1830, %v1829
        %v1840 = vpack.c.bf16 %v1832, %v1831
        %v1841 = vld [vmem:[#allocation6] sm:$0xf]
        %v1842 = vld [vmem:[#allocation6 + $0x4] sm:$0xf]
        %v1843 = vld [vmem:[#allocation6 + $0x8] sm:$0xf]
        %v1844 = vld [vmem:[#allocation6 + $0xc] sm:$0xf]
        %v1845 = vld [vmem:[#allocation6 + $0x10] sm:$0xf]
        %v1846 = vld [vmem:[#allocation6 + $0x14] sm:$0xf]
        %v1847 = vld [vmem:[#allocation6 + $0x18] sm:$0xf]
        %v1848 = vld [vmem:[#allocation6 + $0x1c] sm:$0xf]
        %v1849 = vld [vmem:[#allocation6 + $0x20] sm:$0xf]
        %v1850 = vld [vmem:[#allocation6 + $0x24] sm:$0xf]
        %v1851 = vld [vmem:[#allocation6 + $0x28] sm:$0xf]
        %v1852 = vld [vmem:[#allocation6 + $0x2c] sm:$0xf]
        %v1853 = vld [vmem:[#allocation6 + $0x30] sm:$0xf]
        %v1854 = vld [vmem:[#allocation6 + $0x34] sm:$0xf]
        %v1855 = vld [vmem:[#allocation6 + $0x38] sm:$0xf]
        %v1856 = vld [vmem:[#allocation6 + $0x3c] sm:$0xf]
        %v1857 = vld [vmem:[%s1816 + $0x1] sm:$0xff]
        %v1858 = vld [vmem:[%s1816 + $0x9] sm:$0xff]
        %v1859 = vld [vmem:[%s1816 + $0x19] sm:$0xff]
        %v1860 = vld [vmem:[%s1816 + $0x21] sm:$0xff]
        %v1861 = vld [vmem:[%s1816 + $0x31] sm:$0xff]
        %v1862 = vld [vmem:[%s1816 + $0x39] sm:$0xff]
        %v1863 = vld [vmem:[%s1816 + $0x49] sm:$0xff]
        %v1864 = vld [vmem:[%s1816 + $0x51] sm:$0xff]
        %v1865 = vld [vmem:[%s1816 + $0x61] sm:$0xff]
        %v1866 = vld [vmem:[%s1816 + $0x69] sm:$0xff]
        %v1867 = vld [vmem:[%s1816 + $0x79] sm:$0xff]
        %v1868 = vld [vmem:[%s1816 + $0x81] sm:$0xff]
        %v1869 = vld [vmem:[%s1816 + $0x91] sm:$0xff]
        %v1870 = vld [vmem:[%s1816 + $0x99] sm:$0xff]
        %v1871 = vld [vmem:[%s1816 + $0xa9] sm:$0xff]
        %v1872 = vld [vmem:[%s1816 + $0xb1] sm:$0xff]
        %v1873 = vpack.c.bf16 %v1858, %v1857
        %v1874 = vpack.c.bf16 %v1860, %v1859
        %v1875 = vpack.c.bf16 %v1862, %v1861
        %v1876 = vpack.c.bf16 %v1864, %v1863
        %v1877 = vpack.c.bf16 %v1866, %v1865
        %v1878 = vpack.c.bf16 %v1868, %v1867
        %v1879 = vpack.c.bf16 %v1870, %v1869
        %v1880 = vpack.c.bf16 %v1872, %v1871
        %v1881 = vld [vmem:[%s434] sm:$0xf]
        %v1882 = vld [vmem:[%s434 + $0x4] sm:$0xf]
        %v1883 = vld [vmem:[%s434 + $0x8] sm:$0xf]
        %v1884 = vld [vmem:[%s434 + $0xc] sm:$0xf]
        %v1885 = vld [vmem:[%s434 + $0x10] sm:$0xf]
        %v1886 = vld [vmem:[%s434 + $0x14] sm:$0xf]
        %v1887 = vld [vmem:[%s434 + $0x18] sm:$0xf]
        %v1888 = vld [vmem:[%s434 + $0x1c] sm:$0xf]
        %v1889 = vld [vmem:[%s434 + $0x20] sm:$0xf]
        %v1890 = vld [vmem:[%s434 + $0x24] sm:$0xf]
        %v1891 = vld [vmem:[%s434 + $0x28] sm:$0xf]
        %v1892 = vld [vmem:[%s434 + $0x2c] sm:$0xf]
        %v1893 = vld [vmem:[%s434 + $0x30] sm:$0xf]
        %v1894 = vld [vmem:[%s434 + $0x34] sm:$0xf]
        %v1895 = vld [vmem:[%s434 + $0x38] sm:$0xf]
        %v1896 = vld [vmem:[%s434 + $0x3c] sm:$0xf]
        %v1913 = vunpack.c.l.b16 %v1881
        %v1914 = vunpack.c.l.b16 %v1882
        %v1915 = vunpack.c.l.b16 %v1883
        %v1916 = vunpack.c.l.b16 %v1884
        %v1917 = vunpack.c.l.b16 %v1885
        %v1918 = vunpack.c.l.b16 %v1886
        %v1919 = vunpack.c.l.b16 %v1887
        %v1920 = vunpack.c.l.b16 %v1888
        %v1921 = vunpack.c.l.b16 %v1889
        %v1922 = vunpack.c.l.b16 %v1890
        %v1923 = vunpack.c.l.b16 %v1891
        %v1924 = vunpack.c.l.b16 %v1892
        %v1925 = vunpack.c.l.b16 %v1893
        %v1926 = vunpack.c.l.b16 %v1894
        %v1927 = vunpack.c.l.b16 %v1895
        %v1928 = vunpack.c.l.b16 %v1896
        %v1929 = vpack.c.b16 %v1914, %v1913
        %v1930 = vpack.c.b16 %v1916, %v1915
        %v1931 = vpack.c.b16 %v1918, %v1917
        %v1932 = vpack.c.b16 %v1920, %v1919
        %v1933 = vpack.c.b16 %v1922, %v1921
        %v1934 = vpack.c.b16 %v1924, %v1923
        %v1935 = vpack.c.b16 %v1926, %v1925
        %v1936 = vpack.c.b16 %v1928, %v1927
        %1945 = vmatpush.bf16.msra.mxu0 %v1936
        %1946 = vmatpush.bf16.msra.mxu0 %v1935
        %1947 = vmatpush.bf16.msra.mxu0 %v1934
        %1948 = vmatpush.bf16.msra.mxu0 %v1933
        %1949 = vmatpush.bf16.msra.mxu0 %v1932
        %1950 = vmatpush.bf16.msra.mxu0 %v1931
        %1951 = vmatpush.bf16.msra.mxu0 %v1930
        %1952 = vmatpush.bf16.msra.mxu0 %v1929
        %1953 = vmatmul.bf16.gmra.mxu0 %v1873
        %v1954 = vpop.f32.mrf.mxu0
        %v1955 = vadd.f32 0.0, %v1954
        %v1956 = vpop.f32.mrf.mxu0
        %v1957 = vadd.f32 0.0, %v1956
        %1958 = vmatmul.bf16.gmra.mxu0 %v1874
        %v1959 = vpop.f32.mrf.mxu0
        %v1960 = vadd.f32 0.0, %v1959
        %v1961 = vpop.f32.mrf.mxu0
        %v1962 = vadd.f32 0.0, %v1961
        %1963 = vmatmul.bf16.gmra.mxu0 %v1875
        %v1964 = vpop.f32.mrf.mxu0
        %v1965 = vadd.f32 0.0, %v1964
        %v1966 = vpop.f32.mrf.mxu0
        %v1967 = vadd.f32 0.0, %v1966
        %1968 = vmatmul.bf16.gmra.mxu0 %v1876
        %v1969 = vpop.f32.mrf.mxu0
        %v1970 = vadd.f32 0.0, %v1969
        %v1971 = vpop.f32.mrf.mxu0
        %v1972 = vadd.f32 0.0, %v1971
        %1973 = vmatmul.bf16.gmra.mxu0 %v1877
        %v1974 = vpop.f32.mrf.mxu0
        %v1975 = vadd.f32 0.0, %v1974
        %v1976 = vpop.f32.mrf.mxu0
        %v1977 = vadd.f32 0.0, %v1976
        %1978 = vmatmul.bf16.gmra.mxu0 %v1878
        %v1979 = vpop.f32.mrf.mxu0
        %v1980 = vadd.f32 0.0, %v1979
        %v1981 = vpop.f32.mrf.mxu0
        %v1982 = vadd.f32 0.0, %v1981
        %1983 = vmatmul.bf16.gmra.mxu0 %v1879
        %v1984 = vpop.f32.mrf.mxu0
        %v1985 = vadd.f32 0.0, %v1984
        %v1986 = vpop.f32.mrf.mxu0
        %v1987 = vadd.f32 0.0, %v1986
        %1988 = vmatmul.bf16.gmra.mxu0 %v1880
        %v1989 = vpop.f32.mrf.mxu0
        %v1990 = vadd.f32 0.0, %v1989
        %v1991 = vpop.f32.mrf.mxu0
        %v1992 = vadd.f32 0.0, %v1991
        %1993 = vdwg.mxu0
        %v2010 = vunpack.c.l.b16 %v1841
        %v2011 = vunpack.c.l.b16 %v1842
        %v2012 = vunpack.c.l.b16 %v1843
        %v2013 = vunpack.c.l.b16 %v1844
        %v2014 = vunpack.c.l.b16 %v1845
        %v2015 = vunpack.c.l.b16 %v1846
        %v2016 = vunpack.c.l.b16 %v1847
        %v2017 = vunpack.c.l.b16 %v1848
        %v2018 = vunpack.c.l.b16 %v1849
        %v2019 = vunpack.c.l.b16 %v1850
        %v2020 = vunpack.c.l.b16 %v1851
        %v2021 = vunpack.c.l.b16 %v1852
        %v2022 = vunpack.c.l.b16 %v1853
        %v2023 = vunpack.c.l.b16 %v1854
        %v2024 = vunpack.c.l.b16 %v1855
        %v2025 = vunpack.c.l.b16 %v1856
        %v2026 = vpack.c.b16 %v2011, %v2010
        %v2027 = vpack.c.b16 %v2013, %v2012
        %v2028 = vpack.c.b16 %v2015, %v2014
        %v2029 = vpack.c.b16 %v2017, %v2016
        %v2030 = vpack.c.b16 %v2019, %v2018
        %v2031 = vpack.c.b16 %v2021, %v2020
        %v2032 = vpack.c.b16 %v2023, %v2022
        %v2033 = vpack.c.b16 %v2025, %v2024
        %2042 = vmatpush.bf16.msra.mxu0 %v2033
        %2043 = vmatpush.bf16.msra.mxu0 %v2032
        %2044 = vmatpush.bf16.msra.mxu0 %v2031
        %2045 = vmatpush.bf16.msra.mxu0 %v2030
        %2046 = vmatpush.bf16.msra.mxu0 %v2029
        %2047 = vmatpush.bf16.msra.mxu0 %v2028
        %2048 = vmatpush.bf16.msra.mxu0 %v2027
        %2049 = vmatpush.bf16.msra.mxu0 %v2026
        %2050 = vmatmul.bf16.gmra.mxu0 %v1833
        %v2051 = vpop.f32.mrf.mxu0
        %v2052 = vadd.f32 %v1955, %v2051
        %v2053 = vpop.f32.mrf.mxu0
        %v2054 = vadd.f32 %v1957, %v2053
        %2055 = vmatmul.bf16.gmra.mxu0 %v1834
        %v2056 = vpop.f32.mrf.mxu0
        %v2057 = vadd.f32 %v1960, %v2056
        %v2058 = vpop.f32.mrf.mxu0
        %v2059 = vadd.f32 %v1962, %v2058
        %2060 = vmatmul.bf16.gmra.mxu0 %v1835
        %v2061 = vpop.f32.mrf.mxu0
        %v2062 = vadd.f32 %v1965, %v2061
        %v2063 = vpop.f32.mrf.mxu0
        %v2064 = vadd.f32 %v1967, %v2063
        %2065 = vmatmul.bf16.gmra.mxu0 %v1836
        %v2066 = vpop.f32.mrf.mxu0
        %v2067 = vadd.f32 %v1970, %v2066
        %v2068 = vpop.f32.mrf.mxu0
        %v2069 = vadd.f32 %v1972, %v2068
        %2070 = vmatmul.bf16.gmra.mxu0 %v1837
        %v2071 = vpop.f32.mrf.mxu0
        %v2072 = vadd.f32 %v1975, %v2071
        %v2073 = vpop.f32.mrf.mxu0
        %v2074 = vadd.f32 %v1977, %v2073
        %2075 = vmatmul.bf16.gmra.mxu0 %v1838
        %v2076 = vpop.f32.mrf.mxu0
        %v2077 = vadd.f32 %v1980, %v2076
        %v2078 = vpop.f32.mrf.mxu0
        %v2079 = vadd.f32 %v1982, %v2078
        %2080 = vmatmul.bf16.gmra.mxu0 %v1839
        %v2081 = vpop.f32.mrf.mxu0
        %v2082 = vadd.f32 %v1985, %v2081
        %v2083 = vpop.f32.mrf.mxu0
        %v2084 = vadd.f32 %v1987, %v2083
        %2085 = vmatmul.bf16.gmra.mxu0 %v1840
        %v2086 = vpop.f32.mrf.mxu0
        %v2087 = vadd.f32 %v1990, %v2086
        %v2088 = vpop.f32.mrf.mxu0
        %v2089 = vadd.f32 %v1992, %v2088
        %2090 = vdwg.mxu0
        %v2091 = vld [vmem:[%s1816 + $0x2] sm:$0xff]
        %v2092 = vld [vmem:[%s1816 + $0xa] sm:$0xff]
        %v2093 = vld [vmem:[%s1816 + $0x1a] sm:$0xff]
        %v2094 = vld [vmem:[%s1816 + $0x22] sm:$0xff]
        %v2095 = vld [vmem:[%s1816 + $0x32] sm:$0xff]
        %v2096 = vld [vmem:[%s1816 + $0x3a] sm:$0xff]
        %v2097 = vld [vmem:[%s1816 + $0x4a] sm:$0xff]
        %v2098 = vld [vmem:[%s1816 + $0x52] sm:$0xff]
        %v2099 = vld [vmem:[%s1816 + $0x62] sm:$0xff]
        %v2100 = vld [vmem:[%s1816 + $0x6a] sm:$0xff]
        %v2101 = vld [vmem:[%s1816 + $0x7a] sm:$0xff]
        %v2102 = vld [vmem:[%s1816 + $0x82] sm:$0xff]
        %v2103 = vld [vmem:[%s1816 + $0x92] sm:$0xff]
        %v2104 = vld [vmem:[%s1816 + $0x9a] sm:$0xff]
        %v2105 = vld [vmem:[%s1816 + $0xaa] sm:$0xff]
        %v2106 = vld [vmem:[%s1816 + $0xb2] sm:$0xff]
        %v2107 = vpack.c.bf16 %v2092, %v2091
        %v2108 = vpack.c.bf16 %v2094, %v2093
        %v2109 = vpack.c.bf16 %v2096, %v2095
        %v2110 = vpack.c.bf16 %v2098, %v2097
        %v2111 = vpack.c.bf16 %v2100, %v2099
        %v2112 = vpack.c.bf16 %v2102, %v2101
        %v2113 = vpack.c.bf16 %v2104, %v2103
        %v2114 = vpack.c.bf16 %v2106, %v2105
        %v2115 = vld [vmem:[%s669] sm:$0xf]
        %v2116 = vld [vmem:[%s669 + $0x4] sm:$0xf]
        %v2117 = vld [vmem:[%s669 + $0x8] sm:$0xf]
        %v2118 = vld [vmem:[%s669 + $0xc] sm:$0xf]
        %v2119 = vld [vmem:[%s669 + $0x10] sm:$0xf]
        %v2120 = vld [vmem:[%s669 + $0x14] sm:$0xf]
        %v2121 = vld [vmem:[%s669 + $0x18] sm:$0xf]
        %v2122 = vld [vmem:[%s669 + $0x1c] sm:$0xf]
        %v2123 = vld [vmem:[%s669 + $0x20] sm:$0xf]
        %v2124 = vld [vmem:[%s669 + $0x24] sm:$0xf]
        %v2125 = vld [vmem:[%s669 + $0x28] sm:$0xf]
        %v2126 = vld [vmem:[%s669 + $0x2c] sm:$0xf]
        %v2127 = vld [vmem:[%s669 + $0x30] sm:$0xf]
        %v2128 = vld [vmem:[%s669 + $0x34] sm:$0xf]
        %v2129 = vld [vmem:[%s669 + $0x38] sm:$0xf]
        %v2130 = vld [vmem:[%s669 + $0x3c] sm:$0xf]
        %v2147 = vunpack.c.l.b16 %v2115
        %v2148 = vunpack.c.l.b16 %v2116
        %v2149 = vunpack.c.l.b16 %v2117
        %v2150 = vunpack.c.l.b16 %v2118
        %v2151 = vunpack.c.l.b16 %v2119
        %v2152 = vunpack.c.l.b16 %v2120
        %v2153 = vunpack.c.l.b16 %v2121
        %v2154 = vunpack.c.l.b16 %v2122
        %v2155 = vunpack.c.l.b16 %v2123
        %v2156 = vunpack.c.l.b16 %v2124
        %v2157 = vunpack.c.l.b16 %v2125
        %v2158 = vunpack.c.l.b16 %v2126
        %v2159 = vunpack.c.l.b16 %v2127
        %v2160 = vunpack.c.l.b16 %v2128
        %v2161 = vunpack.c.l.b16 %v2129
        %v2162 = vunpack.c.l.b16 %v2130
        %v2163 = vpack.c.b16 %v2148, %v2147
        %v2164 = vpack.c.b16 %v2150, %v2149
        %v2165 = vpack.c.b16 %v2152, %v2151
        %v2166 = vpack.c.b16 %v2154, %v2153
        %v2167 = vpack.c.b16 %v2156, %v2155
        %v2168 = vpack.c.b16 %v2158, %v2157
        %v2169 = vpack.c.b16 %v2160, %v2159
        %v2170 = vpack.c.b16 %v2162, %v2161
        %2179 = vmatpush.bf16.msra.mxu0 %v2170
        %2180 = vmatpush.bf16.msra.mxu0 %v2169
        %2181 = vmatpush.bf16.msra.mxu0 %v2168
        %2182 = vmatpush.bf16.msra.mxu0 %v2167
        %2183 = vmatpush.bf16.msra.mxu0 %v2166
        %2184 = vmatpush.bf16.msra.mxu0 %v2165
        %2185 = vmatpush.bf16.msra.mxu0 %v2164
        %2186 = vmatpush.bf16.msra.mxu0 %v2163
        %2187 = vmatmul.bf16.gmra.mxu0 %v2107
        %v2188 = vpop.f32.mrf.mxu0
        %v2189 = vadd.f32 0.0, %v2188
        %v2190 = vpop.f32.mrf.mxu0
        %v2191 = vadd.f32 0.0, %v2190
        %2192 = vmatmul.bf16.gmra.mxu0 %v2108
        %v2193 = vpop.f32.mrf.mxu0
        %v2194 = vadd.f32 0.0, %v2193
        %v2195 = vpop.f32.mrf.mxu0
        %v2196 = vadd.f32 0.0, %v2195
        %2197 = vmatmul.bf16.gmra.mxu0 %v2109
        %v2198 = vpop.f32.mrf.mxu0
        %v2199 = vadd.f32 0.0, %v2198
        %v2200 = vpop.f32.mrf.mxu0
        %v2201 = vadd.f32 0.0, %v2200
        %2202 = vmatmul.bf16.gmra.mxu0 %v2110
        %v2203 = vpop.f32.mrf.mxu0
        %v2204 = vadd.f32 0.0, %v2203
        %v2205 = vpop.f32.mrf.mxu0
        %v2206 = vadd.f32 0.0, %v2205
        %2207 = vmatmul.bf16.gmra.mxu0 %v2111
        %v2208 = vpop.f32.mrf.mxu0
        %v2209 = vadd.f32 0.0, %v2208
        %v2210 = vpop.f32.mrf.mxu0
        %v2211 = vadd.f32 0.0, %v2210
        %2212 = vmatmul.bf16.gmra.mxu0 %v2112
        %v2213 = vpop.f32.mrf.mxu0
        %v2214 = vadd.f32 0.0, %v2213
        %v2215 = vpop.f32.mrf.mxu0
        %v2216 = vadd.f32 0.0, %v2215
        %2217 = vmatmul.bf16.gmra.mxu0 %v2113
        %v2218 = vpop.f32.mrf.mxu0
        %v2219 = vadd.f32 0.0, %v2218
        %v2220 = vpop.f32.mrf.mxu0
        %v2221 = vadd.f32 0.0, %v2220
        %2222 = vmatmul.bf16.gmra.mxu0 %v2114
        %v2223 = vpop.f32.mrf.mxu0
        %v2224 = vadd.f32 0.0, %v2223
        %v2225 = vpop.f32.mrf.mxu0
        %v2226 = vadd.f32 0.0, %v2225
        %2227 = vdwg.mxu0
        %v2228 = vadd.f32 %v2052, %v2189
        %v2229 = vadd.f32 %v2054, %v2191
        %v2230 = vadd.f32 %v2057, %v2194
        %v2231 = vadd.f32 %v2059, %v2196
        %v2232 = vadd.f32 %v2062, %v2199
        %v2233 = vadd.f32 %v2064, %v2201
        %v2234 = vadd.f32 %v2067, %v2204
        %v2235 = vadd.f32 %v2069, %v2206
        %v2236 = vadd.f32 %v2072, %v2209
        %v2237 = vadd.f32 %v2074, %v2211
        %v2238 = vadd.f32 %v2077, %v2214
        %v2239 = vadd.f32 %v2079, %v2216
        %v2240 = vadd.f32 %v2082, %v2219
        %v2241 = vadd.f32 %v2084, %v2221
        %v2242 = vadd.f32 %v2087, %v2224
        %v2243 = vadd.f32 %v2089, %v2226
        %s2244 = scalar_lea.vmem [#allocation2], 216
        %v2245 = vld [vmem:[%s2244] sm:$0xff]
        %v2246 = vld [vmem:[%s2244 + $0x8] sm:$0xff]
        %v2247 = vld [vmem:[%s2244 + $0x18] sm:$0xff]
        %v2248 = vld [vmem:[%s2244 + $0x20] sm:$0xff]
        %v2249 = vld [vmem:[%s2244 + $0x30] sm:$0xff]
        %v2250 = vld [vmem:[%s2244 + $0x38] sm:$0xff]
        %v2251 = vld [vmem:[%s2244 + $0x48] sm:$0xff]
        %v2252 = vld [vmem:[%s2244 + $0x50] sm:$0xff]
        %v2253 = vld [vmem:[%s2244 + $0x60] sm:$0xff]
        %v2254 = vld [vmem:[%s2244 + $0x68] sm:$0xff]
        %v2255 = vld [vmem:[%s2244 + $0x78] sm:$0xff]
        %v2256 = vld [vmem:[%s2244 + $0x80] sm:$0xff]
        %v2257 = vld [vmem:[%s2244 + $0x90] sm:$0xff]
        %v2258 = vld [vmem:[%s2244 + $0x98] sm:$0xff]
        %v2259 = vld [vmem:[%s2244 + $0xa8] sm:$0xff]
        %v2260 = vld [vmem:[%s2244 + $0xb0] sm:$0xff]
        %v2261 = vpack.c.bf16 %v2246, %v2245
        %v2262 = vpack.c.bf16 %v2248, %v2247
        %v2263 = vpack.c.bf16 %v2250, %v2249
        %v2264 = vpack.c.bf16 %v2252, %v2251
        %v2265 = vpack.c.bf16 %v2254, %v2253
        %v2266 = vpack.c.bf16 %v2256, %v2255
        %v2267 = vpack.c.bf16 %v2258, %v2257
        %v2268 = vpack.c.bf16 %v2260, %v2259
        %v2269 = vld [vmem:[%s823] sm:$0xf]
        %v2270 = vld [vmem:[%s823 + $0x4] sm:$0xf]
        %v2271 = vld [vmem:[%s823 + $0x8] sm:$0xf]
        %v2272 = vld [vmem:[%s823 + $0xc] sm:$0xf]
        %v2273 = vld [vmem:[%s823 + $0x10] sm:$0xf]
        %v2274 = vld [vmem:[%s823 + $0x14] sm:$0xf]
        %v2275 = vld [vmem:[%s823 + $0x18] sm:$0xf]
        %v2276 = vld [vmem:[%s823 + $0x1c] sm:$0xf]
        %v2277 = vld [vmem:[%s823 + $0x20] sm:$0xf]
        %v2278 = vld [vmem:[%s823 + $0x24] sm:$0xf]
        %v2279 = vld [vmem:[%s823 + $0x28] sm:$0xf]
        %v2280 = vld [vmem:[%s823 + $0x2c] sm:$0xf]
        %v2281 = vld [vmem:[%s823 + $0x30] sm:$0xf]
        %v2282 = vld [vmem:[%s823 + $0x34] sm:$0xf]
        %v2283 = vld [vmem:[%s823 + $0x38] sm:$0xf]
        %v2284 = vld [vmem:[%s823 + $0x3c] sm:$0xf]
        %v2301 = vunpack.c.l.b16 %v2269
        %v2302 = vunpack.c.l.b16 %v2270
        %v2303 = vunpack.c.l.b16 %v2271
        %v2304 = vunpack.c.l.b16 %v2272
        %v2305 = vunpack.c.l.b16 %v2273
        %v2306 = vunpack.c.l.b16 %v2274
        %v2307 = vunpack.c.l.b16 %v2275
        %v2308 = vunpack.c.l.b16 %v2276
        %v2309 = vunpack.c.l.b16 %v2277
        %v2310 = vunpack.c.l.b16 %v2278
        %v2311 = vunpack.c.l.b16 %v2279
        %v2312 = vunpack.c.l.b16 %v2280
        %v2313 = vunpack.c.l.b16 %v2281
        %v2314 = vunpack.c.l.b16 %v2282
        %v2315 = vunpack.c.l.b16 %v2283
        %v2316 = vunpack.c.l.b16 %v2284
        %v2317 = vpack.c.b16 %v2302, %v2301
        %v2318 = vpack.c.b16 %v2304, %v2303
        %v2319 = vpack.c.b16 %v2306, %v2305
        %v2320 = vpack.c.b16 %v2308, %v2307
        %v2321 = vpack.c.b16 %v2310, %v2309
        %v2322 = vpack.c.b16 %v2312, %v2311
        %v2323 = vpack.c.b16 %v2314, %v2313
        %v2324 = vpack.c.b16 %v2316, %v2315
        %2333 = vmatpush.bf16.msra.mxu0 %v2324
        %2334 = vmatpush.bf16.msra.mxu0 %v2323
        %2335 = vmatpush.bf16.msra.mxu0 %v2322
        %2336 = vmatpush.bf16.msra.mxu0 %v2321
        %2337 = vmatpush.bf16.msra.mxu0 %v2320
        %2338 = vmatpush.bf16.msra.mxu0 %v2319
        %2339 = vmatpush.bf16.msra.mxu0 %v2318
        %2340 = vmatpush.bf16.msra.mxu0 %v2317
        %2341 = vmatmul.bf16.gmra.mxu0 %v2261
        %v2342 = vpop.f32.mrf.mxu0
        %v2343 = vadd.f32 0.0, %v2342
        %v2344 = vpop.f32.mrf.mxu0
        %v2345 = vadd.f32 0.0, %v2344
        %2346 = vmatmul.bf16.gmra.mxu0 %v2262
        %v2347 = vpop.f32.mrf.mxu0
        %v2348 = vadd.f32 0.0, %v2347
        %v2349 = vpop.f32.mrf.mxu0
        %v2350 = vadd.f32 0.0, %v2349
        %2351 = vmatmul.bf16.gmra.mxu0 %v2263
        %v2352 = vpop.f32.mrf.mxu0
        %v2353 = vadd.f32 0.0, %v2352
        %v2354 = vpop.f32.mrf.mxu0
        %v2355 = vadd.f32 0.0, %v2354
        %2356 = vmatmul.bf16.gmra.mxu0 %v2264
        %v2357 = vpop.f32.mrf.mxu0
        %v2358 = vadd.f32 0.0, %v2357
        %v2359 = vpop.f32.mrf.mxu0
        %v2360 = vadd.f32 0.0, %v2359
        %2361 = vmatmul.bf16.gmra.mxu0 %v2265
        %v2362 = vpop.f32.mrf.mxu0
        %v2363 = vadd.f32 0.0, %v2362
        %v2364 = vpop.f32.mrf.mxu0
        %v2365 = vadd.f32 0.0, %v2364
        %2366 = vmatmul.bf16.gmra.mxu0 %v2266
        %v2367 = vpop.f32.mrf.mxu0
        %v2368 = vadd.f32 0.0, %v2367
        %v2369 = vpop.f32.mrf.mxu0
        %v2370 = vadd.f32 0.0, %v2369
        %2371 = vmatmul.bf16.gmra.mxu0 %v2267
        %v2372 = vpop.f32.mrf.mxu0
        %v2373 = vadd.f32 0.0, %v2372
        %v2374 = vpop.f32.mrf.mxu0
        %v2375 = vadd.f32 0.0, %v2374
        %2376 = vmatmul.bf16.gmra.mxu0 %v2268
        %v2377 = vpop.f32.mrf.mxu0
        %v2378 = vadd.f32 0.0, %v2377
        %v2379 = vpop.f32.mrf.mxu0
        %v2380 = vadd.f32 0.0, %v2379
        %2381 = vdwg.mxu0
        %v2382 = vadd.f32 %v2228, %v2343
        %v2383 = vadd.f32 %v2229, %v2345
        %v2384 = vadd.f32 %v2230, %v2348
        %v2385 = vadd.f32 %v2231, %v2350
        %v2386 = vadd.f32 %v2232, %v2353
        %v2387 = vadd.f32 %v2233, %v2355
        %v2388 = vadd.f32 %v2234, %v2358
        %v2389 = vadd.f32 %v2235, %v2360
        %v2390 = vadd.f32 %v2236, %v2363
        %v2391 = vadd.f32 %v2237, %v2365
        %v2392 = vadd.f32 %v2238, %v2368
        %v2393 = vadd.f32 %v2239, %v2370
        %v2394 = vadd.f32 %v2240, %v2373
        %v2395 = vadd.f32 %v2241, %v2375
        %v2396 = vadd.f32 %v2242, %v2378
        %v2397 = vadd.f32 %v2243, %v2380
        %v2398 = vld [vmem:[%s2244 + $0x1] sm:$0xff]
        %v2399 = vld [vmem:[%s2244 + $0x9] sm:$0xff]
        %v2400 = vld [vmem:[%s2244 + $0x19] sm:$0xff]
        %v2401 = vld [vmem:[%s2244 + $0x21] sm:$0xff]
        %v2402 = vld [vmem:[%s2244 + $0x31] sm:$0xff]
        %v2403 = vld [vmem:[%s2244 + $0x39] sm:$0xff]
        %v2404 = vld [vmem:[%s2244 + $0x49] sm:$0xff]
        %v2405 = vld [vmem:[%s2244 + $0x51] sm:$0xff]
        %v2406 = vld [vmem:[%s2244 + $0x61] sm:$0xff]
        %v2407 = vld [vmem:[%s2244 + $0x69] sm:$0xff]
        %v2408 = vld [vmem:[%s2244 + $0x79] sm:$0xff]
        %v2409 = vld [vmem:[%s2244 + $0x81] sm:$0xff]
        %v2410 = vld [vmem:[%s2244 + $0x91] sm:$0xff]
        %v2411 = vld [vmem:[%s2244 + $0x99] sm:$0xff]
        %v2412 = vld [vmem:[%s2244 + $0xa9] sm:$0xff]
        %v2413 = vld [vmem:[%s2244 + $0xb1] sm:$0xff]
        %v2414 = vpack.c.bf16 %v2399, %v2398
        %v2415 = vpack.c.bf16 %v2401, %v2400
        %v2416 = vpack.c.bf16 %v2403, %v2402
        %v2417 = vpack.c.bf16 %v2405, %v2404
        %v2418 = vpack.c.bf16 %v2407, %v2406
        %v2419 = vpack.c.bf16 %v2409, %v2408
        %v2420 = vpack.c.bf16 %v2411, %v2410
        %v2421 = vpack.c.bf16 %v2413, %v2412
        %v2422 = vld [vmem:[%s977] sm:$0xf]
        %v2423 = vld [vmem:[%s977 + $0x4] sm:$0xf]
        %v2424 = vld [vmem:[%s977 + $0x8] sm:$0xf]
        %v2425 = vld [vmem:[%s977 + $0xc] sm:$0xf]
        %v2426 = vld [vmem:[%s977 + $0x10] sm:$0xf]
        %v2427 = vld [vmem:[%s977 + $0x14] sm:$0xf]
        %v2428 = vld [vmem:[%s977 + $0x18] sm:$0xf]
        %v2429 = vld [vmem:[%s977 + $0x1c] sm:$0xf]
        %v2430 = vld [vmem:[%s977 + $0x20] sm:$0xf]
        %v2431 = vld [vmem:[%s977 + $0x24] sm:$0xf]
        %v2432 = vld [vmem:[%s977 + $0x28] sm:$0xf]
        %v2433 = vld [vmem:[%s977 + $0x2c] sm:$0xf]
        %v2434 = vld [vmem:[%s977 + $0x30] sm:$0xf]
        %v2435 = vld [vmem:[%s977 + $0x34] sm:$0xf]
        %v2436 = vld [vmem:[%s977 + $0x38] sm:$0xf]
        %v2437 = vld [vmem:[%s977 + $0x3c] sm:$0xf]
        %v2454 = vunpack.c.l.b16 %v2422
        %v2455 = vunpack.c.l.b16 %v2423
        %v2456 = vunpack.c.l.b16 %v2424
        %v2457 = vunpack.c.l.b16 %v2425
        %v2458 = vunpack.c.l.b16 %v2426
        %v2459 = vunpack.c.l.b16 %v2427
        %v2460 = vunpack.c.l.b16 %v2428
        %v2461 = vunpack.c.l.b16 %v2429
        %v2462 = vunpack.c.l.b16 %v2430
        %v2463 = vunpack.c.l.b16 %v2431
        %v2464 = vunpack.c.l.b16 %v2432
        %v2465 = vunpack.c.l.b16 %v2433
        %v2466 = vunpack.c.l.b16 %v2434
        %v2467 = vunpack.c.l.b16 %v2435
        %v2468 = vunpack.c.l.b16 %v2436
        %v2469 = vunpack.c.l.b16 %v2437
        %v2470 = vpack.c.b16 %v2455, %v2454
        %v2471 = vpack.c.b16 %v2457, %v2456
        %v2472 = vpack.c.b16 %v2459, %v2458
        %v2473 = vpack.c.b16 %v2461, %v2460
        %v2474 = vpack.c.b16 %v2463, %v2462
        %v2475 = vpack.c.b16 %v2465, %v2464
        %v2476 = vpack.c.b16 %v2467, %v2466
        %v2477 = vpack.c.b16 %v2469, %v2468
        %2486 = vmatpush.bf16.msra.mxu0 %v2477
        %2487 = vmatpush.bf16.msra.mxu0 %v2476
        %2488 = vmatpush.bf16.msra.mxu0 %v2475
        %2489 = vmatpush.bf16.msra.mxu0 %v2474
        %2490 = vmatpush.bf16.msra.mxu0 %v2473
        %2491 = vmatpush.bf16.msra.mxu0 %v2472
        %2492 = vmatpush.bf16.msra.mxu0 %v2471
        %2493 = vmatpush.bf16.msra.mxu0 %v2470
        %2494 = vmatmul.bf16.gmra.mxu0 %v2414
        %v2495 = vpop.f32.mrf.mxu0
        %v2496 = vadd.f32 0.0, %v2495
        %v2497 = vpop.f32.mrf.mxu0
        %v2498 = vadd.f32 0.0, %v2497
        %2499 = vmatmul.bf16.gmra.mxu0 %v2415
        %v2500 = vpop.f32.mrf.mxu0
        %v2501 = vadd.f32 0.0, %v2500
        %v2502 = vpop.f32.mrf.mxu0
        %v2503 = vadd.f32 0.0, %v2502
        %2504 = vmatmul.bf16.gmra.mxu0 %v2416
        %v2505 = vpop.f32.mrf.mxu0
        %v2506 = vadd.f32 0.0, %v2505
        %v2507 = vpop.f32.mrf.mxu0
        %v2508 = vadd.f32 0.0, %v2507
        %2509 = vmatmul.bf16.gmra.mxu0 %v2417
        %v2510 = vpop.f32.mrf.mxu0
        %v2511 = vadd.f32 0.0, %v2510
        %v2512 = vpop.f32.mrf.mxu0
        %v2513 = vadd.f32 0.0, %v2512
        %2514 = vmatmul.bf16.gmra.mxu0 %v2418
        %v2515 = vpop.f32.mrf.mxu0
        %v2516 = vadd.f32 0.0, %v2515
        %v2517 = vpop.f32.mrf.mxu0
        %v2518 = vadd.f32 0.0, %v2517
        %2519 = vmatmul.bf16.gmra.mxu0 %v2419
        %v2520 = vpop.f32.mrf.mxu0
        %v2521 = vadd.f32 0.0, %v2520
        %v2522 = vpop.f32.mrf.mxu0
        %v2523 = vadd.f32 0.0, %v2522
        %2524 = vmatmul.bf16.gmra.mxu0 %v2420
        %v2525 = vpop.f32.mrf.mxu0
        %v2526 = vadd.f32 0.0, %v2525
        %v2527 = vpop.f32.mrf.mxu0
        %v2528 = vadd.f32 0.0, %v2527
        %2529 = vmatmul.bf16.gmra.mxu0 %v2421
        %v2530 = vpop.f32.mrf.mxu0
        %v2531 = vadd.f32 0.0, %v2530
        %v2532 = vpop.f32.mrf.mxu0
        %v2533 = vadd.f32 0.0, %v2532
        %2534 = vdwg.mxu0
        %v2535 = vadd.f32 %v2382, %v2496
        %v2536 = vadd.f32 %v2383, %v2498
        %v2537 = vadd.f32 %v2384, %v2501
        %v2538 = vadd.f32 %v2385, %v2503
        %v2539 = vadd.f32 %v2386, %v2506
        %v2540 = vadd.f32 %v2387, %v2508
        %v2541 = vadd.f32 %v2388, %v2511
        %v2542 = vadd.f32 %v2389, %v2513
        %v2543 = vadd.f32 %v2390, %v2516
        %v2544 = vadd.f32 %v2391, %v2518
        %v2545 = vadd.f32 %v2392, %v2521
        %v2546 = vadd.f32 %v2393, %v2523
        %v2547 = vadd.f32 %v2394, %v2526
        %v2548 = vadd.f32 %v2395, %v2528
        %v2549 = vadd.f32 %v2396, %v2531
        %v2550 = vadd.f32 %v2397, %v2533
        %v2551 = vld [vmem:[%s2244 + $0x2] sm:$0xff]
        %v2552 = vld [vmem:[%s2244 + $0xa] sm:$0xff]
        %v2553 = vld [vmem:[%s2244 + $0x1a] sm:$0xff]
        %v2554 = vld [vmem:[%s2244 + $0x22] sm:$0xff]
        %v2555 = vld [vmem:[%s2244 + $0x32] sm:$0xff]
        %v2556 = vld [vmem:[%s2244 + $0x3a] sm:$0xff]
        %v2557 = vld [vmem:[%s2244 + $0x4a] sm:$0xff]
        %v2558 = vld [vmem:[%s2244 + $0x52] sm:$0xff]
        %v2559 = vld [vmem:[%s2244 + $0x62] sm:$0xff]
        %v2560 = vld [vmem:[%s2244 + $0x6a] sm:$0xff]
        %v2561 = vld [vmem:[%s2244 + $0x7a] sm:$0xff]
        %v2562 = vld [vmem:[%s2244 + $0x82] sm:$0xff]
        %v2563 = vld [vmem:[%s2244 + $0x92] sm:$0xff]
        %v2564 = vld [vmem:[%s2244 + $0x9a] sm:$0xff]
        %v2565 = vld [vmem:[%s2244 + $0xaa] sm:$0xff]
        %v2566 = vld [vmem:[%s2244 + $0xb2] sm:$0xff]
        %v2567 = vpack.c.bf16 %v2552, %v2551
        %v2568 = vpack.c.bf16 %v2554, %v2553
        %v2569 = vpack.c.bf16 %v2556, %v2555
        %v2570 = vpack.c.bf16 %v2558, %v2557
        %v2571 = vpack.c.bf16 %v2560, %v2559
        %v2572 = vpack.c.bf16 %v2562, %v2561
        %v2573 = vpack.c.bf16 %v2564, %v2563
        %v2574 = vpack.c.bf16 %v2566, %v2565
        %v2575 = vld [vmem:[%s1131] sm:$0xf]
        %v2576 = vld [vmem:[%s1131 + $0x4] sm:$0xf]
        %v2577 = vld [vmem:[%s1131 + $0x8] sm:$0xf]
        %v2578 = vld [vmem:[%s1131 + $0xc] sm:$0xf]
        %v2579 = vld [vmem:[%s1131 + $0x10] sm:$0xf]
        %v2580 = vld [vmem:[%s1131 + $0x14] sm:$0xf]
        %v2581 = vld [vmem:[%s1131 + $0x18] sm:$0xf]
        %v2582 = vld [vmem:[%s1131 + $0x1c] sm:$0xf]
        %v2583 = vld [vmem:[%s1131 + $0x20] sm:$0xf]
        %v2584 = vld [vmem:[%s1131 + $0x24] sm:$0xf]
        %v2585 = vld [vmem:[%s1131 + $0x28] sm:$0xf]
        %v2586 = vld [vmem:[%s1131 + $0x2c] sm:$0xf]
        %v2587 = vld [vmem:[%s1131 + $0x30] sm:$0xf]
        %v2588 = vld [vmem:[%s1131 + $0x34] sm:$0xf]
        %v2589 = vld [vmem:[%s1131 + $0x38] sm:$0xf]
        %v2590 = vld [vmem:[%s1131 + $0x3c] sm:$0xf]
        %v2607 = vunpack.c.l.b16 %v2575
        %v2608 = vunpack.c.l.b16 %v2576
        %v2609 = vunpack.c.l.b16 %v2577
        %v2610 = vunpack.c.l.b16 %v2578
        %v2611 = vunpack.c.l.b16 %v2579
        %v2612 = vunpack.c.l.b16 %v2580
        %v2613 = vunpack.c.l.b16 %v2581
        %v2614 = vunpack.c.l.b16 %v2582
        %v2615 = vunpack.c.l.b16 %v2583
        %v2616 = vunpack.c.l.b16 %v2584
        %v2617 = vunpack.c.l.b16 %v2585
        %v2618 = vunpack.c.l.b16 %v2586
        %v2619 = vunpack.c.l.b16 %v2587
        %v2620 = vunpack.c.l.b16 %v2588
        %v2621 = vunpack.c.l.b16 %v2589
        %v2622 = vunpack.c.l.b16 %v2590
        %v2623 = vpack.c.b16 %v2608, %v2607
        %v2624 = vpack.c.b16 %v2610, %v2609
        %v2625 = vpack.c.b16 %v2612, %v2611
        %v2626 = vpack.c.b16 %v2614, %v2613
        %v2627 = vpack.c.b16 %v2616, %v2615
        %v2628 = vpack.c.b16 %v2618, %v2617
        %v2629 = vpack.c.b16 %v2620, %v2619
        %v2630 = vpack.c.b16 %v2622, %v2621
        %2639 = vmatpush.bf16.msra.mxu0 %v2630
        %2640 = vmatpush.bf16.msra.mxu0 %v2629
        %2641 = vmatpush.bf16.msra.mxu0 %v2628
        %2642 = vmatpush.bf16.msra.mxu0 %v2627
        %2643 = vmatpush.bf16.msra.mxu0 %v2626
        %2644 = vmatpush.bf16.msra.mxu0 %v2625
        %2645 = vmatpush.bf16.msra.mxu0 %v2624
        %2646 = vmatpush.bf16.msra.mxu0 %v2623
        %2647 = vmatmul.bf16.gmra.mxu0 %v2567
        %v2648 = vpop.f32.mrf.mxu0
        %v2649 = vadd.f32 0.0, %v2648
        %v2650 = vpop.f32.mrf.mxu0
        %v2651 = vadd.f32 0.0, %v2650
        %2652 = vmatmul.bf16.gmra.mxu0 %v2568
        %v2653 = vpop.f32.mrf.mxu0
        %v2654 = vadd.f32 0.0, %v2653
        %v2655 = vpop.f32.mrf.mxu0
        %v2656 = vadd.f32 0.0, %v2655
        %2657 = vmatmul.bf16.gmra.mxu0 %v2569
        %v2658 = vpop.f32.mrf.mxu0
        %v2659 = vadd.f32 0.0, %v2658
        %v2660 = vpop.f32.mrf.mxu0
        %v2661 = vadd.f32 0.0, %v2660
        %2662 = vmatmul.bf16.gmra.mxu0 %v2570
        %v2663 = vpop.f32.mrf.mxu0
        %v2664 = vadd.f32 0.0, %v2663
        %v2665 = vpop.f32.mrf.mxu0
        %v2666 = vadd.f32 0.0, %v2665
        %2667 = vmatmul.bf16.gmra.mxu0 %v2571
        %v2668 = vpop.f32.mrf.mxu0
        %v2669 = vadd.f32 0.0, %v2668
        %v2670 = vpop.f32.mrf.mxu0
        %v2671 = vadd.f32 0.0, %v2670
        %2672 = vmatmul.bf16.gmra.mxu0 %v2572
        %v2673 = vpop.f32.mrf.mxu0
        %v2674 = vadd.f32 0.0, %v2673
        %v2675 = vpop.f32.mrf.mxu0
        %v2676 = vadd.f32 0.0, %v2675
        %2677 = vmatmul.bf16.gmra.mxu0 %v2573
        %v2678 = vpop.f32.mrf.mxu0
        %v2679 = vadd.f32 0.0, %v2678
        %v2680 = vpop.f32.mrf.mxu0
        %v2681 = vadd.f32 0.0, %v2680
        %2682 = vmatmul.bf16.gmra.mxu0 %v2574
        %v2683 = vpop.f32.mrf.mxu0
        %v2684 = vadd.f32 0.0, %v2683
        %v2685 = vpop.f32.mrf.mxu0
        %v2686 = vadd.f32 0.0, %v2685
        %2687 = vdwg.mxu0
        %v2688 = vadd.f32 %v2535, %v2649
        %v2689 = vadd.f32 %v2536, %v2651
        %v2690 = vadd.f32 %v2537, %v2654
        %v2691 = vadd.f32 %v2538, %v2656
        %v2692 = vadd.f32 %v2539, %v2659
        %v2693 = vadd.f32 %v2540, %v2661
        %v2694 = vadd.f32 %v2541, %v2664
        %v2695 = vadd.f32 %v2542, %v2666
        %v2696 = vadd.f32 %v2543, %v2669
        %v2697 = vadd.f32 %v2544, %v2671
        %v2698 = vadd.f32 %v2545, %v2674
        %v2699 = vadd.f32 %v2546, %v2676
        %v2700 = vadd.f32 %v2547, %v2679
        %v2701 = vadd.f32 %v2548, %v2681
        %v2702 = vadd.f32 %v2549, %v2684
        %v2703 = vadd.f32 %v2550, %v2686
        %s2704 = scalar_lea.vmem [#allocation2], 240
        %v2705 = vld [vmem:[%s2704] sm:$0xff]
        %v2706 = vld [vmem:[%s2704 + $0x8] sm:$0xff]
        %v2707 = vld [vmem:[%s2704 + $0x18] sm:$0xff]
        %v2708 = vld [vmem:[%s2704 + $0x20] sm:$0xff]
        %v2709 = vld [vmem:[%s2704 + $0x30] sm:$0xff]
        %v2710 = vld [vmem:[%s2704 + $0x38] sm:$0xff]
        %v2711 = vld [vmem:[%s2704 + $0x48] sm:$0xff]
        %v2712 = vld [vmem:[%s2704 + $0x50] sm:$0xff]
        %v2713 = vld [vmem:[%s2704 + $0x60] sm:$0xff]
        %v2714 = vld [vmem:[%s2704 + $0x68] sm:$0xff]
        %v2715 = vld [vmem:[%s2704 + $0x78] sm:$0xff]
        %v2716 = vld [vmem:[%s2704 + $0x80] sm:$0xff]
        %v2717 = vld [vmem:[%s2704 + $0x90] sm:$0xff]
        %v2718 = vld [vmem:[%s2704 + $0x98] sm:$0xff]
        %v2719 = vld [vmem:[%s2704 + $0xa8] sm:$0xff]
        %v2720 = vld [vmem:[%s2704 + $0xb0] sm:$0xff]
        %v2721 = vpack.c.bf16 %v2706, %v2705
        %v2722 = vpack.c.bf16 %v2708, %v2707
        %v2723 = vpack.c.bf16 %v2710, %v2709
        %v2724 = vpack.c.bf16 %v2712, %v2711
        %v2725 = vpack.c.bf16 %v2714, %v2713
        %v2726 = vpack.c.bf16 %v2716, %v2715
        %v2727 = vpack.c.bf16 %v2718, %v2717
        %v2728 = vpack.c.bf16 %v2720, %v2719
        %v2729 = vld [vmem:[%s1286] sm:$0xf]
        %v2730 = vld [vmem:[%s1286 + $0x4] sm:$0xf]
        %v2731 = vld [vmem:[%s1286 + $0x8] sm:$0xf]
        %v2732 = vld [vmem:[%s1286 + $0xc] sm:$0xf]
        %v2733 = vld [vmem:[%s1286 + $0x10] sm:$0xf]
        %v2734 = vld [vmem:[%s1286 + $0x14] sm:$0xf]
        %v2735 = vld [vmem:[%s1286 + $0x18] sm:$0xf]
        %v2736 = vld [vmem:[%s1286 + $0x1c] sm:$0xf]
        %v2737 = vld [vmem:[%s1286 + $0x20] sm:$0xf]
        %v2738 = vld [vmem:[%s1286 + $0x24] sm:$0xf]
        %v2739 = vld [vmem:[%s1286 + $0x28] sm:$0xf]
        %v2740 = vld [vmem:[%s1286 + $0x2c] sm:$0xf]
        %v2741 = vld [vmem:[%s1286 + $0x30] sm:$0xf]
        %v2742 = vld [vmem:[%s1286 + $0x34] sm:$0xf]
        %v2743 = vld [vmem:[%s1286 + $0x38] sm:$0xf]
        %v2744 = vld [vmem:[%s1286 + $0x3c] sm:$0xf]
        %v2761 = vunpack.c.l.b16 %v2729
        %v2762 = vunpack.c.l.b16 %v2730
        %v2763 = vunpack.c.l.b16 %v2731
        %v2764 = vunpack.c.l.b16 %v2732
        %v2765 = vunpack.c.l.b16 %v2733
        %v2766 = vunpack.c.l.b16 %v2734
        %v2767 = vunpack.c.l.b16 %v2735
        %v2768 = vunpack.c.l.b16 %v2736
        %v2769 = vunpack.c.l.b16 %v2737
        %v2770 = vunpack.c.l.b16 %v2738
        %v2771 = vunpack.c.l.b16 %v2739
        %v2772 = vunpack.c.l.b16 %v2740
        %v2773 = vunpack.c.l.b16 %v2741
        %v2774 = vunpack.c.l.b16 %v2742
        %v2775 = vunpack.c.l.b16 %v2743
        %v2776 = vunpack.c.l.b16 %v2744
        %v2777 = vpack.c.b16 %v2762, %v2761
        %v2778 = vpack.c.b16 %v2764, %v2763
        %v2779 = vpack.c.b16 %v2766, %v2765
        %v2780 = vpack.c.b16 %v2768, %v2767
        %v2781 = vpack.c.b16 %v2770, %v2769
        %v2782 = vpack.c.b16 %v2772, %v2771
        %v2783 = vpack.c.b16 %v2774, %v2773
        %v2784 = vpack.c.b16 %v2776, %v2775
        %2793 = vmatpush.bf16.msra.mxu0 %v2784
        %2794 = vmatpush.bf16.msra.mxu0 %v2783
        %2795 = vmatpush.bf16.msra.mxu0 %v2782
        %2796 = vmatpush.bf16.msra.mxu0 %v2781
        %2797 = vmatpush.bf16.msra.mxu0 %v2780
        %2798 = vmatpush.bf16.msra.mxu0 %v2779
        %2799 = vmatpush.bf16.msra.mxu0 %v2778
        %2800 = vmatpush.bf16.msra.mxu0 %v2777
        %2801 = vmatmul.bf16.gmra.mxu0 %v2721
        %v2802 = vpop.f32.mrf.mxu0
        %v2803 = vadd.f32 0.0, %v2802
        %v2804 = vpop.f32.mrf.mxu0
        %v2805 = vadd.f32 0.0, %v2804
        %2806 = vmatmul.bf16.gmra.mxu0 %v2722
        %v2807 = vpop.f32.mrf.mxu0
        %v2808 = vadd.f32 0.0, %v2807
        %v2809 = vpop.f32.mrf.mxu0
        %v2810 = vadd.f32 0.0, %v2809
        %2811 = vmatmul.bf16.gmra.mxu0 %v2723
        %v2812 = vpop.f32.mrf.mxu0
        %v2813 = vadd.f32 0.0, %v2812
        %v2814 = vpop.f32.mrf.mxu0
        %v2815 = vadd.f32 0.0, %v2814
        %2816 = vmatmul.bf16.gmra.mxu0 %v2724
        %v2817 = vpop.f32.mrf.mxu0
        %v2818 = vadd.f32 0.0, %v2817
        %v2819 = vpop.f32.mrf.mxu0
        %v2820 = vadd.f32 0.0, %v2819
        %2821 = vmatmul.bf16.gmra.mxu0 %v2725
        %v2822 = vpop.f32.mrf.mxu0
        %v2823 = vadd.f32 0.0, %v2822
        %v2824 = vpop.f32.mrf.mxu0
        %v2825 = vadd.f32 0.0, %v2824
        %2826 = vmatmul.bf16.gmra.mxu0 %v2726
        %v2827 = vpop.f32.mrf.mxu0
        %v2828 = vadd.f32 0.0, %v2827
        %v2829 = vpop.f32.mrf.mxu0
        %v2830 = vadd.f32 0.0, %v2829
        %2831 = vmatmul.bf16.gmra.mxu0 %v2727
        %v2832 = vpop.f32.mrf.mxu0
        %v2833 = vadd.f32 0.0, %v2832
        %v2834 = vpop.f32.mrf.mxu0
        %v2835 = vadd.f32 0.0, %v2834
        %2836 = vmatmul.bf16.gmra.mxu0 %v2728
        %v2837 = vpop.f32.mrf.mxu0
        %v2838 = vadd.f32 0.0, %v2837
        %v2839 = vpop.f32.mrf.mxu0
        %v2840 = vadd.f32 0.0, %v2839
        %2841 = vdwg.mxu0
        %v2842 = vadd.f32 %v2688, %v2803
        %v2843 = vadd.f32 %v2689, %v2805
        %v2844 = vadd.f32 %v2690, %v2808
        %v2845 = vadd.f32 %v2691, %v2810
        %v2846 = vadd.f32 %v2692, %v2813
        %v2847 = vadd.f32 %v2693, %v2815
        %v2848 = vadd.f32 %v2694, %v2818
        %v2849 = vadd.f32 %v2695, %v2820
        %v2850 = vadd.f32 %v2696, %v2823
        %v2851 = vadd.f32 %v2697, %v2825
        %v2852 = vadd.f32 %v2698, %v2828
        %v2853 = vadd.f32 %v2699, %v2830
        %v2854 = vadd.f32 %v2700, %v2833
        %v2855 = vadd.f32 %v2701, %v2835
        %v2856 = vadd.f32 %v2702, %v2838
        %v2857 = vadd.f32 %v2703, %v2840
        %v2858 = vld [vmem:[%s2704 + $0x1] sm:$0xff]
        %v2859 = vld [vmem:[%s2704 + $0x9] sm:$0xff]
        %v2860 = vld [vmem:[%s2704 + $0x19] sm:$0xff]
        %v2861 = vld [vmem:[%s2704 + $0x21] sm:$0xff]
        %v2862 = vld [vmem:[%s2704 + $0x31] sm:$0xff]
        %v2863 = vld [vmem:[%s2704 + $0x39] sm:$0xff]
        %v2864 = vld [vmem:[%s2704 + $0x49] sm:$0xff]
        %v2865 = vld [vmem:[%s2704 + $0x51] sm:$0xff]
        %v2866 = vld [vmem:[%s2704 + $0x61] sm:$0xff]
        %v2867 = vld [vmem:[%s2704 + $0x69] sm:$0xff]
        %v2868 = vld [vmem:[%s2704 + $0x79] sm:$0xff]
        %v2869 = vld [vmem:[%s2704 + $0x81] sm:$0xff]
        %v2870 = vld [vmem:[%s2704 + $0x91] sm:$0xff]
        %v2871 = vld [vmem:[%s2704 + $0x99] sm:$0xff]
        %v2872 = vld [vmem:[%s2704 + $0xa9] sm:$0xff]
        %v2873 = vld [vmem:[%s2704 + $0xb1] sm:$0xff]
        %v2874 = vpack.c.bf16 %v2859, %v2858
        %v2875 = vpack.c.bf16 %v2861, %v2860
        %v2876 = vpack.c.bf16 %v2863, %v2862
        %v2877 = vpack.c.bf16 %v2865, %v2864
        %v2878 = vpack.c.bf16 %v2867, %v2866
        %v2879 = vpack.c.bf16 %v2869, %v2868
        %v2880 = vpack.c.bf16 %v2871, %v2870
        %v2881 = vpack.c.bf16 %v2873, %v2872
        %v2882 = vld [vmem:[%s1440] sm:$0xf]
        %v2883 = vld [vmem:[%s1440 + $0x4] sm:$0xf]
        %v2884 = vld [vmem:[%s1440 + $0x8] sm:$0xf]
        %v2885 = vld [vmem:[%s1440 + $0xc] sm:$0xf]
        %v2886 = vld [vmem:[%s1440 + $0x10] sm:$0xf]
        %v2887 = vld [vmem:[%s1440 + $0x14] sm:$0xf]
        %v2888 = vld [vmem:[%s1440 + $0x18] sm:$0xf]
        %v2889 = vld [vmem:[%s1440 + $0x1c] sm:$0xf]
        %v2890 = vld [vmem:[%s1440 + $0x20] sm:$0xf]
        %v2891 = vld [vmem:[%s1440 + $0x24] sm:$0xf]
        %v2892 = vld [vmem:[%s1440 + $0x28] sm:$0xf]
        %v2893 = vld [vmem:[%s1440 + $0x2c] sm:$0xf]
        %v2894 = vld [vmem:[%s1440 + $0x30] sm:$0xf]
        %v2895 = vld [vmem:[%s1440 + $0x34] sm:$0xf]
        %v2896 = vld [vmem:[%s1440 + $0x38] sm:$0xf]
        %v2897 = vld [vmem:[%s1440 + $0x3c] sm:$0xf]
        %v2914 = vunpack.c.l.b16 %v2882
        %v2915 = vunpack.c.l.b16 %v2883
        %v2916 = vunpack.c.l.b16 %v2884
        %v2917 = vunpack.c.l.b16 %v2885
        %v2918 = vunpack.c.l.b16 %v2886
        %v2919 = vunpack.c.l.b16 %v2887
        %v2920 = vunpack.c.l.b16 %v2888
        %v2921 = vunpack.c.l.b16 %v2889
        %v2922 = vunpack.c.l.b16 %v2890
        %v2923 = vunpack.c.l.b16 %v2891
        %v2924 = vunpack.c.l.b16 %v2892
        %v2925 = vunpack.c.l.b16 %v2893
        %v2926 = vunpack.c.l.b16 %v2894
        %v2927 = vunpack.c.l.b16 %v2895
        %v2928 = vunpack.c.l.b16 %v2896
        %v2929 = vunpack.c.l.b16 %v2897
        %v2930 = vpack.c.b16 %v2915, %v2914
        %v2931 = vpack.c.b16 %v2917, %v2916
        %v2932 = vpack.c.b16 %v2919, %v2918
        %v2933 = vpack.c.b16 %v2921, %v2920
        %v2934 = vpack.c.b16 %v2923, %v2922
        %v2935 = vpack.c.b16 %v2925, %v2924
        %v2936 = vpack.c.b16 %v2927, %v2926
        %v2937 = vpack.c.b16 %v2929, %v2928
        %2946 = vmatpush.bf16.msra.mxu0 %v2937
        %2947 = vmatpush.bf16.msra.mxu0 %v2936
        %2948 = vmatpush.bf16.msra.mxu0 %v2935
        %2949 = vmatpush.bf16.msra.mxu0 %v2934
        %2950 = vmatpush.bf16.msra.mxu0 %v2933
        %2951 = vmatpush.bf16.msra.mxu0 %v2932
        %2952 = vmatpush.bf16.msra.mxu0 %v2931
        %2953 = vmatpush.bf16.msra.mxu0 %v2930
        %2954 = vmatmul.bf16.gmra.mxu0 %v2874
        %v2955 = vpop.f32.mrf.mxu0
        %v2956 = vadd.f32 0.0, %v2955
        %v2957 = vpop.f32.mrf.mxu0
        %v2958 = vadd.f32 0.0, %v2957
        %2959 = vmatmul.bf16.gmra.mxu0 %v2875
        %v2960 = vpop.f32.mrf.mxu0
        %v2961 = vadd.f32 0.0, %v2960
        %v2962 = vpop.f32.mrf.mxu0
        %v2963 = vadd.f32 0.0, %v2962
        %2964 = vmatmul.bf16.gmra.mxu0 %v2876
        %v2965 = vpop.f32.mrf.mxu0
        %v2966 = vadd.f32 0.0, %v2965
        %v2967 = vpop.f32.mrf.mxu0
        %v2968 = vadd.f32 0.0, %v2967
        %2969 = vmatmul.bf16.gmra.mxu0 %v2877
        %v2970 = vpop.f32.mrf.mxu0
        %v2971 = vadd.f32 0.0, %v2970
        %v2972 = vpop.f32.mrf.mxu0
        %v2973 = vadd.f32 0.0, %v2972
        %2974 = vmatmul.bf16.gmra.mxu0 %v2878
        %v2975 = vpop.f32.mrf.mxu0
        %v2976 = vadd.f32 0.0, %v2975
        %v2977 = vpop.f32.mrf.mxu0
        %v2978 = vadd.f32 0.0, %v2977
        %2979 = vmatmul.bf16.gmra.mxu0 %v2879
        %v2980 = vpop.f32.mrf.mxu0
        %v2981 = vadd.f32 0.0, %v2980
        %v2982 = vpop.f32.mrf.mxu0
        %v2983 = vadd.f32 0.0, %v2982
        %2984 = vmatmul.bf16.gmra.mxu0 %v2880
        %v2985 = vpop.f32.mrf.mxu0
        %v2986 = vadd.f32 0.0, %v2985
        %v2987 = vpop.f32.mrf.mxu0
        %v2988 = vadd.f32 0.0, %v2987
        %2989 = vmatmul.bf16.gmra.mxu0 %v2881
        %v2990 = vpop.f32.mrf.mxu0
        %v2991 = vadd.f32 0.0, %v2990
        %v2992 = vpop.f32.mrf.mxu0
        %v2993 = vadd.f32 0.0, %v2992
        %2994 = vdwg.mxu0
        %v2995 = vadd.f32 %v2842, %v2956
        %v2996 = vadd.f32 %v2843, %v2958
        %v2997 = vadd.f32 %v2844, %v2961
        %v2998 = vadd.f32 %v2845, %v2963
        %v2999 = vadd.f32 %v2846, %v2966
        %v3000 = vadd.f32 %v2847, %v2968
        %v3001 = vadd.f32 %v2848, %v2971
        %v3002 = vadd.f32 %v2849, %v2973
        %v3003 = vadd.f32 %v2850, %v2976
        %v3004 = vadd.f32 %v2851, %v2978
        %v3005 = vadd.f32 %v2852, %v2981
        %v3006 = vadd.f32 %v2853, %v2983
        %v3007 = vadd.f32 %v2854, %v2986
        %v3008 = vadd.f32 %v2855, %v2988
        %v3009 = vadd.f32 %v2856, %v2991
        %v3010 = vadd.f32 %v2857, %v2993
        %v3011 = vld [vmem:[%s2704 + $0x2] sm:$0xff]
        %v3012 = vld [vmem:[%s2704 + $0xa] sm:$0xff]
        %v3013 = vld [vmem:[%s2704 + $0x1a] sm:$0xff]
        %v3014 = vld [vmem:[%s2704 + $0x22] sm:$0xff]
        %v3015 = vld [vmem:[%s2704 + $0x32] sm:$0xff]
        %v3016 = vld [vmem:[%s2704 + $0x3a] sm:$0xff]
        %v3017 = vld [vmem:[%s2704 + $0x4a] sm:$0xff]
        %v3018 = vld [vmem:[%s2704 + $0x52] sm:$0xff]
        %v3019 = vld [vmem:[%s2704 + $0x62] sm:$0xff]
        %v3020 = vld [vmem:[%s2704 + $0x6a] sm:$0xff]
        %v3021 = vld [vmem:[%s2704 + $0x7a] sm:$0xff]
        %v3022 = vld [vmem:[%s2704 + $0x82] sm:$0xff]
        %v3023 = vld [vmem:[%s2704 + $0x92] sm:$0xff]
        %v3024 = vld [vmem:[%s2704 + $0x9a] sm:$0xff]
        %v3025 = vld [vmem:[%s2704 + $0xaa] sm:$0xff]
        %v3026 = vld [vmem:[%s2704 + $0xb2] sm:$0xff]
        %v3027 = vpack.c.bf16 %v3012, %v3011
        %v3028 = vpack.c.bf16 %v3014, %v3013
        %v3029 = vpack.c.bf16 %v3016, %v3015
        %v3030 = vpack.c.bf16 %v3018, %v3017
        %v3031 = vpack.c.bf16 %v3020, %v3019
        %v3032 = vpack.c.bf16 %v3022, %v3021
        %v3033 = vpack.c.bf16 %v3024, %v3023
        %v3034 = vpack.c.bf16 %v3026, %v3025
        %v3035 = vld [vmem:[%s1594] sm:$0xf]
        %v3036 = vld [vmem:[%s1594 + $0x4] sm:$0xf]
        %v3037 = vld [vmem:[%s1594 + $0x8] sm:$0xf]
        %v3038 = vld [vmem:[%s1594 + $0xc] sm:$0xf]
        %v3039 = vld [vmem:[%s1594 + $0x10] sm:$0xf]
        %v3040 = vld [vmem:[%s1594 + $0x14] sm:$0xf]
        %v3041 = vld [vmem:[%s1594 + $0x18] sm:$0xf]
        %v3042 = vld [vmem:[%s1594 + $0x1c] sm:$0xf]
        %v3043 = vld [vmem:[%s1594 + $0x20] sm:$0xf]
        %v3044 = vld [vmem:[%s1594 + $0x24] sm:$0xf]
        %v3045 = vld [vmem:[%s1594 + $0x28] sm:$0xf]
        %v3046 = vld [vmem:[%s1594 + $0x2c] sm:$0xf]
        %v3047 = vld [vmem:[%s1594 + $0x30] sm:$0xf]
        %v3048 = vld [vmem:[%s1594 + $0x34] sm:$0xf]
        %v3049 = vld [vmem:[%s1594 + $0x38] sm:$0xf]
        %v3050 = vld [vmem:[%s1594 + $0x3c] sm:$0xf]
        %v3067 = vunpack.c.l.b16 %v3035
        %v3068 = vunpack.c.l.b16 %v3036
        %v3069 = vunpack.c.l.b16 %v3037
        %v3070 = vunpack.c.l.b16 %v3038
        %v3071 = vunpack.c.l.b16 %v3039
        %v3072 = vunpack.c.l.b16 %v3040
        %v3073 = vunpack.c.l.b16 %v3041
        %v3074 = vunpack.c.l.b16 %v3042
        %v3075 = vunpack.c.l.b16 %v3043
        %v3076 = vunpack.c.l.b16 %v3044
        %v3077 = vunpack.c.l.b16 %v3045
        %v3078 = vunpack.c.l.b16 %v3046
        %v3079 = vunpack.c.l.b16 %v3047
        %v3080 = vunpack.c.l.b16 %v3048
        %v3081 = vunpack.c.l.b16 %v3049
        %v3082 = vunpack.c.l.b16 %v3050
        %v3083 = vpack.c.b16 %v3068, %v3067
        %v3084 = vpack.c.b16 %v3070, %v3069
        %v3085 = vpack.c.b16 %v3072, %v3071
        %v3086 = vpack.c.b16 %v3074, %v3073
        %v3087 = vpack.c.b16 %v3076, %v3075
        %v3088 = vpack.c.b16 %v3078, %v3077
        %v3089 = vpack.c.b16 %v3080, %v3079
        %v3090 = vpack.c.b16 %v3082, %v3081
        %3099 = vmatpush.bf16.msra.mxu0 %v3090
        %3100 = vmatpush.bf16.msra.mxu0 %v3089
        %3101 = vmatpush.bf16.msra.mxu0 %v3088
        %3102 = vmatpush.bf16.msra.mxu0 %v3087
        %3103 = vmatpush.bf16.msra.mxu0 %v3086
        %3104 = vmatpush.bf16.msra.mxu0 %v3085
        %3105 = vmatpush.bf16.msra.mxu0 %v3084
        %3106 = vmatpush.bf16.msra.mxu0 %v3083
        %3107 = vmatmul.bf16.gmra.mxu0 %v3027
        %v3108 = vpop.f32.mrf.mxu0
        %v3109 = vadd.f32 0.0, %v3108
        %v3110 = vpop.f32.mrf.mxu0
        %v3111 = vadd.f32 0.0, %v3110
        %3112 = vmatmul.bf16.gmra.mxu0 %v3028
        %v3113 = vpop.f32.mrf.mxu0
        %v3114 = vadd.f32 0.0, %v3113
        %v3115 = vpop.f32.mrf.mxu0
        %v3116 = vadd.f32 0.0, %v3115
        %3117 = vmatmul.bf16.gmra.mxu0 %v3029
        %v3118 = vpop.f32.mrf.mxu0
        %v3119 = vadd.f32 0.0, %v3118
        %v3120 = vpop.f32.mrf.mxu0
        %v3121 = vadd.f32 0.0, %v3120
        %3122 = vmatmul.bf16.gmra.mxu0 %v3030
        %v3123 = vpop.f32.mrf.mxu0
        %v3124 = vadd.f32 0.0, %v3123
        %v3125 = vpop.f32.mrf.mxu0
        %v3126 = vadd.f32 0.0, %v3125
        %3127 = vmatmul.bf16.gmra.mxu0 %v3031
        %v3128 = vpop.f32.mrf.mxu0
        %v3129 = vadd.f32 0.0, %v3128
        %v3130 = vpop.f32.mrf.mxu0
        %v3131 = vadd.f32 0.0, %v3130
        %3132 = vmatmul.bf16.gmra.mxu0 %v3032
        %v3133 = vpop.f32.mrf.mxu0
        %v3134 = vadd.f32 0.0, %v3133
        %v3135 = vpop.f32.mrf.mxu0
        %v3136 = vadd.f32 0.0, %v3135
        %3137 = vmatmul.bf16.gmra.mxu0 %v3033
        %v3138 = vpop.f32.mrf.mxu0
        %v3139 = vadd.f32 0.0, %v3138
        %v3140 = vpop.f32.mrf.mxu0
        %v3141 = vadd.f32 0.0, %v3140
        %3142 = vmatmul.bf16.gmra.mxu0 %v3034
        %v3143 = vpop.f32.mrf.mxu0
        %v3144 = vadd.f32 0.0, %v3143
        %v3145 = vpop.f32.mrf.mxu0
        %v3146 = vadd.f32 0.0, %v3145
        %3147 = vdwg.mxu0
        %v3148 = vadd.f32 %v2995, %v3109
        %v3149 = vadd.f32 %v2996, %v3111
        %v3150 = vadd.f32 %v2997, %v3114
        %v3151 = vadd.f32 %v2998, %v3116
        %v3152 = vadd.f32 %v2999, %v3119
        %v3153 = vadd.f32 %v3000, %v3121
        %v3154 = vadd.f32 %v3001, %v3124
        %v3155 = vadd.f32 %v3002, %v3126
        %v3156 = vadd.f32 %v3003, %v3129
        %v3157 = vadd.f32 %v3004, %v3131
        %v3158 = vadd.f32 %v3005, %v3134
        %v3159 = vadd.f32 %v3006, %v3136
        %v3160 = vadd.f32 %v3007, %v3139
        %v3161 = vadd.f32 %v3008, %v3141
        %v3162 = vadd.f32 %v3009, %v3144
        %v3163 = vadd.f32 %v3010, %v3146
        %v3164 = vpack.c.bf16 %v3148, %v3148
        %v3165 = vpack.c.bf16 %v3149, %v3149
        %v3166 = vpack.c.bf16 %v3150, %v3150
        %v3167 = vpack.c.bf16 %v3151, %v3151
        %v3168 = vpack.c.bf16 %v3152, %v3152
        %v3169 = vpack.c.bf16 %v3153, %v3153
        %v3170 = vpack.c.bf16 %v3154, %v3154
        %v3171 = vpack.c.bf16 %v3155, %v3155
        %v3172 = vpack.c.bf16 %v3156, %v3156
        %v3173 = vpack.c.bf16 %v3157, %v3157
        %v3174 = vpack.c.bf16 %v3158, %v3158
        %v3175 = vpack.c.bf16 %v3159, %v3159
        %v3176 = vpack.c.bf16 %v3160, %v3160
        %v3177 = vpack.c.bf16 %v3161, %v3161
        %v3178 = vpack.c.bf16 %v3162, %v3162
        %v3179 = vpack.c.bf16 %v3163, %v3163
        %s3180 = scalar_lea.vmem %s211, 64 [#allocation8]
        %3181 = vst [vmem:[%s3180] sm:$0xf] %v3164
        %3182 = vst [vmem:[%s3180 + $0x4] sm:$0xf] %v3165
        %3183 = vst [vmem:[%s3180 + $0x8] sm:$0xf] %v3166
        %3184 = vst [vmem:[%s3180 + $0xc] sm:$0xf] %v3167
        %3185 = vst [vmem:[%s3180 + $0x10] sm:$0xf] %v3168
        %3186 = vst [vmem:[%s3180 + $0x14] sm:$0xf] %v3169
        %3187 = vst [vmem:[%s3180 + $0x18] sm:$0xf] %v3170
        %3188 = vst [vmem:[%s3180 + $0x1c] sm:$0xf] %v3171
        %3189 = vst [vmem:[%s3180 + $0x20] sm:$0xf] %v3172
        %3190 = vst [vmem:[%s3180 + $0x24] sm:$0xf] %v3173
        %3191 = vst [vmem:[%s3180 + $0x28] sm:$0xf] %v3174
        %3192 = vst [vmem:[%s3180 + $0x2c] sm:$0xf] %v3175
        %3193 = vst [vmem:[%s3180 + $0x30] sm:$0xf] %v3176
        %3194 = vst [vmem:[%s3180 + $0x34] sm:$0xf] %v3177
        %3195 = vst [vmem:[%s3180 + $0x38] sm:$0xf] %v3178
        %3196 = vst [vmem:[%s3180 + $0x3c] sm:$0xf] %v3179
        %v3197 = vadd.f32 %v3148, %v3149
        %v3198 = vadd.f32 %v3197, %v3150
        %v3199 = vadd.f32 %v3198, %v3151
        %v3200 = vadd.f32 %v3199, %v3152
        %v3201 = vadd.f32 %v3200, %v3153
        %v3202 = vadd.f32 %v3201, %v3154
        %v3203 = vadd.f32 %v3202, %v3155
        %v3204 = vadd.f32 %v3203, %v3156
        %v3205 = vadd.f32 %v3204, %v3157
        %v3206 = vadd.f32 %v3205, %v3158
        %v3207 = vadd.f32 %v3206, %v3159
        %v3208 = vadd.f32 %v3207, %v3160
        %v3209 = vadd.f32 %v3208, %v3161
        %v3210 = vadd.f32 %v3209, %v3162
        %v3211 = vadd.f32 %v3210, %v3163
        %v3212 = vrot.slane %v3211, 4
        %v3213 = vadd.f32 %v3211, %v3212
        %v3214 = vrot.slane %v3213, 2
        %v3215 = vadd.f32 %v3213, %v3214
        %v3216 = vrot.slane %v3215, 1
        %v3217 = vadd.f32 %v3215, %v3216
        %v3218 = vadd.f32 %v1777, %v3217
        %v3219 = vmul.f32 %v3148, %v3148
        %v3220 = vmul.f32 %v3149, %v3149
        %v3221 = vmul.f32 %v3150, %v3150
        %v3222 = vmul.f32 %v3151, %v3151
        %v3223 = vmul.f32 %v3152, %v3152
        %v3224 = vmul.f32 %v3153, %v3153
        %v3225 = vmul.f32 %v3154, %v3154
        %v3226 = vmul.f32 %v3155, %v3155
        %v3227 = vmul.f32 %v3156, %v3156
        %v3228 = vmul.f32 %v3157, %v3157
        %v3229 = vmul.f32 %v3158, %v3158
        %v3230 = vmul.f32 %v3159, %v3159
        %v3231 = vmul.f32 %v3160, %v3160
        %v3232 = vmul.f32 %v3161, %v3161
        %v3233 = vmul.f32 %v3162, %v3162
        %v3234 = vmul.f32 %v3163, %v3163
        %v3235 = vadd.f32 %v3219, %v3220
        %v3236 = vadd.f32 %v3235, %v3221
        %v3237 = vadd.f32 %v3236, %v3222
        %v3238 = vadd.f32 %v3237, %v3223
        %v3239 = vadd.f32 %v3238, %v3224
        %v3240 = vadd.f32 %v3239, %v3225
        %v3241 = vadd.f32 %v3240, %v3226
        %v3242 = vadd.f32 %v3241, %v3227
        %v3243 = vadd.f32 %v3242, %v3228
        %v3244 = vadd.f32 %v3243, %v3229
        %v3245 = vadd.f32 %v3244, %v3230
        %v3246 = vadd.f32 %v3245, %v3231
        %v3247 = vadd.f32 %v3246, %v3232
        %v3248 = vadd.f32 %v3247, %v3233
        %v3249 = vadd.f32 %v3248, %v3234
        %v3250 = vrot.slane %v3249, 4
        %v3251 = vadd.f32 %v3249, %v3250
        %v3252 = vrot.slane %v3251, 2
        %v3253 = vadd.f32 %v3251, %v3252
        %v3254 = vrot.slane %v3253, 1
        %v3255 = vadd.f32 %v3253, %v3254
        %v3256 = vadd.f32 %v1815, %v3255
        %3257 = vst [vmem:[%s218] sm:$0x1] %v3218
        %3258 = vst [vmem:[%s218 + $0x1] sm:$0x1] %v3256
        %s3259 = sand.u32 %s80, 1
        %s3260 = scalar_lea.sflag [#allocation5], %s3259
        %s3261 = sand.u32 %s80, 1
        %s3262 = smul.addr %s3261, 128
        %s3263 = scalar_lea.vmem [#allocation8], %s3262
        %s3264 = sand.u32 %s106, 1
        %s3265 = scalar_lea.sflag [#allocation10], %s3264
        %s3266 = sand.u32 %s106, 1
        %s3267 = smul.addr %s3266, 2
        %s3268 = scalar_lea.vmem [#allocation9], %s3267
        // Predicated region
        $region37: #{tpu_custom_call.1} parent=27 // pred_check
          %p3269 = pneg %p90
        $region38: #{tpu_custom_call.1} parent=27 // pred_check_branch
          %3271 = sbr.rel (%p3269) target = $region40
        $region39: #{tpu_custom_call.1} parent=27 // pred_region
          %3273 = vsyncadd %s3260, 0
          %s3274 = smul.addr %s25, 32
          %s3275 = smul.addr %s3274, 4
          %s3276 = scalar_lea.hbm %s2, %s3275
          %s3277 = sshll.u32 %s3263, 4
          %s3278 = int_to_ptr.vmem [resolvable:$true] %s3277
          %s3279 = sshll.u32 %s3276, 4
          %s3280 = int_to_ptr.hbm [resolvable:$true] %s3279
          %3285 = dma.vmem_to_hbm [thread:$0]  %s3278, 2048, %s3280, %s3260, 64, 64, 4
        $region40: #{tpu_custom_call.1} parent=27 // pred_fallthru
          _
        // Predicated region
        $region41: #{tpu_custom_call.1} parent=27 // pred_check
          %p3286 = pneg %p116
        $region42: #{tpu_custom_call.1} parent=27 // pred_check_branch
          %3288 = sbr.rel (%p3286) target = $region44
        $region43: #{tpu_custom_call.1} parent=27 // pred_region
          %3290 = vsyncadd %s3265, 0
          %s3291 = smul.addr %s25, 2
          %s3292 = scalar_lea.hbm %s3, %s3291
          %s3294 = sshll.u32 %s3268, 4
          %s3295 = int_to_ptr.vmem [resolvable:$true] %s3294
          %s3296 = sshll.u32 %s3292, 4
          %s3297 = int_to_ptr.hbm [resolvable:$true] %s3296
          %3299 = dma.vmem_to_hbm [thread:$0]  %s3295, 32, %s3297, %s3265
        $region44: #{tpu_custom_call.1} parent=27 // pred_fallthru
          _
      $region28: #{tpu_custom_call.1} parent=5 // pred_fallthru
        _
      %p3300 = scmp.le.s32.totalorder 2, %s20
      // Predicated region
      $region45: #{tpu_custom_call.1} parent=5 // pred_check
        %p3301 = pneg %p3300
      $region46: #{tpu_custom_call.1} parent=5 // pred_check_branch
        %3303 = sbr.rel (%p3301) target = $region48
      $region47: #{tpu_custom_call.1} parent=5 // pred_region
        %s3304 = ssub.s32 %s20, 2
        // Predicated region
        $region49: #{tpu_custom_call.1} parent=47 // pred_check
          %p3305 = pneg %p96
        $region50: #{tpu_custom_call.1} parent=47 // pred_check_branch
          %3307 = sbr.rel (%p3305) target = $region52
        $region51: #{tpu_custom_call.1} parent=47 // pred_region
          %s3308 = sand.u32 %s81, 1
          %s3309 = scalar_lea.sflag [#allocation5], %s3308
          %s3310 = sand.u32 %s81, 1
          %s3311 = smul.addr %s3310, 128
          %s3312 = scalar_lea.vmem [#allocation8], %s3311
          %3314 = dma.done %s3309, 2048
        $region52: #{tpu_custom_call.1} parent=47 // pred_fallthru
          _
        // Predicated region
        $region53: #{tpu_custom_call.1} parent=47 // pred_check
          %p3315 = pneg %p122
        $region54: #{tpu_custom_call.1} parent=47 // pred_check_branch
          %3317 = sbr.rel (%p3315) target = $region56
        $region55: #{tpu_custom_call.1} parent=47 // pred_region
          %s3318 = sand.u32 %s107, 1
          %s3319 = scalar_lea.sflag [#allocation10], %s3318
          %s3320 = sand.u32 %s107, 1
          %s3321 = smul.addr %s3320, 2
          %s3322 = scalar_lea.vmem [#allocation9], %s3321
          %3324 = dma.done %s3319, 32
        $region56: #{tpu_custom_call.1} parent=47 // pred_fallthru
          _
      $region48: #{tpu_custom_call.1} parent=5 // pred_fallthru
        _
    $region6: #{tpu_custom_call.1} parent=1 // loop_footer
      %s24 = sadd.s32 1, %s20
    $region7: #{tpu_custom_call.1} parent=1 // loop_footer_branch
      %19 = sbr.rel target = $region3
    $region8: #{tpu_custom_call.1} parent=1 // loop_exit
      _
    %3325 = vsyncpa [#allocation4], 1
    %s3326 = scalar_lea.sflag [#allocation4], 1
    %3327 = vsyncpa %s3326, 1
    %3328 = vsyncpa [#allocation7], 1
    %3329 = vsyncpa [#allocation5], 1
    %s3330 = scalar_lea.sflag [#allocation5], 1
    %3331 = vsyncpa %s3330, 1
    %3332 = vsyncpa [#allocation10], 1
    %s3333 = scalar_lea.sflag [#allocation10], 1
    %3334 = vsyncpa %s3333, 1

</llo_original>
